<compile_context>
chip_gen: v7x
topology: tpu7x:2x2x1
jax: 0.10.0
libtpu: 0.0.40
codegen_flags: <defaults>
</compile_context>

<pallas_src>
import jax
import jax.numpy as jnp
from jax import lax
from jax.experimental import pallas as pl
from jax.experimental.pallas import tpu as pltpu


def _conv_pos_enc_kernel(x_ref, w_ref, b_ref, o_ref, xl_ref, xr_ref):
    """Fused depthwise 3x3 (stride 1, pad 1) + bias + residual for Bt images.

    x_ref:  (Bt, H, W, C)  input block, channels-last (C on the 128-lane axis)
    w_ref:  (9, W, C) f32  taps, k = ky*3 + kx, replicated across W sublanes
    b_ref:  (W, C)    f32  conv bias, replicated across W sublanes
    o_ref:  (Bt, H, W, C)  output block
    xl_ref: (Bt, H, W, C) f32 scratch, xl[..., w, :] = x[..., w-1, :] (0 at w=0)
    xr_ref: (Bt, H, W, C) f32 scratch, xr[..., w, :] = x[..., w+1, :] (0 at w=W-1)
    """
    f32 = jnp.float32
    Bt, H, W, C = x_ref.shape

    # --- Stage the two W-shifted copies once per step. ----------------------
    # W is the sublane dim, so these two stores are the only sublane-realigning
    # ops in the kernel.  Scratch persists across grid steps (and cores), so
    # the zero pad column is rewritten unconditionally every step (cheap).
    zero_col = jnp.zeros((Bt, H, 1, C), f32)
    xl_ref[:, :, 0:1, :] = zero_col
    xl_ref[:, :, 1:W, :] = x_ref[:, :, 0:W - 1, :].astype(f32)
    xr_ref[:, :, W - 1:W, :] = zero_col
    xr_ref[:, :, 0:W - 1, :] = x_ref[:, :, 1:W, :].astype(f32)

    b = b_ref[...]                                        # (W, C), f32

    def row_taps(k, lo, hi):
        # Contribution of kernel row k (ky = k) reading source rows [lo, hi).
        # H is a leading (non-sublane) dim -> these slices are free offsets,
        # and every load below is full-W, lane-dense and aligned.
        return (w_ref[3 * k + 0] * xl_ref[:, lo:hi, :, :]
                + w_ref[3 * k + 1] * x_ref[:, lo:hi, :, :].astype(f32)
                + w_ref[3 * k + 2] * xr_ref[:, lo:hi, :, :])

    def base(lo, hi):
        # Residual + bias folded into the accumulator init.
        return x_ref[:, lo:hi, :, :].astype(f32) + b

    # Interior output rows 1 .. H-2: all 9 taps.
    o_ref[:, 1:H - 1, :, :] = (base(1, H - 1)
                               + row_taps(0, 0, H - 2)
                               + row_taps(1, 1, H - 1)
                               + row_taps(2, 2, H)).astype(o_ref.dtype)
    # Top output row 0: no source row above (zero padding).
    o_ref[:, 0:1, :, :] = (base(0, 1)
                           + row_taps(1, 0, 1)
                           + row_taps(2, 1, 2)).astype(o_ref.dtype)
    # Bottom output row H-1: no source row below (zero padding).
    o_ref[:, H - 1:H, :, :] = (base(H - 1, H)
                               + row_taps(0, H - 2, H - 1)
                               + row_taps(1, H - 1, H)).astype(o_ref.dtype)


def _choose_batch_tile(B, img_bytes, *, block_budget=1 << 20, min_steps=4):
    """Largest divisor of B keeping the input block <= `block_budget` while
    leaving >= min(min_steps, B) grid steps (megacore sharding + pipelining)."""
    bt = 1
    for cand in range(1, B + 1):
        if B % cand:
            continue
        if cand * img_bytes > block_budget:
            continue
        if B // cand < min(min_steps, B):
            continue
        bt = cand
    return bt


def conv_pos_enc(x_nlc, size, weight, bias):
    """ConvPosEnc.forward.

    x_nlc:  (B, N, C) tokens (the `nlc_by_nchw` decorator's NLC view).
    size:   (H, W) with N == H * W.
    weight: (C, 1, 3, 3) PyTorch depthwise Conv2d weight (groups == C).
    bias:   (C,) Conv2d bias.
    Returns (B, N, C) tokens: depthwise_conv(x) + x.
    """
    B, N, C = x_nlc.shape
    H, W = size
    assert N == H * W, (N, H, W)
    assert H >= 3 and W >= 2, "3x3 ConvPosEnc kernel assumes H >= 3, W >= 2"

    # NLC -> NHWC (free view; channels stay on the 128-wide lane axis).
    x = x_nlc.reshape(B, H, W, C)

    # (C,1,3,3) -> (ky,kx,C) -> (9,C) -> sublane-replicated (9, W, C) so the
    # kernel never has to broadcast a (C,) row across sublanes.
    w9 = jnp.transpose(weight.reshape(C, 3, 3), (1, 2, 0)).reshape(9, C)
    w_rep = jnp.broadcast_to(w9[:, None, :], (9, W, C)).astype(jnp.float32)
    b_rep = jnp.broadcast_to(bias[None, :], (W, C)).astype(jnp.float32)

    img_bytes = H * W * C * x.dtype.itemsize
    bt = _choose_batch_tile(B, img_bytes)
    grid = (B // bt,)

    out = pl.pallas_call(
        _conv_pos_enc_kernel,
        out_shape=jax.ShapeDtypeStruct((B, H, W, C), x.dtype),
        grid=grid,
        in_specs=[
            pl.BlockSpec((bt, H, W, C), lambda i: (i, 0, 0, 0)),
            pl.BlockSpec((9, W, C), lambda i: (0, 0, 0)),
            pl.BlockSpec((W, C), lambda i: (0, 0)),
        ],
        out_specs=pl.BlockSpec((bt, H, W, C), lambda i: (i, 0, 0, 0)),
        scratch_shapes=[
            pltpu.VMEM((bt, H, W, C), jnp.float32),   # W-shift-left copy
            pltpu.VMEM((bt, H, W, C), jnp.float32),   # W-shift-right copy
        ],
        compiler_params=pltpu.CompilerParams(
            dimension_semantics=("parallel",)),
    )(x, w_rep, b_rep)
    # TODO(synk): tile H into row strips with a 1-row halo once a single image
    # block approaches the scoped VMEM budget (v7x: 32 MiB scoped / 64 MiB
    # physical); that also yields more grid steps per TensorCore.
    # TODO(synk): for bf16 activations on v6e/v7x, run the 9-tap MAC in bf16
    # (f32 accumulate at most); the f32 path here is kept for v5e safety.
    return out.reshape(B, N, C)


def _reference(x_nlc, size, weight, bias):
    """Plain-JAX reference: depthwise Conv2d(pad=1) + bias, then residual."""
    B, N, C = x_nlc.shape
    H, W = size
    x = x_nlc.reshape(B, H, W, C)
    w = jnp.transpose(weight, (2, 3, 1, 0))        # (3, 3, 1, C) HWIO
    y = lax.conv_general_dilated(
        x, w, window_strides=(1, 1), padding=[(1, 1), (1, 1)],
        dimension_numbers=("NHWC", "HWIO", "NHWC"), feature_group_count=C)
    y = y + bias
    return (y + x).reshape(B, N, C)


if __name__ == "__main__":
    B, H, W, C = 8, 16, 16, 128          # dim=128 -> lane-dense channel axis
    key = jax.random.PRNGKey(0)
    k_x, k_w, k_b = jax.random.split(key, 3)
    x = jax.random.normal(k_x, (B, H * W, C), jnp.float32)       # (B, N, C)
    weight = 0.1 * jax.random.normal(k_w, (C, 1, 3, 3), jnp.float32)
    bias = 0.1 * jax.random.normal(k_b, (C,), jnp.float32)

    fwd = jax.jit(lambda a, w, b: conv_pos_enc(a, (H, W), w, b))
    out = jax.block_until_ready(fwd(x, weight, bias))

    assert out.shape == (B, H * W, C), out.shape
    assert bool(jnp.all(jnp.isfinite(out)))
    ref = _reference(x, (H, W), weight, bias)
    assert bool(jnp.allclose(out, ref, atol=1e-4, rtol=1e-4)), float(
        jnp.max(jnp.abs(out - ref)))
    print("KERNEL_OK")
</pallas_src>

<mosaic_0001>
module attributes {stable_mosaic.version = 11 : i64} {
  func.func @_conv_pos_enc_kernel(%arg0: i32, %arg1: memref<2x16x16x128xf32, #tpu.memory_space<vmem>>, %arg2: memref<9x16x128xf32, #tpu.memory_space<vmem>>, %arg3: memref<16x128xf32, #tpu.memory_space<vmem>>, %arg4: memref<2x16x16x128xf32, #tpu.memory_space<vmem>>, %arg5: memref<2x16x16x128xf32, #tpu.memory_space<vmem>>, %arg6: memref<2x16x16x128xf32, #tpu.memory_space<vmem>>) attributes {dimension_semantics = [#tpu.dimension_semantics<parallel>], iteration_bounds = array<i64: 4>, scalar_prefetch = 0 : i64, scratch_operands = 2 : i64, tpu.core_type = #tpu.core_type<tc>, window_params = [{transform_indices = @transform_0, window_bounds = array<i64: 2, 16, 16, 128>}, {pipeline_mode = #tpu.pipeline_mode<synchronous>, transform_indices = @transform_1, window_bounds = array<i64: 9, 16, 128>}, {pipeline_mode = #tpu.pipeline_mode<synchronous>, transform_indices = @transform_2, window_bounds = array<i64: 16, 128>}, {transform_indices = @transform_3, window_bounds = array<i64: 2, 16, 16, 128>}]} {
    %cst = arith.constant 0.000000e+00 : f32
    %0 = vector.broadcast %cst : f32 to vector<2x16x1x128xf32>
    %c0 = arith.constant 0 : index
    %c0_0 = arith.constant 0 : index
    %c0_1 = arith.constant 0 : index
    %c0_2 = arith.constant 0 : index
    %1 = vector.load %arg5[%c0, %c0_0, %c0_1, %c0_2] : memref<2x16x16x128xf32, #tpu.memory_space<vmem>>, vector<2x16x1x128xf32>
    tpu.vector_store %arg5[%c0, %c0_0, %c0_1, %c0_2], %0 {strides = array<i32>} : memref<2x16x16x128xf32, #tpu.memory_space<vmem>>, vector<2x16x1x128xf32>,
    %c0_3 = arith.constant 0 : index
    %c0_4 = arith.constant 0 : index
    %c0_5 = arith.constant 0 : index
    %c0_6 = arith.constant 0 : index
    %2 = vector.load %arg1[%c0_3, %c0_4, %c0_5, %c0_6] : memref<2x16x16x128xf32, #tpu.memory_space<vmem>>, vector<2x16x15x128xf32>
    %c0_7 = arith.constant 0 : index
    %c0_8 = arith.constant 0 : index
    %c1 = arith.constant 1 : index
    %c0_9 = arith.constant 0 : index
    %3 = vector.load %arg5[%c0_7, %c0_8, %c1, %c0_9] : memref<2x16x16x128xf32, #tpu.memory_space<vmem>>, vector<2x16x15x128xf32>
    tpu.vector_store %arg5[%c0_7, %c0_8, %c1, %c0_9], %2 {strides = array<i32>} : memref<2x16x16x128xf32, #tpu.memory_space<vmem>>, vector<2x16x15x128xf32>,
    %c0_10 = arith.constant 0 : index
    %c0_11 = arith.constant 0 : index
    %c15 = arith.constant 15 : index
    %c0_12 = arith.constant 0 : index
    %4 = vector.load %arg6[%c0_10, %c0_11, %c15, %c0_12] : memref<2x16x16x128xf32, #tpu.memory_space<vmem>>, vector<2x16x1x128xf32>
    tpu.vector_store %arg6[%c0_10, %c0_11, %c15, %c0_12], %0 {strides = array<i32>} : memref<2x16x16x128xf32, #tpu.memory_space<vmem>>, vector<2x16x1x128xf32>,
    %c0_13 = arith.constant 0 : index
    %c0_14 = arith.constant 0 : index
    %c1_15 = arith.constant 1 : index
    %c0_16 = arith.constant 0 : index
    %5 = vector.load %arg1[%c0_13, %c0_14, %c1_15, %c0_16] : memref<2x16x16x128xf32, #tpu.memory_space<vmem>>, vector<2x16x15x128xf32>
    %c0_17 = arith.constant 0 : index
    %c0_18 = arith.constant 0 : index
    %c0_19 = arith.constant 0 : index
    %c0_20 = arith.constant 0 : index
    %6 = vector.load %arg6[%c0_17, %c0_18, %c0_19, %c0_20] : memref<2x16x16x128xf32, #tpu.memory_space<vmem>>, vector<2x16x15x128xf32>
    tpu.vector_store %arg6[%c0_17, %c0_18, %c0_19, %c0_20], %5 {strides = array<i32>} : memref<2x16x16x128xf32, #tpu.memory_space<vmem>>, vector<2x16x15x128xf32>,
    %c0_21 = arith.constant 0 : index
    %c0_22 = arith.constant 0 : index
    %7 = vector.load %arg3[%c0_21, %c0_22] : memref<16x128xf32, #tpu.memory_space<vmem>>, vector<16x128xf32>
    %c0_23 = arith.constant 0 : index
    %c1_24 = arith.constant 1 : index
    %c0_25 = arith.constant 0 : index
    %c0_26 = arith.constant 0 : index
    %8 = vector.load %arg1[%c0_23, %c1_24, %c0_25, %c0_26] : memref<2x16x16x128xf32, #tpu.memory_space<vmem>>, vector<2x14x16x128xf32>
    %9 = vector.shape_cast %7 : vector<16x128xf32> to vector<1x1x16x128xf32>
    %10 = vector.broadcast %9 : vector<1x1x16x128xf32> to vector<2x14x16x128xf32>
    %11 = arith.addf %8, %10 : vector<2x14x16x128xf32>
    %c0_27 = arith.constant 0 : index
    %c0_28 = arith.constant 0 : index
    %c0_29 = arith.constant 0 : index
    %12 = vector.load %arg2[%c0_27, %c0_28, %c0_29] : memref<9x16x128xf32, #tpu.memory_space<vmem>>, vector<1x16x128xf32>
    %13 = vector.shape_cast %12 : vector<1x16x128xf32> to vector<16x128xf32>
    %c0_30 = arith.constant 0 : index
    %c0_31 = arith.constant 0 : index
    %c0_32 = arith.constant 0 : index
    %c0_33 = arith.constant 0 : index
    %14 = vector.load %arg5[%c0_30, %c0_31, %c0_32, %c0_33] : memref<2x16x16x128xf32, #tpu.memory_space<vmem>>, vector<2x14x16x128xf32>
    %15 = vector.shape_cast %13 : vector<16x128xf32> to vector<1x1x16x128xf32>
    %16 = vector.broadcast %15 : vector<1x1x16x128xf32> to vector<2x14x16x128xf32>
    %17 = arith.mulf %16, %14 : vector<2x14x16x128xf32>
    %c1_34 = arith.constant 1 : index
    %c0_35 = arith.constant 0 : index
    %c0_36 = arith.constant 0 : index
    %18 = vector.load %arg2[%c1_34, %c0_35, %c0_36] : memref<9x16x128xf32, #tpu.memory_space<vmem>>, vector<1x16x128xf32>
    %19 = vector.shape_cast %18 : vector<1x16x128xf32> to vector<16x128xf32>
    %c0_37 = arith.constant 0 : index
    %c0_38 = arith.constant 0 : index
    %c0_39 = arith.constant 0 : index
    %c0_40 = arith.constant 0 : index
    %20 = vector.load %arg1[%c0_37, %c0_38, %c0_39, %c0_40] : memref<2x16x16x128xf32, #tpu.memory_space<vmem>>, vector<2x14x16x128xf32>
    %21 = vector.shape_cast %19 : vector<16x128xf32> to vector<1x1x16x128xf32>
    %22 = vector.broadcast %21 : vector<1x1x16x128xf32> to vector<2x14x16x128xf32>
    %23 = arith.mulf %22, %20 : vector<2x14x16x128xf32>
    %24 = arith.addf %17, %23 : vector<2x14x16x128xf32>
    %c2 = arith.constant 2 : index
    %c0_41 = arith.constant 0 : index
    %c0_42 = arith.constant 0 : index
    %25 = vector.load %arg2[%c2, %c0_41, %c0_42] : memref<9x16x128xf32, #tpu.memory_space<vmem>>, vector<1x16x128xf32>
    %26 = vector.shape_cast %25 : vector<1x16x128xf32> to vector<16x128xf32>
    %c0_43 = arith.constant 0 : index
    %c0_44 = arith.constant 0 : index
    %c0_45 = arith.constant 0 : index
    %c0_46 = arith.constant 0 : index
    %27 = vector.load %arg6[%c0_43, %c0_44, %c0_45, %c0_46] : memref<2x16x16x128xf32, #tpu.memory_space<vmem>>, vector<2x14x16x128xf32>
    %28 = vector.shape_cast %26 : vector<16x128xf32> to vector<1x1x16x128xf32>
    %29 = vector.broadcast %28 : vector<1x1x16x128xf32> to vector<2x14x16x128xf32>
    %30 = arith.mulf %29, %27 : vector<2x14x16x128xf32>
    %31 = arith.addf %24, %30 : vector<2x14x16x128xf32>
    %32 = arith.addf %11, %31 : vector<2x14x16x128xf32>
    %c3 = arith.constant 3 : index
    %c0_47 = arith.constant 0 : index
    %c0_48 = arith.constant 0 : index
    %33 = vector.load %arg2[%c3, %c0_47, %c0_48] : memref<9x16x128xf32, #tpu.memory_space<vmem>>, vector<1x16x128xf32>
    %34 = vector.shape_cast %33 : vector<1x16x128xf32> to vector<16x128xf32>
    %c0_49 = arith.constant 0 : index
    %c1_50 = arith.constant 1 : index
    %c0_51 = arith.constant 0 : index
    %c0_52 = arith.constant 0 : index
    %35 = vector.load %arg5[%c0_49, %c1_50, %c0_51, %c0_52] : memref<2x16x16x128xf32, #tpu.memory_space<vmem>>, vector<2x14x16x128xf32>
    %36 = vector.shape_cast %34 : vector<16x128xf32> to vector<1x1x16x128xf32>
    %37 = vector.broadcast %36 : vector<1x1x16x128xf32> to vector<2x14x16x128xf32>
    %38 = arith.mulf %37, %35 : vector<2x14x16x128xf32>
    %c4 = arith.constant 4 : index
    %c0_53 = arith.constant 0 : index
    %c0_54 = arith.constant 0 : index
    %39 = vector.load %arg2[%c4, %c0_53, %c0_54] : memref<9x16x128xf32, #tpu.memory_space<vmem>>, vector<1x16x128xf32>
    %40 = vector.shape_cast %39 : vector<1x16x128xf32> to vector<16x128xf32>
    %c0_55 = arith.constant 0 : index
    %c1_56 = arith.constant 1 : index
    %c0_57 = arith.constant 0 : index
    %c0_58 = arith.constant 0 : index
    %41 = vector.load %arg1[%c0_55, %c1_56, %c0_57, %c0_58] : memref<2x16x16x128xf32, #tpu.memory_space<vmem>>, vector<2x14x16x128xf32>
    %42 = vector.shape_cast %40 : vector<16x128xf32> to vector<1x1x16x128xf32>
    %43 = vector.broadcast %42 : vector<1x1x16x128xf32> to vector<2x14x16x128xf32>
    %44 = arith.mulf %43, %41 : vector<2x14x16x128xf32>
    %45 = arith.addf %38, %44 : vector<2x14x16x128xf32>
    %c5 = arith.constant 5 : index
    %c0_59 = arith.constant 0 : index
    %c0_60 = arith.constant 0 : index
    %46 = vector.load %arg2[%c5, %c0_59, %c0_60] : memref<9x16x128xf32, #tpu.memory_space<vmem>>, vector<1x16x128xf32>
    %47 = vector.shape_cast %46 : vector<1x16x128xf32> to vector<16x128xf32>
    %c0_61 = arith.constant 0 : index
    %c1_62 = arith.constant 1 : index
    %c0_63 = arith.constant 0 : index
    %c0_64 = arith.constant 0 : index
    %48 = vector.load %arg6[%c0_61, %c1_62, %c0_63, %c0_64] : memref<2x16x16x128xf32, #tpu.memory_space<vmem>>, vector<2x14x16x128xf32>
    %49 = vector.shape_cast %47 : vector<16x128xf32> to vector<1x1x16x128xf32>
    %50 = vector.broadcast %49 : vector<1x1x16x128xf32> to vector<2x14x16x128xf32>
    %51 = arith.mulf %50, %48 : vector<2x14x16x128xf32>
    %52 = arith.addf %45, %51 : vector<2x14x16x128xf32>
    %53 = arith.addf %32, %52 : vector<2x14x16x128xf32>
    %c6 = arith.constant 6 : index
    %c0_65 = arith.constant 0 : index
    %c0_66 = arith.constant 0 : index
    %54 = vector.load %arg2[%c6, %c0_65, %c0_66] : memref<9x16x128xf32, #tpu.memory_space<vmem>>, vector<1x16x128xf32>
    %55 = vector.shape_cast %54 : vector<1x16x128xf32> to vector<16x128xf32>
    %c0_67 = arith.constant 0 : index
    %c2_68 = arith.constant 2 : index
    %c0_69 = arith.constant 0 : index
    %c0_70 = arith.constant 0 : index
    %56 = vector.load %arg5[%c0_67, %c2_68, %c0_69, %c0_70] : memref<2x16x16x128xf32, #tpu.memory_space<vmem>>, vector<2x14x16x128xf32>
    %57 = vector.shape_cast %55 : vector<16x128xf32> to vector<1x1x16x128xf32>
    %58 = vector.broadcast %57 : vector<1x1x16x128xf32> to vector<2x14x16x128xf32>
    %59 = arith.mulf %58, %56 : vector<2x14x16x128xf32>
    %c7 = arith.constant 7 : index
    %c0_71 = arith.constant 0 : index
    %c0_72 = arith.constant 0 : index
    %60 = vector.load %arg2[%c7, %c0_71, %c0_72] : memref<9x16x128xf32, #tpu.memory_space<vmem>>, vector<1x16x128xf32>
    %61 = vector.shape_cast %60 : vector<1x16x128xf32> to vector<16x128xf32>
    %c0_73 = arith.constant 0 : index
    %c2_74 = arith.constant 2 : index
    %c0_75 = arith.constant 0 : index
    %c0_76 = arith.constant 0 : index
    %62 = vector.load %arg1[%c0_73, %c2_74, %c0_75, %c0_76] : memref<2x16x16x128xf32, #tpu.memory_space<vmem>>, vector<2x14x16x128xf32>
    %63 = vector.shape_cast %61 : vector<16x128xf32> to vector<1x1x16x128xf32>
    %64 = vector.broadcast %63 : vector<1x1x16x128xf32> to vector<2x14x16x128xf32>
    %65 = arith.mulf %64, %62 : vector<2x14x16x128xf32>
    %66 = arith.addf %59, %65 : vector<2x14x16x128xf32>
    %c8 = arith.constant 8 : index
    %c0_77 = arith.constant 0 : index
    %c0_78 = arith.constant 0 : index
    %67 = vector.load %arg2[%c8, %c0_77, %c0_78] : memref<9x16x128xf32, #tpu.memory_space<vmem>>, vector<1x16x128xf32>
    %68 = vector.shape_cast %67 : vector<1x16x128xf32> to vector<16x128xf32>
    %c0_79 = arith.constant 0 : index
    %c2_80 = arith.constant 2 : index
    %c0_81 = arith.constant 0 : index
    %c0_82 = arith.constant 0 : index
    %69 = vector.load %arg6[%c0_79, %c2_80, %c0_81, %c0_82] : memref<2x16x16x128xf32, #tpu.memory_space<vmem>>, vector<2x14x16x128xf32>
    %70 = vector.shape_cast %68 : vector<16x128xf32> to vector<1x1x16x128xf32>
    %71 = vector.broadcast %70 : vector<1x1x16x128xf32> to vector<2x14x16x128xf32>
    %72 = arith.mulf %71, %69 : vector<2x14x16x128xf32>
    %73 = arith.addf %66, %72 : vector<2x14x16x128xf32>
    %74 = arith.addf %53, %73 : vector<2x14x16x128xf32>
    %c0_83 = arith.constant 0 : index
    %c1_84 = arith.constant 1 : index
    %c0_85 = arith.constant 0 : index
    %c0_86 = arith.constant 0 : index
    %75 = vector.load %arg4[%c0_83, %c1_84, %c0_85, %c0_86] : memref<2x16x16x128xf32, #tpu.memory_space<vmem>>, vector<2x14x16x128xf32>
    tpu.vector_store %arg4[%c0_83, %c1_84, %c0_85, %c0_86], %74 {strides = array<i32>} : memref<2x16x16x128xf32, #tpu.memory_space<vmem>>, vector<2x14x16x128xf32>,
    %c0_87 = arith.constant 0 : index
    %c0_88 = arith.constant 0 : index
    %c0_89 = arith.constant 0 : index
    %c0_90 = arith.constant 0 : index
    %76 = vector.load %arg1[%c0_87, %c0_88, %c0_89, %c0_90] : memref<2x16x16x128xf32, #tpu.memory_space<vmem>>, vector<2x1x16x128xf32>
    %77 = vector.shape_cast %7 : vector<16x128xf32> to vector<1x1x16x128xf32>
    %78 = vector.broadcast %77 : vector<1x1x16x128xf32> to vector<2x1x16x128xf32>
    %79 = arith.addf %76, %78 : vector<2x1x16x128xf32>
    %c3_91 = arith.constant 3 : index
    %c0_92 = arith.constant 0 : index
    %c0_93 = arith.constant 0 : index
    %80 = vector.load %arg2[%c3_91, %c0_92, %c0_93] : memref<9x16x128xf32, #tpu.memory_space<vmem>>, vector<1x16x128xf32>
    %81 = vector.shape_cast %80 : vector<1x16x128xf32> to vector<16x128xf32>
    %c0_94 = arith.constant 0 : index
    %c0_95 = arith.constant 0 : index
    %c0_96 = arith.constant 0 : index
    %c0_97 = arith.constant 0 : index
    %82 = vector.load %arg5[%c0_94, %c0_95, %c0_96, %c0_97] : memref<2x16x16x128xf32, #tpu.memory_space<vmem>>, vector<2x1x16x128xf32>
    %83 = vector.shape_cast %81 : vector<16x128xf32> to vector<1x1x16x128xf32>
    %84 = vector.broadcast %83 : vector<1x1x16x128xf32> to vector<2x1x16x128xf32>
    %85 = arith.mulf %84, %82 : vector<2x1x16x128xf32>
    %c4_98 = arith.constant 4 : index
    %c0_99 = arith.constant 0 : index
    %c0_100 = arith.constant 0 : index
    %86 = vector.load %arg2[%c4_98, %c0_99, %c0_100] : memref<9x16x128xf32, #tpu.memory_space<vmem>>, vector<1x16x128xf32>
    %87 = vector.shape_cast %86 : vector<1x16x128xf32> to vector<16x128xf32>
    %c0_101 = arith.constant 0 : index
    %c0_102 = arith.constant 0 : index
    %c0_103 = arith.constant 0 : index
    %c0_104 = arith.constant 0 : index
    %88 = vector.load %arg1[%c0_101, %c0_102, %c0_103, %c0_104] : memref<2x16x16x128xf32, #tpu.memory_space<vmem>>, vector<2x1x16x128xf32>
    %89 = vector.shape_cast %87 : vector<16x128xf32> to vector<1x1x16x128xf32>
    %90 = vector.broadcast %89 : vector<1x1x16x128xf32> to vector<2x1x16x128xf32>
    %91 = arith.mulf %90, %88 : vector<2x1x16x128xf32>
    %92 = arith.addf %85, %91 : vector<2x1x16x128xf32>
    %c5_105 = arith.constant 5 : index
    %c0_106 = arith.constant 0 : index
    %c0_107 = arith.constant 0 : index
    %93 = vector.load %arg2[%c5_105, %c0_106, %c0_107] : memref<9x16x128xf32, #tpu.memory_space<vmem>>, vector<1x16x128xf32>
    %94 = vector.shape_cast %93 : vector<1x16x128xf32> to vector<16x128xf32>
    %c0_108 = arith.constant 0 : index
    %c0_109 = arith.constant 0 : index
    %c0_110 = arith.constant 0 : index
    %c0_111 = arith.constant 0 : index
    %95 = vector.load %arg6[%c0_108, %c0_109, %c0_110, %c0_111] : memref<2x16x16x128xf32, #tpu.memory_space<vmem>>, vector<2x1x16x128xf32>
    %96 = vector.shape_cast %94 : vector<16x128xf32> to vector<1x1x16x128xf32>
    %97 = vector.broadcast %96 : vector<1x1x16x128xf32> to vector<2x1x16x128xf32>
    %98 = arith.mulf %97, %95 : vector<2x1x16x128xf32>
    %99 = arith.addf %92, %98 : vector<2x1x16x128xf32>
    %100 = arith.addf %79, %99 : vector<2x1x16x128xf32>
    %c6_112 = arith.constant 6 : index
    %c0_113 = arith.constant 0 : index
    %c0_114 = arith.constant 0 : index
    %101 = vector.load %arg2[%c6_112, %c0_113, %c0_114] : memref<9x16x128xf32, #tpu.memory_space<vmem>>, vector<1x16x128xf32>
    %102 = vector.shape_cast %101 : vector<1x16x128xf32> to vector<16x128xf32>
    %c0_115 = arith.constant 0 : index
    %c1_116 = arith.constant 1 : index
    %c0_117 = arith.constant 0 : index
    %c0_118 = arith.constant 0 : index
    %103 = vector.load %arg5[%c0_115, %c1_116, %c0_117, %c0_118] : memref<2x16x16x128xf32, #tpu.memory_space<vmem>>, vector<2x1x16x128xf32>
    %104 = vector.shape_cast %102 : vector<16x128xf32> to vector<1x1x16x128xf32>
    %105 = vector.broadcast %104 : vector<1x1x16x128xf32> to vector<2x1x16x128xf32>
    %106 = arith.mulf %105, %103 : vector<2x1x16x128xf32>
    %c7_119 = arith.constant 7 : index
    %c0_120 = arith.constant 0 : index
    %c0_121 = arith.constant 0 : index
    %107 = vector.load %arg2[%c7_119, %c0_120, %c0_121] : memref<9x16x128xf32, #tpu.memory_space<vmem>>, vector<1x16x128xf32>
    %108 = vector.shape_cast %107 : vector<1x16x128xf32> to vector<16x128xf32>
    %c0_122 = arith.constant 0 : index
    %c1_123 = arith.constant 1 : index
    %c0_124 = arith.constant 0 : index
    %c0_125 = arith.constant 0 : index
    %109 = vector.load %arg1[%c0_122, %c1_123, %c0_124, %c0_125] : memref<2x16x16x128xf32, #tpu.memory_space<vmem>>, vector<2x1x16x128xf32>
    %110 = vector.shape_cast %108 : vector<16x128xf32> to vector<1x1x16x128xf32>
    %111 = vector.broadcast %110 : vector<1x1x16x128xf32> to vector<2x1x16x128xf32>
    %112 = arith.mulf %111, %109 : vector<2x1x16x128xf32>
    %113 = arith.addf %106, %112 : vector<2x1x16x128xf32>
    %c8_126 = arith.constant 8 : index
    %c0_127 = arith.constant 0 : index
    %c0_128 = arith.constant 0 : index
    %114 = vector.load %arg2[%c8_126, %c0_127, %c0_128] : memref<9x16x128xf32, #tpu.memory_space<vmem>>, vector<1x16x128xf32>
    %115 = vector.shape_cast %114 : vector<1x16x128xf32> to vector<16x128xf32>
    %c0_129 = arith.constant 0 : index
    %c1_130 = arith.constant 1 : index
    %c0_131 = arith.constant 0 : index
    %c0_132 = arith.constant 0 : index
    %116 = vector.load %arg6[%c0_129, %c1_130, %c0_131, %c0_132] : memref<2x16x16x128xf32, #tpu.memory_space<vmem>>, vector<2x1x16x128xf32>
    %117 = vector.shape_cast %115 : vector<16x128xf32> to vector<1x1x16x128xf32>
    %118 = vector.broadcast %117 : vector<1x1x16x128xf32> to vector<2x1x16x128xf32>
    %119 = arith.mulf %118, %116 : vector<2x1x16x128xf32>
    %120 = arith.addf %113, %119 : vector<2x1x16x128xf32>
    %121 = arith.addf %100, %120 : vector<2x1x16x128xf32>
    %c0_133 = arith.constant 0 : index
    %c0_134 = arith.constant 0 : index
    %c0_135 = arith.constant 0 : index
    %c0_136 = arith.constant 0 : index
    %122 = vector.load %arg4[%c0_133, %c0_134, %c0_135, %c0_136] : memref<2x16x16x128xf32, #tpu.memory_space<vmem>>, vector<2x1x16x128xf32>
    tpu.vector_store %arg4[%c0_133, %c0_134, %c0_135, %c0_136], %121 {strides = array<i32>} : memref<2x16x16x128xf32, #tpu.memory_space<vmem>>, vector<2x1x16x128xf32>,
    %c0_137 = arith.constant 0 : index
    %c15_138 = arith.constant 15 : index
    %c0_139 = arith.constant 0 : index
    %c0_140 = arith.constant 0 : index
    %123 = vector.load %arg1[%c0_137, %c15_138, %c0_139, %c0_140] : memref<2x16x16x128xf32, #tpu.memory_space<vmem>>, vector<2x1x16x128xf32>
    %124 = vector.shape_cast %7 : vector<16x128xf32> to vector<1x1x16x128xf32>
    %125 = vector.broadcast %124 : vector<1x1x16x128xf32> to vector<2x1x16x128xf32>
    %126 = arith.addf %123, %125 : vector<2x1x16x128xf32>
    %c0_141 = arith.constant 0 : index
    %c0_142 = arith.constant 0 : index
    %c0_143 = arith.constant 0 : index
    %127 = vector.load %arg2[%c0_141, %c0_142, %c0_143] : memref<9x16x128xf32, #tpu.memory_space<vmem>>, vector<1x16x128xf32>
    %128 = vector.shape_cast %127 : vector<1x16x128xf32> to vector<16x128xf32>
    %c0_144 = arith.constant 0 : index
    %c14 = arith.constant 14 : index
    %c0_145 = arith.constant 0 : index
    %c0_146 = arith.constant 0 : index
    %129 = vector.load %arg5[%c0_144, %c14, %c0_145, %c0_146] : memref<2x16x16x128xf32, #tpu.memory_space<vmem>>, vector<2x1x16x128xf32>
    %130 = vector.shape_cast %128 : vector<16x128xf32> to vector<1x1x16x128xf32>
    %131 = vector.broadcast %130 : vector<1x1x16x128xf32> to vector<2x1x16x128xf32>
    %132 = arith.mulf %131, %129 : vector<2x1x16x128xf32>
    %c1_147 = arith.constant 1 : index
    %c0_148 = arith.constant 0 : index
    %c0_149 = arith.constant 0 : index
    %133 = vector.load %arg2[%c1_147, %c0_148, %c0_149] : memref<9x16x128xf32, #tpu.memory_space<vmem>>, vector<1x16x128xf32>
    %134 = vector.shape_cast %133 : vector<1x16x128xf32> to vector<16x128xf32>
    %c0_150 = arith.constant 0 : index
    %c14_151 = arith.constant 14 : index
    %c0_152 = arith.constant 0 : index
    %c0_153 = arith.constant 0 : index
    %135 = vector.load %arg1[%c0_150, %c14_151, %c0_152, %c0_153] : memref<2x16x16x128xf32, #tpu.memory_space<vmem>>, vector<2x1x16x128xf32>
    %136 = vector.shape_cast %134 : vector<16x128xf32> to vector<1x1x16x128xf32>
    %137 = vector.broadcast %136 : vector<1x1x16x128xf32> to vector<2x1x16x128xf32>
    %138 = arith.mulf %137, %135 : vector<2x1x16x128xf32>
    %139 = arith.addf %132, %138 : vector<2x1x16x128xf32>
    %c2_154 = arith.constant 2 : index
    %c0_155 = arith.constant 0 : index
    %c0_156 = arith.constant 0 : index
    %140 = vector.load %arg2[%c2_154, %c0_155, %c0_156] : memref<9x16x128xf32, #tpu.memory_space<vmem>>, vector<1x16x128xf32>
    %141 = vector.shape_cast %140 : vector<1x16x128xf32> to vector<16x128xf32>
    %c0_157 = arith.constant 0 : index
    %c14_158 = arith.constant 14 : index
    %c0_159 = arith.constant 0 : index
    %c0_160 = arith.constant 0 : index
    %142 = vector.load %arg6[%c0_157, %c14_158, %c0_159, %c0_160] : memref<2x16x16x128xf32, #tpu.memory_space<vmem>>, vector<2x1x16x128xf32>
    %143 = vector.shape_cast %141 : vector<16x128xf32> to vector<1x1x16x128xf32>
    %144 = vector.broadcast %143 : vector<1x1x16x128xf32> to vector<2x1x16x128xf32>
    %145 = arith.mulf %144, %142 : vector<2x1x16x128xf32>
    %146 = arith.addf %139, %145 : vector<2x1x16x128xf32>
    %147 = arith.addf %126, %146 : vector<2x1x16x128xf32>
    %c3_161 = arith.constant 3 : index
    %c0_162 = arith.constant 0 : index
    %c0_163 = arith.constant 0 : index
    %148 = vector.load %arg2[%c3_161, %c0_162, %c0_163] : memref<9x16x128xf32, #tpu.memory_space<vmem>>, vector<1x16x128xf32>
    %149 = vector.shape_cast %148 : vector<1x16x128xf32> to vector<16x128xf32>
    %c0_164 = arith.constant 0 : index
    %c15_165 = arith.constant 15 : index
    %c0_166 = arith.constant 0 : index
    %c0_167 = arith.constant 0 : index
    %150 = vector.load %arg5[%c0_164, %c15_165, %c0_166, %c0_167] : memref<2x16x16x128xf32, #tpu.memory_space<vmem>>, vector<2x1x16x128xf32>
    %151 = vector.shape_cast %149 : vector<16x128xf32> to vector<1x1x16x128xf32>
    %152 = vector.broadcast %151 : vector<1x1x16x128xf32> to vector<2x1x16x128xf32>
    %153 = arith.mulf %152, %150 : vector<2x1x16x128xf32>
    %c4_168 = arith.constant 4 : index
    %c0_169 = arith.constant 0 : index
    %c0_170 = arith.constant 0 : index
    %154 = vector.load %arg2[%c4_168, %c0_169, %c0_170] : memref<9x16x128xf32, #tpu.memory_space<vmem>>, vector<1x16x128xf32>
    %155 = vector.shape_cast %154 : vector<1x16x128xf32> to vector<16x128xf32>
    %c0_171 = arith.constant 0 : index
    %c15_172 = arith.constant 15 : index
    %c0_173 = arith.constant 0 : index
    %c0_174 = arith.constant 0 : index
    %156 = vector.load %arg1[%c0_171, %c15_172, %c0_173, %c0_174] : memref<2x16x16x128xf32, #tpu.memory_space<vmem>>, vector<2x1x16x128xf32>
    %157 = vector.shape_cast %155 : vector<16x128xf32> to vector<1x1x16x128xf32>
    %158 = vector.broadcast %157 : vector<1x1x16x128xf32> to vector<2x1x16x128xf32>
    %159 = arith.mulf %158, %156 : vector<2x1x16x128xf32>
    %160 = arith.addf %153, %159 : vector<2x1x16x128xf32>
    %c5_175 = arith.constant 5 : index
    %c0_176 = arith.constant 0 : index
    %c0_177 = arith.constant 0 : index
    %161 = vector.load %arg2[%c5_175, %c0_176, %c0_177] : memref<9x16x128xf32, #tpu.memory_space<vmem>>, vector<1x16x128xf32>
    %162 = vector.shape_cast %161 : vector<1x16x128xf32> to vector<16x128xf32>
    %c0_178 = arith.constant 0 : index
    %c15_179 = arith.constant 15 : index
    %c0_180 = arith.constant 0 : index
    %c0_181 = arith.constant 0 : index
    %163 = vector.load %arg6[%c0_178, %c15_179, %c0_180, %c0_181] : memref<2x16x16x128xf32, #tpu.memory_space<vmem>>, vector<2x1x16x128xf32>
    %164 = vector.shape_cast %162 : vector<16x128xf32> to vector<1x1x16x128xf32>
    %165 = vector.broadcast %164 : vector<1x1x16x128xf32> to vector<2x1x16x128xf32>
    %166 = arith.mulf %165, %163 : vector<2x1x16x128xf32>
    %167 = arith.addf %160, %166 : vector<2x1x16x128xf32>
    %168 = arith.addf %147, %167 : vector<2x1x16x128xf32>
    %c0_182 = arith.constant 0 : index
    %c15_183 = arith.constant 15 : index
    %c0_184 = arith.constant 0 : index
    %c0_185 = arith.constant 0 : index
    %169 = vector.load %arg4[%c0_182, %c15_183, %c0_184, %c0_185] : memref<2x16x16x128xf32, #tpu.memory_space<vmem>>, vector<2x1x16x128xf32>
    tpu.vector_store %arg4[%c0_182, %c15_183, %c0_184, %c0_185], %168 {strides = array<i32>} : memref<2x16x16x128xf32, #tpu.memory_space<vmem>>, vector<2x1x16x128xf32>,
    return
  }
  func.func @transform_0(%arg0: i32) -> (i32, i32, i32, i32) {
    %c0_i32 = arith.constant 0 : i32
    %c0_i32_0 = arith.constant 0 : i32
    %c0_i32_1 = arith.constant 0 : i32
    %c0_i32_2 = arith.constant 0 : i32
    return %arg0, %c0_i32, %c0_i32_0, %c0_i32_1 : i32, i32, i32, i32
  }
  func.func @transform_1(%arg0: i32) -> (i32, i32, i32) {
    %c0_i32 = arith.constant 0 : i32
    %c0_i32_0 = arith.constant 0 : i32
    %c0_i32_1 = arith.constant 0 : i32
    %c0_i32_2 = arith.constant 0 : i32
    return %c0_i32, %c0_i32_0, %c0_i32_1 : i32, i32, i32
  }
  func.func @transform_2(%arg0: i32) -> (i32, i32) {
    %c0_i32 = arith.constant 0 : i32
    %c0_i32_0 = arith.constant 0 : i32
    %c0_i32_1 = arith.constant 0 : i32
    return %c0_i32, %c0_i32_0 : i32, i32
  }
  func.func @transform_3(%arg0: i32) -> (i32, i32, i32, i32) {
    %c0_i32 = arith.constant 0 : i32
    %c0_i32_0 = arith.constant 0 : i32
    %c0_i32_1 = arith.constant 0 : i32
    %c0_i32_2 = arith.constant 0 : i32
    return %arg0, %c0_i32, %c0_i32_0, %c0_i32_1 : i32, i32, i32, i32
  }
}

</mosaic_0001>

<llo_original>
// kernel: _lambda_.1
$region0: #{_lambda_.1}
  #allocation0 [shape = 'u32[]', space=smem, size = 0x4, offset = 0x4, fixed_abs, tag = 'smem constant byte address 0x4 - core index']
  #allocation1 [shape = 'u32[144,128]{1,0:T(1,128)}', space=vmem, size = 0x12000, scoped, tag = 'internal scratch']
  #allocation2 [shape = 'f32[2,16,16,128]{3,2,1,0:T(8,128)}', space=vmem, size = 0x40000, scoped, tag = 'scratch operand']
  #allocation3 [shape = 'f32[2,16,16,128]{3,2,1,0:T(8,128)}', space=vmem, size = 0x40000, scoped, tag = 'scratch operand']
  %s0 = inlined_call_operand.hbm [shape: f32[8,16,16,128], index: 0, kind: input, shape index: {}]
  %s1 = inlined_call_operand.vmem [shape: f32[9,16,128], index: 1, kind: input, shape index: {}]
  %s2 = inlined_call_operand.vmem [shape: f32[16,128], index: 2, kind: input, shape index: {}]
  %s3 = inlined_call_operand.hbm [shape: f32[8,16,16,128], index: 3, kind: output, shape index: {}]
  %s4 = sld [smem:[#allocation0]]
  $region49: #{_lambda_.1} parent=0
    _
  %s6 = ssub.s32 1, %s4
  %s7 = scalar_select 0, %s6, %s4
  $region1: #{_lambda_.1} parent=0
    #allocation4 [shape = 'u8[524288]{0}', space=vmem, size = 0x80000, scoped, tag = 'input window, operand 0']
    #allocation5 [shape = 's32[2]{0}', space=sflag, size = 0x8, scoped, tag = 'scoped memory for _lambda_.1']
    #allocation6 [shape = 's32[2]{0}', space=sflag, size = 0x8, scoped, tag = 'scoped memory for _lambda_.1']
    #allocation7 [shape = 'u8[524288]{0}', space=vmem, size = 0x80000, scoped, tag = 'output window, operand 0']
    %8 = vsyncpa [#allocation5], 0
    %s9 = scalar_lea.sflag [#allocation5], 1
    %10 = vsyncpa %s9, 0
    %11 = vsyncpa [#allocation6], 0
    %s12 = scalar_lea.sflag [#allocation6], 1
    %13 = vsyncpa %s12, 0
    loop: start=0, step=1, limit=6
    $region2: #{_lambda_.1} parent=1 // loop_pre_header
      _
    $region3: #{_lambda_.1} parent=1 // loop_header
      %s15 = sphi 0, %s19
      %p16 = scmp.ge.s32.totalorder %s15, 6
      %s25 = sphi 0, %s27
      %s28 = sphi 0, %s25
      %s29 = sphi 0, %s28
      %s45 = sphi 0, %s29
      %s49 = sphi 0, %s49
      %s51 = sphi 0, %s49
      %s52 = sphi 0, %s51
      %s66 = sphi 0, %s52
      %s70 = sphi 0, %s70
      %s72 = sphi 0, %s70
      %s73 = sphi 0, %s72
      %s87 = sphi 0, %s73
      %s93 = sphi 0, %s95
      %s96 = sphi 0, %s93
      %s97 = sphi 0, %s96
      %s113 = sphi 0, %s97
    $region4: #{_lambda_.1} parent=1 // loop_header_branch
      %18 = sbr.rel (%p16) target = $region8
    $region5: #{_lambda_.1} parent=1 // loop_body
      %s20 = ssub.s32 %s15, 1
      %s21 = ssub.s32 %s15, 2
      %s22 = sadd.s32 %s15, 1
      %s23 = ssub.s32 %s15, %s22
      %p24 = scmp.eq.s32.totalorder %s23, 0
      %s26 = sadd.s32 %s25, 1
      %s27 = scalar_select %p24, %s25, %s26
      %p30 = pneg %p24
      %p31 = scmp.eq.s32.totalorder %s15, 3
      %p32 = por %p30, %p31
      %p33 = scmp.ne.s32.totalorder %s25, %s28
      %p34 = scmp.eq.s32.totalorder %s15, 0
      %p35 = por %p33, %p34
      %p36 = scmp.ne.s32.totalorder %s25, %s28
      %p37 = scmp.eq.s32.totalorder %s20, 3
      %p38 = por %p36, %p37
      %p39 = scmp.ne.s32.totalorder %s28, %s29
      %p40 = scmp.eq.s32.totalorder %s20, 0
      %p41 = por %p39, %p40
      %p42 = scmp.ne.s32.totalorder %s28, %s29
      %p43 = scmp.eq.s32.totalorder %s21, 3
      %p44 = por %p42, %p43
      %p46 = scmp.ne.s32.totalorder %s29, %s45
      %p47 = scmp.eq.s32.totalorder %s21, 0
      %p48 = por %p46, %p47
      %s50 = sadd.s32 %s49, 1
      %p53 = scmp.eq.s32.totalorder %s15, 3
      %p54 = scmp.ne.s32.totalorder %s49, %s51
      %p55 = scmp.eq.s32.totalorder %s15, 0
      %p56 = por %p54, %p55
      %p57 = scmp.ne.s32.totalorder %s49, %s51
      %p58 = scmp.eq.s32.totalorder %s20, 3
      %p59 = por %p57, %p58
      %p60 = scmp.ne.s32.totalorder %s51, %s52
      %p61 = scmp.eq.s32.totalorder %s20, 0
      %p62 = por %p60, %p61
      %p63 = scmp.ne.s32.totalorder %s51, %s52
      %p64 = scmp.eq.s32.totalorder %s21, 3
      %p65 = por %p63, %p64
      %p67 = scmp.ne.s32.totalorder %s52, %s66
      %p68 = scmp.eq.s32.totalorder %s21, 0
      %p69 = por %p67, %p68
      %s71 = sadd.s32 %s70, 1
      %p74 = scmp.eq.s32.totalorder %s15, 3
      %p75 = scmp.ne.s32.totalorder %s70, %s72
      %p76 = scmp.eq.s32.totalorder %s15, 0
      %p77 = por %p75, %p76
      %p78 = scmp.ne.s32.totalorder %s70, %s72
      %p79 = scmp.eq.s32.totalorder %s20, 3
      %p80 = por %p78, %p79
      %p81 = scmp.ne.s32.totalorder %s72, %s73
      %p82 = scmp.eq.s32.totalorder %s20, 0
      %p83 = por %p81, %p82
      %p84 = scmp.ne.s32.totalorder %s72, %s73
      %p85 = scmp.eq.s32.totalorder %s21, 3
      %p86 = por %p84, %p85
      %p88 = scmp.ne.s32.totalorder %s73, %s87
      %p89 = scmp.eq.s32.totalorder %s21, 0
      %p90 = por %p88, %p89
      %s91 = ssub.s32 %s15, %s22
      %p92 = scmp.eq.s32.totalorder %s91, 0
      %s94 = sadd.s32 %s93, 1
      %s95 = scalar_select %p92, %s93, %s94
      %p98 = pneg %p92
      %p99 = scmp.eq.s32.totalorder %s15, 3
      %p100 = por %p98, %p99
      %p101 = scmp.ne.s32.totalorder %s93, %s96
      %p102 = scmp.eq.s32.totalorder %s15, 0
      %p103 = por %p101, %p102
      %p104 = scmp.ne.s32.totalorder %s93, %s96
      %p105 = scmp.eq.s32.totalorder %s20, 3
      %p106 = por %p104, %p105
      %p107 = scmp.ne.s32.totalorder %s96, %s97
      %p108 = scmp.eq.s32.totalorder %s20, 0
      %p109 = por %p107, %p108
      %p110 = scmp.ne.s32.totalorder %s96, %s97
      %p111 = scmp.eq.s32.totalorder %s21, 3
      %p112 = por %p110, %p111
      %p114 = scmp.ne.s32.totalorder %s97, %s113
      %p115 = scmp.eq.s32.totalorder %s21, 0
      %p116 = por %p114, %p115
      %p117 = scmp.le.s32.totalorder 1, %s15
      %p118 = scmp.lt.s32.totalorder %s15, 5
      %p119 = pnand %p117, %p118
      %p120 = pneg %p119
      // Predicated region
      $region9: #{_lambda_.1} parent=5 // pred_check
        _
      $region10: #{_lambda_.1} parent=5 // pred_check_branch
        %122 = sbr.rel (%p119) target = $region12
      $region11: #{_lambda_.1} parent=5 // pred_region
        %s123 = ssub.s32 %s15, 1
        // Predicated region
        $region13: #{_lambda_.1} parent=11 // pred_check
          %p124 = pneg %p62
        $region14: #{_lambda_.1} parent=11 // pred_check_branch
          %126 = sbr.rel (%p124) target = $region16
        $region15: #{_lambda_.1} parent=11 // pred_region
          _
        $region16: #{_lambda_.1} parent=11 // pred_fallthru
          _
        // Predicated region
        $region17: #{_lambda_.1} parent=11 // pred_check
          %p127 = pneg %p83
        $region18: #{_lambda_.1} parent=11 // pred_check_branch
          %129 = sbr.rel (%p127) target = $region20
        $region19: #{_lambda_.1} parent=11 // pred_region
          _
        $region20: #{_lambda_.1} parent=11 // pred_fallthru
          _
      $region12: #{_lambda_.1} parent=5 // pred_fallthru
        _
      %p130 = scmp.lt.s32.totalorder %s15, 4
      // Predicated region
      $region21: #{_lambda_.1} parent=5 // pred_check
        %p131 = pneg %p130
      $region22: #{_lambda_.1} parent=5 // pred_check_branch
        %133 = sbr.rel (%p131) target = $region24
      $region23: #{_lambda_.1} parent=5 // pred_region
        // Predicated region
        $region25: #{_lambda_.1} parent=23 // pred_check
          %p134 = pneg %p35
        $region26: #{_lambda_.1} parent=23 // pred_check_branch
          %136 = sbr.rel (%p134) target = $region28
        $region27: #{_lambda_.1} parent=23 // pred_region
          %s137 = sand.u32 %s25, 1
          %s138 = scalar_lea.sflag [#allocation5], %s137
          %s139 = sand.u32 %s25, 1
          %s140 = smul.addr %s139, 512
          %s141 = scalar_lea.vmem [#allocation4], %s140
          %s142 = smul.u32 2, %s15
          %s144 = ssub.s32 8192, 8192
          %145 = vsyncadd %s138, %s144
          %s146 = smul.addr %s142, 32
          %s147 = smul.addr %s146, 128
          %s148 = scalar_lea.hbm %s0, %s147
          %s149 = sshll.u32 %s141, 4
          %s150 = int_to_ptr.vmem [resolvable:$true] %s149
          %155 = dma.hbm_to_vmem [thread:$0]  %s148, 8192, %s150, %s138, 128, 128, 8
        $region28: #{_lambda_.1} parent=23 // pred_fallthru
          _
      $region24: #{_lambda_.1} parent=5 // pred_fallthru
        _
      %p156 = scmp.le.s32.totalorder 1, %s15
      %p157 = scmp.lt.s32.totalorder %s15, 5
      %p158 = pnand %p156, %p157
      %p159 = pneg %p158
      // Predicated region
      $region29: #{_lambda_.1} parent=5 // pred_check
        _
      $region30: #{_lambda_.1} parent=5 // pred_check_branch
        %161 = sbr.rel (%p158) target = $region32
      $region31: #{_lambda_.1} parent=5 // pred_region
        %s162 = ssub.s32 %s15, 1
        %s163 = sand.u32 %s28, 1
        %s164 = scalar_lea.sflag [#allocation5], %s163
        %s165 = sand.u32 %s28, 1
        %s166 = smul.addr %s165, 512
        %s167 = scalar_lea.vmem [#allocation4], %s166
        // Predicated region
        $region33: #{_lambda_.1} parent=31 // pred_check
          %p168 = pneg %p41
        $region34: #{_lambda_.1} parent=31 // pred_check_branch
          %170 = sbr.rel (%p168) target = $region36
        $region35: #{_lambda_.1} parent=31 // pred_region
          %171 = dma.done %s164, 8192
        $region36: #{_lambda_.1} parent=31 // pred_fallthru
          _
        %s172 = sand.u32 %s28, 1
        %s173 = scalar_lea.sflag [#allocation5], %s172
        %s174 = sand.u32 %s28, 1
        %s175 = smul.addr %s174, 512
        %s176 = scalar_lea.vmem [#allocation4], %s175
        %p177 = pneg %p41
        %p178 = pneg %p38
        %p179 = pneg %p62
        %p180 = pneg %p59
        %p181 = pneg %p83
        %p182 = pneg %p80
        %p183 = pneg %p109
        %p184 = pneg %p106
        %s185 = sand.u32 %s96, 1
        %s186 = scalar_lea.sflag [#allocation6], %s185
        %s187 = sand.u32 %s96, 1
        %s188 = smul.addr %s187, 512
        %s189 = scalar_lea.vmem [#allocation7], %s188
        %s190 = smul.u32 2, %s20
        %s191 = smul.u32 2, %s20
        %192 = vst [vmem:[#allocation2] sm:$0x1] 0.0
        %193 = vst [vmem:[#allocation2 + $0x10] sm:$0x1] 0.0
        %194 = vst [vmem:[#allocation2 + $0x20] sm:$0x1] 0.0
        %195 = vst [vmem:[#allocation2 + $0x30] sm:$0x1] 0.0
        %196 = vst [vmem:[#allocation2 + $0x40] sm:$0x1] 0.0
        %197 = vst [vmem:[#allocation2 + $0x50] sm:$0x1] 0.0
        %198 = vst [vmem:[#allocation2 + $0x60] sm:$0x1] 0.0
        %199 = vst [vmem:[#allocation2 + $0x70] sm:$0x1] 0.0
        %200 = vst [vmem:[#allocation2 + $0x80] sm:$0x1] 0.0
        %201 = vst [vmem:[#allocation2 + $0x90] sm:$0x1] 0.0
        %202 = vst [vmem:[#allocation2 + $0xa0] sm:$0x1] 0.0
        %203 = vst [vmem:[#allocation2 + $0xb0] sm:$0x1] 0.0
        %204 = vst [vmem:[#allocation2 + $0xc0] sm:$0x1] 0.0
        %205 = vst [vmem:[#allocation2 + $0xd0] sm:$0x1] 0.0
        %206 = vst [vmem:[#allocation2 + $0xe0] sm:$0x1] 0.0
        %207 = vst [vmem:[#allocation2 + $0xf0] sm:$0x1] 0.0
        %208 = vst [vmem:[#allocation2 + $0x100] sm:$0x1] 0.0
        %209 = vst [vmem:[#allocation2 + $0x110] sm:$0x1] 0.0
        %210 = vst [vmem:[#allocation2 + $0x120] sm:$0x1] 0.0
        %211 = vst [vmem:[#allocation2 + $0x130] sm:$0x1] 0.0
        %212 = vst [vmem:[#allocation2 + $0x140] sm:$0x1] 0.0
        %213 = vst [vmem:[#allocation2 + $0x150] sm:$0x1] 0.0
        %214 = vst [vmem:[#allocation2 + $0x160] sm:$0x1] 0.0
        %215 = vst [vmem:[#allocation2 + $0x170] sm:$0x1] 0.0
        %216 = vst [vmem:[#allocation2 + $0x180] sm:$0x1] 0.0
        %217 = vst [vmem:[#allocation2 + $0x190] sm:$0x1] 0.0
        %218 = vst [vmem:[#allocation2 + $0x1a0] sm:$0x1] 0.0
        %219 = vst [vmem:[#allocation2 + $0x1b0] sm:$0x1] 0.0
        %220 = vst [vmem:[#allocation2 + $0x1c0] sm:$0x1] 0.0
        %221 = vst [vmem:[#allocation2 + $0x1d0] sm:$0x1] 0.0
        %222 = vst [vmem:[#allocation2 + $0x1e0] sm:$0x1] 0.0
        %223 = vst [vmem:[#allocation2 + $0x1f0] sm:$0x1] 0.0
        %v224 = vld [vmem:[%s167] sm:$0xff]
        %v225 = vld [vmem:[%s167 + $0x8] sm:$0x7f]
        %v226 = vld [vmem:[%s167 + $0x10] sm:$0xff]
        %v227 = vld [vmem:[%s167 + $0x18] sm:$0x7f]
        %v228 = vld [vmem:[%s167 + $0x20] sm:$0xff]
        %v229 = vld [vmem:[%s167 + $0x28] sm:$0x7f]
        %v230 = vld [vmem:[%s167 + $0x30] sm:$0xff]
        %v231 = vld [vmem:[%s167 + $0x38] sm:$0x7f]
        %v232 = vld [vmem:[%s167 + $0x40] sm:$0xff]
        %v233 = vld [vmem:[%s167 + $0x48] sm:$0x7f]
        %v234 = vld [vmem:[%s167 + $0x50] sm:$0xff]
        %v235 = vld [vmem:[%s167 + $0x58] sm:$0x7f]
        %v236 = vld [vmem:[%s167 + $0x60] sm:$0xff]
        %v237 = vld [vmem:[%s167 + $0x68] sm:$0x7f]
        %v238 = vld [vmem:[%s167 + $0x70] sm:$0xff]
        %v239 = vld [vmem:[%s167 + $0x78] sm:$0x7f]
        %v240 = vld [vmem:[%s167 + $0x80] sm:$0xff]
        %v241 = vld [vmem:[%s167 + $0x88] sm:$0x7f]
        %v242 = vld [vmem:[%s167 + $0x90] sm:$0xff]
        %v243 = vld [vmem:[%s167 + $0x98] sm:$0x7f]
        %v244 = vld [vmem:[%s167 + $0xa0] sm:$0xff]
        %v245 = vld [vmem:[%s167 + $0xa8] sm:$0x7f]
        %v246 = vld [vmem:[%s167 + $0xb0] sm:$0xff]
        %v247 = vld [vmem:[%s167 + $0xb8] sm:$0x7f]
        %v248 = vld [vmem:[%s167 + $0xc0] sm:$0xff]
        %v249 = vld [vmem:[%s167 + $0xc8] sm:$0x7f]
        %v250 = vld [vmem:[%s167 + $0xd0] sm:$0xff]
        %v251 = vld [vmem:[%s167 + $0xd8] sm:$0x7f]
        %v252 = vld [vmem:[%s167 + $0xe0] sm:$0xff]
        %v253 = vld [vmem:[%s167 + $0xe8] sm:$0x7f]
        %v254 = vld [vmem:[%s167 + $0xf0] sm:$0xff]
        %v255 = vld [vmem:[%s167 + $0xf8] sm:$0x7f]
        %v256 = vld [vmem:[%s167 + $0x100] sm:$0xff]
        %v257 = vld [vmem:[%s167 + $0x108] sm:$0x7f]
        %v258 = vld [vmem:[%s167 + $0x110] sm:$0xff]
        %v259 = vld [vmem:[%s167 + $0x118] sm:$0x7f]
        %v260 = vld [vmem:[%s167 + $0x120] sm:$0xff]
        %v261 = vld [vmem:[%s167 + $0x128] sm:$0x7f]
        %v262 = vld [vmem:[%s167 + $0x130] sm:$0xff]
        %v263 = vld [vmem:[%s167 + $0x138] sm:$0x7f]
        %v264 = vld [vmem:[%s167 + $0x140] sm:$0xff]
        %v265 = vld [vmem:[%s167 + $0x148] sm:$0x7f]
        %v266 = vld [vmem:[%s167 + $0x150] sm:$0xff]
        %v267 = vld [vmem:[%s167 + $0x158] sm:$0x7f]
        %v268 = vld [vmem:[%s167 + $0x160] sm:$0xff]
        %v269 = vld [vmem:[%s167 + $0x168] sm:$0x7f]
        %v270 = vld [vmem:[%s167 + $0x170] sm:$0xff]
        %v271 = vld [vmem:[%s167 + $0x178] sm:$0x7f]
        %v272 = vld [vmem:[%s167 + $0x180] sm:$0xff]
        %v273 = vld [vmem:[%s167 + $0x188] sm:$0x7f]
        %v274 = vld [vmem:[%s167 + $0x190] sm:$0xff]
        %v275 = vld [vmem:[%s167 + $0x198] sm:$0x7f]
        %v276 = vld [vmem:[%s167 + $0x1a0] sm:$0xff]
        %v277 = vld [vmem:[%s167 + $0x1a8] sm:$0x7f]
        %v278 = vld [vmem:[%s167 + $0x1b0] sm:$0xff]
        %v279 = vld [vmem:[%s167 + $0x1b8] sm:$0x7f]
        %v280 = vld [vmem:[%s167 + $0x1c0] sm:$0xff]
        %v281 = vld [vmem:[%s167 + $0x1c8] sm:$0x7f]
        %v282 = vld [vmem:[%s167 + $0x1d0] sm:$0xff]
        %v283 = vld [vmem:[%s167 + $0x1d8] sm:$0x7f]
        %v284 = vld [vmem:[%s167 + $0x1e0] sm:$0xff]
        %v285 = vld [vmem:[%s167 + $0x1e8] sm:$0x7f]
        %v286 = vld [vmem:[%s167 + $0x1f0] sm:$0xff]
        %v287 = vld [vmem:[%s167 + $0x1f8] sm:$0x7f]
        %288 = vst [vmem:[#allocation2 + $0x1] sm:$0xff] %v224
        %289 = vst [vmem:[#allocation2 + $0x9] sm:$0x7f] %v225
        %290 = vst [vmem:[#allocation2 + $0x11] sm:$0xff] %v226
        %291 = vst [vmem:[#allocation2 + $0x19] sm:$0x7f] %v227
        %292 = vst [vmem:[#allocation2 + $0x21] sm:$0xff] %v228
        %293 = vst [vmem:[#allocation2 + $0x29] sm:$0x7f] %v229
        %294 = vst [vmem:[#allocation2 + $0x31] sm:$0xff] %v230
        %295 = vst [vmem:[#allocation2 + $0x39] sm:$0x7f] %v231
        %296 = vst [vmem:[#allocation2 + $0x41] sm:$0xff] %v232
        %297 = vst [vmem:[#allocation2 + $0x49] sm:$0x7f] %v233
        %298 = vst [vmem:[#allocation2 + $0x51] sm:$0xff] %v234
        %299 = vst [vmem:[#allocation2 + $0x59] sm:$0x7f] %v235
        %300 = vst [vmem:[#allocation2 + $0x61] sm:$0xff] %v236
        %301 = vst [vmem:[#allocation2 + $0x69] sm:$0x7f] %v237
        %302 = vst [vmem:[#allocation2 + $0x71] sm:$0xff] %v238
        %303 = vst [vmem:[#allocation2 + $0x79] sm:$0x7f] %v239
        %304 = vst [vmem:[#allocation2 + $0x81] sm:$0xff] %v240
        %305 = vst [vmem:[#allocation2 + $0x89] sm:$0x7f] %v241
        %306 = vst [vmem:[#allocation2 + $0x91] sm:$0xff] %v242
        %307 = vst [vmem:[#allocation2 + $0x99] sm:$0x7f] %v243
        %308 = vst [vmem:[#allocation2 + $0xa1] sm:$0xff] %v244
        %309 = vst [vmem:[#allocation2 + $0xa9] sm:$0x7f] %v245
        %310 = vst [vmem:[#allocation2 + $0xb1] sm:$0xff] %v246
        %311 = vst [vmem:[#allocation2 + $0xb9] sm:$0x7f] %v247
        %312 = vst [vmem:[#allocation2 + $0xc1] sm:$0xff] %v248
        %313 = vst [vmem:[#allocation2 + $0xc9] sm:$0x7f] %v249
        %314 = vst [vmem:[#allocation2 + $0xd1] sm:$0xff] %v250
        %315 = vst [vmem:[#allocation2 + $0xd9] sm:$0x7f] %v251
        %316 = vst [vmem:[#allocation2 + $0xe1] sm:$0xff] %v252
        %317 = vst [vmem:[#allocation2 + $0xe9] sm:$0x7f] %v253
        %318 = vst [vmem:[#allocation2 + $0xf1] sm:$0xff] %v254
        %319 = vst [vmem:[#allocation2 + $0xf9] sm:$0x7f] %v255
        %320 = vst [vmem:[#allocation2 + $0x101] sm:$0xff] %v256
        %321 = vst [vmem:[#allocation2 + $0x109] sm:$0x7f] %v257
        %322 = vst [vmem:[#allocation2 + $0x111] sm:$0xff] %v258
        %323 = vst [vmem:[#allocation2 + $0x119] sm:$0x7f] %v259
        %324 = vst [vmem:[#allocation2 + $0x121] sm:$0xff] %v260
        %325 = vst [vmem:[#allocation2 + $0x129] sm:$0x7f] %v261
        %326 = vst [vmem:[#allocation2 + $0x131] sm:$0xff] %v262
        %327 = vst [vmem:[#allocation2 + $0x139] sm:$0x7f] %v263
        %328 = vst [vmem:[#allocation2 + $0x141] sm:$0xff] %v264
        %329 = vst [vmem:[#allocation2 + $0x149] sm:$0x7f] %v265
        %330 = vst [vmem:[#allocation2 + $0x151] sm:$0xff] %v266
        %331 = vst [vmem:[#allocation2 + $0x159] sm:$0x7f] %v267
        %332 = vst [vmem:[#allocation2 + $0x161] sm:$0xff] %v268
        %333 = vst [vmem:[#allocation2 + $0x169] sm:$0x7f] %v269
        %334 = vst [vmem:[#allocation2 + $0x171] sm:$0xff] %v270
        %335 = vst [vmem:[#allocation2 + $0x179] sm:$0x7f] %v271
        %336 = vst [vmem:[#allocation2 + $0x181] sm:$0xff] %v272
        %337 = vst [vmem:[#allocation2 + $0x189] sm:$0x7f] %v273
        %338 = vst [vmem:[#allocation2 + $0x191] sm:$0xff] %v274
        %339 = vst [vmem:[#allocation2 + $0x199] sm:$0x7f] %v275
        %340 = vst [vmem:[#allocation2 + $0x1a1] sm:$0xff] %v276
        %341 = vst [vmem:[#allocation2 + $0x1a9] sm:$0x7f] %v277
        %342 = vst [vmem:[#allocation2 + $0x1b1] sm:$0xff] %v278
        %343 = vst [vmem:[#allocation2 + $0x1b9] sm:$0x7f] %v279
        %344 = vst [vmem:[#allocation2 + $0x1c1] sm:$0xff] %v280
        %345 = vst [vmem:[#allocation2 + $0x1c9] sm:$0x7f] %v281
        %346 = vst [vmem:[#allocation2 + $0x1d1] sm:$0xff] %v282
        %347 = vst [vmem:[#allocation2 + $0x1d9] sm:$0x7f] %v283
        %348 = vst [vmem:[#allocation2 + $0x1e1] sm:$0xff] %v284
        %349 = vst [vmem:[#allocation2 + $0x1e9] sm:$0x7f] %v285
        %350 = vst [vmem:[#allocation2 + $0x1f1] sm:$0xff] %v286
        %351 = vst [vmem:[#allocation2 + $0x1f9] sm:$0x7f] %v287
        %352 = vst [vmem:[#allocation3 + $0xf] sm:$0x1] 0.0
        %353 = vst [vmem:[#allocation3 + $0x1f] sm:$0x1] 0.0
        %354 = vst [vmem:[#allocation3 + $0x2f] sm:$0x1] 0.0
        %355 = vst [vmem:[#allocation3 + $0x3f] sm:$0x1] 0.0
        %356 = vst [vmem:[#allocation3 + $0x4f] sm:$0x1] 0.0
        %357 = vst [vmem:[#allocation3 + $0x5f] sm:$0x1] 0.0
        %358 = vst [vmem:[#allocation3 + $0x6f] sm:$0x1] 0.0
        %359 = vst [vmem:[#allocation3 + $0x7f] sm:$0x1] 0.0
        %360 = vst [vmem:[#allocation3 + $0x8f] sm:$0x1] 0.0
        %361 = vst [vmem:[#allocation3 + $0x9f] sm:$0x1] 0.0
        %362 = vst [vmem:[#allocation3 + $0xaf] sm:$0x1] 0.0
        %363 = vst [vmem:[#allocation3 + $0xbf] sm:$0x1] 0.0
        %364 = vst [vmem:[#allocation3 + $0xcf] sm:$0x1] 0.0
        %365 = vst [vmem:[#allocation3 + $0xdf] sm:$0x1] 0.0
        %366 = vst [vmem:[#allocation3 + $0xef] sm:$0x1] 0.0
        %367 = vst [vmem:[#allocation3 + $0xff] sm:$0x1] 0.0
        %368 = vst [vmem:[#allocation3 + $0x10f] sm:$0x1] 0.0
        %369 = vst [vmem:[#allocation3 + $0x11f] sm:$0x1] 0.0
        %370 = vst [vmem:[#allocation3 + $0x12f] sm:$0x1] 0.0
        %371 = vst [vmem:[#allocation3 + $0x13f] sm:$0x1] 0.0
        %372 = vst [vmem:[#allocation3 + $0x14f] sm:$0x1] 0.0
        %373 = vst [vmem:[#allocation3 + $0x15f] sm:$0x1] 0.0
        %374 = vst [vmem:[#allocation3 + $0x16f] sm:$0x1] 0.0
        %375 = vst [vmem:[#allocation3 + $0x17f] sm:$0x1] 0.0
        %376 = vst [vmem:[#allocation3 + $0x18f] sm:$0x1] 0.0
        %377 = vst [vmem:[#allocation3 + $0x19f] sm:$0x1] 0.0
        %378 = vst [vmem:[#allocation3 + $0x1af] sm:$0x1] 0.0
        %379 = vst [vmem:[#allocation3 + $0x1bf] sm:$0x1] 0.0
        %380 = vst [vmem:[#allocation3 + $0x1cf] sm:$0x1] 0.0
        %381 = vst [vmem:[#allocation3 + $0x1df] sm:$0x1] 0.0
        %382 = vst [vmem:[#allocation3 + $0x1ef] sm:$0x1] 0.0
        %383 = vst [vmem:[#allocation3 + $0x1ff] sm:$0x1] 0.0
        %v384 = vld [vmem:[%s167 + $0x1] sm:$0xff]
        %v385 = vld [vmem:[%s167 + $0x9] sm:$0x7f]
        %v386 = vld [vmem:[%s167 + $0x11] sm:$0xff]
        %v387 = vld [vmem:[%s167 + $0x19] sm:$0x7f]
        %v388 = vld [vmem:[%s167 + $0x21] sm:$0xff]
        %v389 = vld [vmem:[%s167 + $0x29] sm:$0x7f]
        %v390 = vld [vmem:[%s167 + $0x31] sm:$0xff]
        %v391 = vld [vmem:[%s167 + $0x39] sm:$0x7f]
        %v392 = vld [vmem:[%s167 + $0x41] sm:$0xff]
        %v393 = vld [vmem:[%s167 + $0x49] sm:$0x7f]
        %v394 = vld [vmem:[%s167 + $0x51] sm:$0xff]
        %v395 = vld [vmem:[%s167 + $0x59] sm:$0x7f]
        %v396 = vld [vmem:[%s167 + $0x61] sm:$0xff]
        %v397 = vld [vmem:[%s167 + $0x69] sm:$0x7f]
        %v398 = vld [vmem:[%s167 + $0x71] sm:$0xff]
        %v399 = vld [vmem:[%s167 + $0x79] sm:$0x7f]
        %v400 = vld [vmem:[%s167 + $0x81] sm:$0xff]
        %v401 = vld [vmem:[%s167 + $0x89] sm:$0x7f]
        %v402 = vld [vmem:[%s167 + $0x91] sm:$0xff]
        %v403 = vld [vmem:[%s167 + $0x99] sm:$0x7f]
        %v404 = vld [vmem:[%s167 + $0xa1] sm:$0xff]
        %v405 = vld [vmem:[%s167 + $0xa9] sm:$0x7f]
        %v406 = vld [vmem:[%s167 + $0xb1] sm:$0xff]
        %v407 = vld [vmem:[%s167 + $0xb9] sm:$0x7f]
        %v408 = vld [vmem:[%s167 + $0xc1] sm:$0xff]
        %v409 = vld [vmem:[%s167 + $0xc9] sm:$0x7f]
        %v410 = vld [vmem:[%s167 + $0xd1] sm:$0xff]
        %v411 = vld [vmem:[%s167 + $0xd9] sm:$0x7f]
        %v412 = vld [vmem:[%s167 + $0xe1] sm:$0xff]
        %v413 = vld [vmem:[%s167 + $0xe9] sm:$0x7f]
        %v414 = vld [vmem:[%s167 + $0xf1] sm:$0xff]
        %v415 = vld [vmem:[%s167 + $0xf9] sm:$0x7f]
        %v416 = vld [vmem:[%s167 + $0x101] sm:$0xff]
        %v417 = vld [vmem:[%s167 + $0x109] sm:$0x7f]
        %v418 = vld [vmem:[%s167 + $0x111] sm:$0xff]
        %v419 = vld [vmem:[%s167 + $0x119] sm:$0x7f]
        %v420 = vld [vmem:[%s167 + $0x121] sm:$0xff]
        %v421 = vld [vmem:[%s167 + $0x129] sm:$0x7f]
        %v422 = vld [vmem:[%s167 + $0x131] sm:$0xff]
        %v423 = vld [vmem:[%s167 + $0x139] sm:$0x7f]
        %v424 = vld [vmem:[%s167 + $0x141] sm:$0xff]
        %v425 = vld [vmem:[%s167 + $0x149] sm:$0x7f]
        %v426 = vld [vmem:[%s167 + $0x151] sm:$0xff]
        %v427 = vld [vmem:[%s167 + $0x159] sm:$0x7f]
        %v428 = vld [vmem:[%s167 + $0x161] sm:$0xff]
        %v429 = vld [vmem:[%s167 + $0x169] sm:$0x7f]
        %v430 = vld [vmem:[%s167 + $0x171] sm:$0xff]
        %v431 = vld [vmem:[%s167 + $0x179] sm:$0x7f]
        %v432 = vld [vmem:[%s167 + $0x181] sm:$0xff]
        %v433 = vld [vmem:[%s167 + $0x189] sm:$0x7f]
        %v434 = vld [vmem:[%s167 + $0x191] sm:$0xff]
        %v435 = vld [vmem:[%s167 + $0x199] sm:$0x7f]
        %v436 = vld [vmem:[%s167 + $0x1a1] sm:$0xff]
        %v437 = vld [vmem:[%s167 + $0x1a9] sm:$0x7f]
        %v438 = vld [vmem:[%s167 + $0x1b1] sm:$0xff]
        %v439 = vld [vmem:[%s167 + $0x1b9] sm:$0x7f]
        %v440 = vld [vmem:[%s167 + $0x1c1] sm:$0xff]
        %v441 = vld [vmem:[%s167 + $0x1c9] sm:$0x7f]
        %v442 = vld [vmem:[%s167 + $0x1d1] sm:$0xff]
        %v443 = vld [vmem:[%s167 + $0x1d9] sm:$0x7f]
        %v444 = vld [vmem:[%s167 + $0x1e1] sm:$0xff]
        %v445 = vld [vmem:[%s167 + $0x1e9] sm:$0x7f]
        %v446 = vld [vmem:[%s167 + $0x1f1] sm:$0xff]
        %v447 = vld [vmem:[%s167 + $0x1f9] sm:$0x7f]
        %448 = vst [vmem:[#allocation3] sm:$0xff] %v384
        %449 = vst [vmem:[#allocation3 + $0x8] sm:$0x7f] %v385
        %450 = vst [vmem:[#allocation3 + $0x10] sm:$0xff] %v386
        %451 = vst [vmem:[#allocation3 + $0x18] sm:$0x7f] %v387
        %452 = vst [vmem:[#allocation3 + $0x20] sm:$0xff] %v388
        %453 = vst [vmem:[#allocation3 + $0x28] sm:$0x7f] %v389
        %454 = vst [vmem:[#allocation3 + $0x30] sm:$0xff] %v390
        %455 = vst [vmem:[#allocation3 + $0x38] sm:$0x7f] %v391
        %456 = vst [vmem:[#allocation3 + $0x40] sm:$0xff] %v392
        %457 = vst [vmem:[#allocation3 + $0x48] sm:$0x7f] %v393
        %458 = vst [vmem:[#allocation3 + $0x50] sm:$0xff] %v394
        %459 = vst [vmem:[#allocation3 + $0x58] sm:$0x7f] %v395
        %460 = vst [vmem:[#allocation3 + $0x60] sm:$0xff] %v396
        %461 = vst [vmem:[#allocation3 + $0x68] sm:$0x7f] %v397
        %462 = vst [vmem:[#allocation3 + $0x70] sm:$0xff] %v398
        %463 = vst [vmem:[#allocation3 + $0x78] sm:$0x7f] %v399
        %464 = vst [vmem:[#allocation3 + $0x80] sm:$0xff] %v400
        %465 = vst [vmem:[#allocation3 + $0x88] sm:$0x7f] %v401
        %466 = vst [vmem:[#allocation3 + $0x90] sm:$0xff] %v402
        %467 = vst [vmem:[#allocation3 + $0x98] sm:$0x7f] %v403
        %468 = vst [vmem:[#allocation3 + $0xa0] sm:$0xff] %v404
        %469 = vst [vmem:[#allocation3 + $0xa8] sm:$0x7f] %v405
        %470 = vst [vmem:[#allocation3 + $0xb0] sm:$0xff] %v406
        %471 = vst [vmem:[#allocation3 + $0xb8] sm:$0x7f] %v407
        %472 = vst [vmem:[#allocation3 + $0xc0] sm:$0xff] %v408
        %473 = vst [vmem:[#allocation3 + $0xc8] sm:$0x7f] %v409
        %474 = vst [vmem:[#allocation3 + $0xd0] sm:$0xff] %v410
        %475 = vst [vmem:[#allocation3 + $0xd8] sm:$0x7f] %v411
        %476 = vst [vmem:[#allocation3 + $0xe0] sm:$0xff] %v412
        %477 = vst [vmem:[#allocation3 + $0xe8] sm:$0x7f] %v413
        %478 = vst [vmem:[#allocation3 + $0xf0] sm:$0xff] %v414
        %479 = vst [vmem:[#allocation3 + $0xf8] sm:$0x7f] %v415
        %480 = vst [vmem:[#allocation3 + $0x100] sm:$0xff] %v416
        %481 = vst [vmem:[#allocation3 + $0x108] sm:$0x7f] %v417
        %482 = vst [vmem:[#allocation3 + $0x110] sm:$0xff] %v418
        %483 = vst [vmem:[#allocation3 + $0x118] sm:$0x7f] %v419
        %484 = vst [vmem:[#allocation3 + $0x120] sm:$0xff] %v420
        %485 = vst [vmem:[#allocation3 + $0x128] sm:$0x7f] %v421
        %486 = vst [vmem:[#allocation3 + $0x130] sm:$0xff] %v422
        %487 = vst [vmem:[#allocation3 + $0x138] sm:$0x7f] %v423
        %488 = vst [vmem:[#allocation3 + $0x140] sm:$0xff] %v424
        %489 = vst [vmem:[#allocation3 + $0x148] sm:$0x7f] %v425
        %490 = vst [vmem:[#allocation3 + $0x150] sm:$0xff] %v426
        %491 = vst [vmem:[#allocation3 + $0x158] sm:$0x7f] %v427
        %492 = vst [vmem:[#allocation3 + $0x160] sm:$0xff] %v428
        %493 = vst [vmem:[#allocation3 + $0x168] sm:$0x7f] %v429
        %494 = vst [vmem:[#allocation3 + $0x170] sm:$0xff] %v430
        %495 = vst [vmem:[#allocation3 + $0x178] sm:$0x7f] %v431
        %496 = vst [vmem:[#allocation3 + $0x180] sm:$0xff] %v432
        %497 = vst [vmem:[#allocation3 + $0x188] sm:$0x7f] %v433
        %498 = vst [vmem:[#allocation3 + $0x190] sm:$0xff] %v434
        %499 = vst [vmem:[#allocation3 + $0x198] sm:$0x7f] %v435
        %500 = vst [vmem:[#allocation3 + $0x1a0] sm:$0xff] %v436
        %501 = vst [vmem:[#allocation3 + $0x1a8] sm:$0x7f] %v437
        %502 = vst [vmem:[#allocation3 + $0x1b0] sm:$0xff] %v438
        %503 = vst [vmem:[#allocation3 + $0x1b8] sm:$0x7f] %v439
        %504 = vst [vmem:[#allocation3 + $0x1c0] sm:$0xff] %v440
        %505 = vst [vmem:[#allocation3 + $0x1c8] sm:$0x7f] %v441
        %506 = vst [vmem:[#allocation3 + $0x1d0] sm:$0xff] %v442
        %507 = vst [vmem:[#allocation3 + $0x1d8] sm:$0x7f] %v443
        %508 = vst [vmem:[#allocation3 + $0x1e0] sm:$0xff] %v444
        %509 = vst [vmem:[#allocation3 + $0x1e8] sm:$0x7f] %v445
        %510 = vst [vmem:[#allocation3 + $0x1f0] sm:$0xff] %v446
        %511 = vst [vmem:[#allocation3 + $0x1f8] sm:$0x7f] %v447
        %v512 = vld [vmem:[%s2] sm:$0xff]
        %v513 = vld [vmem:[%s2 + $0x8] sm:$0xff]
        %s514 = scalar_lea.vmem %s167, 16 [#allocation4]
        %v515 = vld [vmem:[%s514] sm:$0xff]
        %v516 = vld [vmem:[%s514 + $0x8] sm:$0xff]
        %v517 = vld [vmem:[%s514 + $0x10] sm:$0xff]
        %v518 = vld [vmem:[%s514 + $0x18] sm:$0xff]
        %v519 = vld [vmem:[%s514 + $0x20] sm:$0xff]
        %v520 = vld [vmem:[%s514 + $0x28] sm:$0xff]
        %v521 = vld [vmem:[%s514 + $0x30] sm:$0xff]
        %v522 = vld [vmem:[%s514 + $0x38] sm:$0xff]
        %v523 = vld [vmem:[%s514 + $0x40] sm:$0xff]
        %v524 = vld [vmem:[%s514 + $0x48] sm:$0xff]
        %v525 = vld [vmem:[%s514 + $0x50] sm:$0xff]
        %v526 = vld [vmem:[%s514 + $0x58] sm:$0xff]
        %v527 = vld [vmem:[%s514 + $0x60] sm:$0xff]
        %v528 = vld [vmem:[%s514 + $0x68] sm:$0xff]
        %v529 = vld [vmem:[%s514 + $0x70] sm:$0xff]
        %v530 = vld [vmem:[%s514 + $0x78] sm:$0xff]
        %v531 = vld [vmem:[%s514 + $0x80] sm:$0xff]
        %v532 = vld [vmem:[%s514 + $0x88] sm:$0xff]
        %v533 = vld [vmem:[%s514 + $0x90] sm:$0xff]
        %v534 = vld [vmem:[%s514 + $0x98] sm:$0xff]
        %v535 = vld [vmem:[%s514 + $0xa0] sm:$0xff]
        %v536 = vld [vmem:[%s514 + $0xa8] sm:$0xff]
        %v537 = vld [vmem:[%s514 + $0xb0] sm:$0xff]
        %v538 = vld [vmem:[%s514 + $0xb8] sm:$0xff]
        %v539 = vld [vmem:[%s514 + $0xc0] sm:$0xff]
        %v540 = vld [vmem:[%s514 + $0xc8] sm:$0xff]
        %v541 = vld [vmem:[%s514 + $0xd0] sm:$0xff]
        %v542 = vld [vmem:[%s514 + $0xd8] sm:$0xff]
        %v543 = vld [vmem:[%s514 + $0x100] sm:$0xff]
        %v544 = vld [vmem:[%s514 + $0x108] sm:$0xff]
        %v545 = vld [vmem:[%s514 + $0x110] sm:$0xff]
        %v546 = vld [vmem:[%s514 + $0x118] sm:$0xff]
        %v547 = vld [vmem:[%s514 + $0x120] sm:$0xff]
        %v548 = vld [vmem:[%s514 + $0x128] sm:$0xff]
        %v549 = vld [vmem:[%s514 + $0x130] sm:$0xff]
        %v550 = vld [vmem:[%s514 + $0x138] sm:$0xff]
        %v551 = vld [vmem:[%s514 + $0x140] sm:$0xff]
        %v552 = vld [vmem:[%s514 + $0x148] sm:$0xff]
        %v553 = vld [vmem:[%s514 + $0x150] sm:$0xff]
        %v554 = vld [vmem:[%s514 + $0x158] sm:$0xff]
        %v555 = vld [vmem:[%s514 + $0x160] sm:$0xff]
        %v556 = vld [vmem:[%s514 + $0x168] sm:$0xff]
        %v557 = vld [vmem:[%s514 + $0x170] sm:$0xff]
        %v558 = vld [vmem:[%s514 + $0x178] sm:$0xff]
        %v559 = vld [vmem:[%s514 + $0x180] sm:$0xff]
        %v560 = vld [vmem:[%s514 + $0x188] sm:$0xff]
        %v561 = vld [vmem:[%s514 + $0x190] sm:$0xff]
        %v562 = vld [vmem:[%s514 + $0x198] sm:$0xff]
        %v563 = vld [vmem:[%s514 + $0x1a0] sm:$0xff]
        %v564 = vld [vmem:[%s514 + $0x1a8] sm:$0xff]
        %v565 = vld [vmem:[%s514 + $0x1b0] sm:$0xff]
        %v566 = vld [vmem:[%s514 + $0x1b8] sm:$0xff]
        %v567 = vld [vmem:[%s514 + $0x1c0] sm:$0xff]
        %v568 = vld [vmem:[%s514 + $0x1c8] sm:$0xff]
        %v569 = vld [vmem:[%s514 + $0x1d0] sm:$0xff]
        %v570 = vld [vmem:[%s514 + $0x1d8] sm:$0xff]
        %v571 = vadd.f32 %v515, %v512
        %v572 = vadd.f32 %v516, %v513
        %v573 = vadd.f32 %v517, %v512
        %v574 = vadd.f32 %v518, %v513
        %v575 = vadd.f32 %v519, %v512
        %v576 = vadd.f32 %v520, %v513
        %v577 = vadd.f32 %v521, %v512
        %v578 = vadd.f32 %v522, %v513
        %v579 = vadd.f32 %v523, %v512
        %v580 = vadd.f32 %v524, %v513
        %v581 = vadd.f32 %v525, %v512
        %v582 = vadd.f32 %v526, %v513
        %v583 = vadd.f32 %v527, %v512
        %v584 = vadd.f32 %v528, %v513
        %v585 = vadd.f32 %v529, %v512
        %v586 = vadd.f32 %v530, %v513
        %v587 = vadd.f32 %v531, %v512
        %v588 = vadd.f32 %v532, %v513
        %v589 = vadd.f32 %v533, %v512
        %v590 = vadd.f32 %v534, %v513
        %v591 = vadd.f32 %v535, %v512
        %v592 = vadd.f32 %v536, %v513
        %v593 = vadd.f32 %v537, %v512
        %v594 = vadd.f32 %v538, %v513
        %v595 = vadd.f32 %v539, %v512
        %v596 = vadd.f32 %v540, %v513
        %v597 = vadd.f32 %v541, %v512
        %v598 = vadd.f32 %v542, %v513
        %v599 = vadd.f32 %v543, %v512
        %v600 = vadd.f32 %v544, %v513
        %v601 = vadd.f32 %v545, %v512
        %v602 = vadd.f32 %v546, %v513
        %v603 = vadd.f32 %v547, %v512
        %v604 = vadd.f32 %v548, %v513
        %v605 = vadd.f32 %v549, %v512
        %v606 = vadd.f32 %v550, %v513
        %v607 = vadd.f32 %v551, %v512
        %v608 = vadd.f32 %v552, %v513
        %v609 = vadd.f32 %v553, %v512
        %v610 = vadd.f32 %v554, %v513
        %v611 = vadd.f32 %v555, %v512
        %v612 = vadd.f32 %v556, %v513
        %v613 = vadd.f32 %v557, %v512
        %v614 = vadd.f32 %v558, %v513
        %v615 = vadd.f32 %v559, %v512
        %v616 = vadd.f32 %v560, %v513
        %v617 = vadd.f32 %v561, %v512
        %v618 = vadd.f32 %v562, %v513
        %v619 = vadd.f32 %v563, %v512
        %v620 = vadd.f32 %v564, %v513
        %v621 = vadd.f32 %v565, %v512
        %v622 = vadd.f32 %v566, %v513
        %v623 = vadd.f32 %v567, %v512
        %v624 = vadd.f32 %v568, %v513
        %v625 = vadd.f32 %v569, %v512
        %v626 = vadd.f32 %v570, %v513
        %v627 = vld [vmem:[%s1] sm:$0xff]
        %v628 = vld [vmem:[%s1 + $0x8] sm:$0xff]
        %v629 = vld [vmem:[#allocation2] sm:$0xff]
        %v630 = vld [vmem:[#allocation2 + $0x8] sm:$0xff]
        %v631 = vld [vmem:[#allocation2 + $0x10] sm:$0xff]
        %v632 = vld [vmem:[#allocation2 + $0x18] sm:$0xff]
        %v633 = vld [vmem:[#allocation2 + $0x20] sm:$0xff]
        %v634 = vld [vmem:[#allocation2 + $0x28] sm:$0xff]
        %v635 = vld [vmem:[#allocation2 + $0x30] sm:$0xff]
        %v636 = vld [vmem:[#allocation2 + $0x38] sm:$0xff]
        %v637 = vld [vmem:[#allocation2 + $0x40] sm:$0xff]
        %v638 = vld [vmem:[#allocation2 + $0x48] sm:$0xff]
        %v639 = vld [vmem:[#allocation2 + $0x50] sm:$0xff]
        %v640 = vld [vmem:[#allocation2 + $0x58] sm:$0xff]
        %v641 = vld [vmem:[#allocation2 + $0x60] sm:$0xff]
        %v642 = vld [vmem:[#allocation2 + $0x68] sm:$0xff]
        %v643 = vld [vmem:[#allocation2 + $0x70] sm:$0xff]
        %v644 = vld [vmem:[#allocation2 + $0x78] sm:$0xff]
        %v645 = vld [vmem:[#allocation2 + $0x80] sm:$0xff]
        %v646 = vld [vmem:[#allocation2 + $0x88] sm:$0xff]
        %v647 = vld [vmem:[#allocation2 + $0x90] sm:$0xff]
        %v648 = vld [vmem:[#allocation2 + $0x98] sm:$0xff]
        %v649 = vld [vmem:[#allocation2 + $0xa0] sm:$0xff]
        %v650 = vld [vmem:[#allocation2 + $0xa8] sm:$0xff]
        %v651 = vld [vmem:[#allocation2 + $0xb0] sm:$0xff]
        %v652 = vld [vmem:[#allocation2 + $0xb8] sm:$0xff]
        %v653 = vld [vmem:[#allocation2 + $0xc0] sm:$0xff]
        %v654 = vld [vmem:[#allocation2 + $0xc8] sm:$0xff]
        %v655 = vld [vmem:[#allocation2 + $0xd0] sm:$0xff]
        %v656 = vld [vmem:[#allocation2 + $0xd8] sm:$0xff]
        %v657 = vld [vmem:[#allocation2 + $0x100] sm:$0xff]
        %v658 = vld [vmem:[#allocation2 + $0x108] sm:$0xff]
        %v659 = vld [vmem:[#allocation2 + $0x110] sm:$0xff]
        %v660 = vld [vmem:[#allocation2 + $0x118] sm:$0xff]
        %v661 = vld [vmem:[#allocation2 + $0x120] sm:$0xff]
        %v662 = vld [vmem:[#allocation2 + $0x128] sm:$0xff]
        %v663 = vld [vmem:[#allocation2 + $0x130] sm:$0xff]
        %v664 = vld [vmem:[#allocation2 + $0x138] sm:$0xff]
        %v665 = vld [vmem:[#allocation2 + $0x140] sm:$0xff]
        %v666 = vld [vmem:[#allocation2 + $0x148] sm:$0xff]
        %v667 = vld [vmem:[#allocation2 + $0x150] sm:$0xff]
        %v668 = vld [vmem:[#allocation2 + $0x158] sm:$0xff]
        %v669 = vld [vmem:[#allocation2 + $0x160] sm:$0xff]
        %v670 = vld [vmem:[#allocation2 + $0x168] sm:$0xff]
        %v671 = vld [vmem:[#allocation2 + $0x170] sm:$0xff]
        %v672 = vld [vmem:[#allocation2 + $0x178] sm:$0xff]
        %v673 = vld [vmem:[#allocation2 + $0x180] sm:$0xff]
        %v674 = vld [vmem:[#allocation2 + $0x188] sm:$0xff]
        %v675 = vld [vmem:[#allocation2 + $0x190] sm:$0xff]
        %v676 = vld [vmem:[#allocation2 + $0x198] sm:$0xff]
        %v677 = vld [vmem:[#allocation2 + $0x1a0] sm:$0xff]
        %v678 = vld [vmem:[#allocation2 + $0x1a8] sm:$0xff]
        %v679 = vld [vmem:[#allocation2 + $0x1b0] sm:$0xff]
        %v680 = vld [vmem:[#allocation2 + $0x1b8] sm:$0xff]
        %v681 = vld [vmem:[#allocation2 + $0x1c0] sm:$0xff]
        %v682 = vld [vmem:[#allocation2 + $0x1c8] sm:$0xff]
        %v683 = vld [vmem:[#allocation2 + $0x1d0] sm:$0xff]
        %v684 = vld [vmem:[#allocation2 + $0x1d8] sm:$0xff]
        %v685 = vmul.f32 %v627, %v629
        %v686 = vmul.f32 %v628, %v630
        %v687 = vmul.f32 %v627, %v631
        %v688 = vmul.f32 %v628, %v632
        %v689 = vmul.f32 %v627, %v633
        %v690 = vmul.f32 %v628, %v634
        %v691 = vmul.f32 %v627, %v635
        %v692 = vmul.f32 %v628, %v636
        %v693 = vmul.f32 %v627, %v637
        %v694 = vmul.f32 %v628, %v638
        %v695 = vmul.f32 %v627, %v639
        %v696 = vmul.f32 %v628, %v640
        %v697 = vmul.f32 %v627, %v641
        %v698 = vmul.f32 %v628, %v642
        %v699 = vmul.f32 %v627, %v643
        %v700 = vmul.f32 %v628, %v644
        %v701 = vmul.f32 %v627, %v645
        %v702 = vmul.f32 %v628, %v646
        %v703 = vmul.f32 %v627, %v647
        %v704 = vmul.f32 %v628, %v648
        %v705 = vmul.f32 %v627, %v649
        %v706 = vmul.f32 %v628, %v650
        %v707 = vmul.f32 %v627, %v651
        %v708 = vmul.f32 %v628, %v652
        %v709 = vmul.f32 %v627, %v653
        %v710 = vmul.f32 %v628, %v654
        %v711 = vmul.f32 %v627, %v655
        %v712 = vmul.f32 %v628, %v656
        %v713 = vmul.f32 %v627, %v657
        %v714 = vmul.f32 %v628, %v658
        %v715 = vmul.f32 %v627, %v659
        %v716 = vmul.f32 %v628, %v660
        %v717 = vmul.f32 %v627, %v661
        %v718 = vmul.f32 %v628, %v662
        %v719 = vmul.f32 %v627, %v663
        %v720 = vmul.f32 %v628, %v664
        %v721 = vmul.f32 %v627, %v665
        %v722 = vmul.f32 %v628, %v666
        %v723 = vmul.f32 %v627, %v667
        %v724 = vmul.f32 %v628, %v668
        %v725 = vmul.f32 %v627, %v669
        %v726 = vmul.f32 %v628, %v670
        %v727 = vmul.f32 %v627, %v671
        %v728 = vmul.f32 %v628, %v672
        %v729 = vmul.f32 %v627, %v673
        %v730 = vmul.f32 %v628, %v674
        %v731 = vmul.f32 %v627, %v675
        %v732 = vmul.f32 %v628, %v676
        %v733 = vmul.f32 %v627, %v677
        %v734 = vmul.f32 %v628, %v678
        %v735 = vmul.f32 %v627, %v679
        %v736 = vmul.f32 %v628, %v680
        %v737 = vmul.f32 %v627, %v681
        %v738 = vmul.f32 %v628, %v682
        %v739 = vmul.f32 %v627, %v683
        %v740 = vmul.f32 %v628, %v684
        %s741 = scalar_lea.vmem %s1, 16
        %v742 = vld [vmem:[%s741] sm:$0xff]
        %v743 = vld [vmem:[%s741 + $0x8] sm:$0xff]
        %v744 = vld [vmem:[%s167] sm:$0xff]
        %v745 = vld [vmem:[%s167 + $0x8] sm:$0xff]
        %v746 = vld [vmem:[%s167 + $0x10] sm:$0xff]
        %v747 = vld [vmem:[%s167 + $0x18] sm:$0xff]
        %v748 = vld [vmem:[%s167 + $0x20] sm:$0xff]
        %v749 = vld [vmem:[%s167 + $0x28] sm:$0xff]
        %v750 = vld [vmem:[%s167 + $0x30] sm:$0xff]
        %v751 = vld [vmem:[%s167 + $0x38] sm:$0xff]
        %v752 = vld [vmem:[%s167 + $0x40] sm:$0xff]
        %v753 = vld [vmem:[%s167 + $0x48] sm:$0xff]
        %v754 = vld [vmem:[%s167 + $0x50] sm:$0xff]
        %v755 = vld [vmem:[%s167 + $0x58] sm:$0xff]
        %v756 = vld [vmem:[%s167 + $0x60] sm:$0xff]
        %v757 = vld [vmem:[%s167 + $0x68] sm:$0xff]
        %v758 = vld [vmem:[%s167 + $0x70] sm:$0xff]
        %v759 = vld [vmem:[%s167 + $0x78] sm:$0xff]
        %v760 = vld [vmem:[%s167 + $0x80] sm:$0xff]
        %v761 = vld [vmem:[%s167 + $0x88] sm:$0xff]
        %v762 = vld [vmem:[%s167 + $0x90] sm:$0xff]
        %v763 = vld [vmem:[%s167 + $0x98] sm:$0xff]
        %v764 = vld [vmem:[%s167 + $0xa0] sm:$0xff]
        %v765 = vld [vmem:[%s167 + $0xa8] sm:$0xff]
        %v766 = vld [vmem:[%s167 + $0xb0] sm:$0xff]
        %v767 = vld [vmem:[%s167 + $0xb8] sm:$0xff]
        %v768 = vld [vmem:[%s167 + $0xc0] sm:$0xff]
        %v769 = vld [vmem:[%s167 + $0xc8] sm:$0xff]
        %v770 = vld [vmem:[%s167 + $0xd0] sm:$0xff]
        %v771 = vld [vmem:[%s167 + $0xd8] sm:$0xff]
        %v772 = vld [vmem:[%s167 + $0x100] sm:$0xff]
        %v773 = vld [vmem:[%s167 + $0x108] sm:$0xff]
        %v774 = vld [vmem:[%s167 + $0x110] sm:$0xff]
        %v775 = vld [vmem:[%s167 + $0x118] sm:$0xff]
        %v776 = vld [vmem:[%s167 + $0x120] sm:$0xff]
        %v777 = vld [vmem:[%s167 + $0x128] sm:$0xff]
        %v778 = vld [vmem:[%s167 + $0x130] sm:$0xff]
        %v779 = vld [vmem:[%s167 + $0x138] sm:$0xff]
        %v780 = vld [vmem:[%s167 + $0x140] sm:$0xff]
        %v781 = vld [vmem:[%s167 + $0x148] sm:$0xff]
        %v782 = vld [vmem:[%s167 + $0x150] sm:$0xff]
        %v783 = vld [vmem:[%s167 + $0x158] sm:$0xff]
        %v784 = vld [vmem:[%s167 + $0x160] sm:$0xff]
        %v785 = vld [vmem:[%s167 + $0x168] sm:$0xff]
        %v786 = vld [vmem:[%s167 + $0x170] sm:$0xff]
        %v787 = vld [vmem:[%s167 + $0x178] sm:$0xff]
        %v788 = vld [vmem:[%s167 + $0x180] sm:$0xff]
        %v789 = vld [vmem:[%s167 + $0x188] sm:$0xff]
        %v790 = vld [vmem:[%s167 + $0x190] sm:$0xff]
        %v791 = vld [vmem:[%s167 + $0x198] sm:$0xff]
        %v792 = vld [vmem:[%s167 + $0x1a0] sm:$0xff]
        %v793 = vld [vmem:[%s167 + $0x1a8] sm:$0xff]
        %v794 = vld [vmem:[%s167 + $0x1b0] sm:$0xff]
        %v795 = vld [vmem:[%s167 + $0x1b8] sm:$0xff]
        %v796 = vld [vmem:[%s167 + $0x1c0] sm:$0xff]
        %v797 = vld [vmem:[%s167 + $0x1c8] sm:$0xff]
        %v798 = vld [vmem:[%s167 + $0x1d0] sm:$0xff]
        %v799 = vld [vmem:[%s167 + $0x1d8] sm:$0xff]
        %v800 = vmul.f32 %v742, %v744
        %v801 = vmul.f32 %v743, %v745
        %v802 = vmul.f32 %v742, %v746
        %v803 = vmul.f32 %v743, %v747
        %v804 = vmul.f32 %v742, %v748
        %v805 = vmul.f32 %v743, %v749
        %v806 = vmul.f32 %v742, %v750
        %v807 = vmul.f32 %v743, %v751
        %v808 = vmul.f32 %v742, %v752
        %v809 = vmul.f32 %v743, %v753
        %v810 = vmul.f32 %v742, %v754
        %v811 = vmul.f32 %v743, %v755
        %v812 = vmul.f32 %v742, %v756
        %v813 = vmul.f32 %v743, %v757
        %v814 = vmul.f32 %v742, %v758
        %v815 = vmul.f32 %v743, %v759
        %v816 = vmul.f32 %v742, %v760
        %v817 = vmul.f32 %v743, %v761
        %v818 = vmul.f32 %v742, %v762
        %v819 = vmul.f32 %v743, %v763
        %v820 = vmul.f32 %v742, %v764
        %v821 = vmul.f32 %v743, %v765
        %v822 = vmul.f32 %v742, %v766
        %v823 = vmul.f32 %v743, %v767
        %v824 = vmul.f32 %v742, %v768
        %v825 = vmul.f32 %v743, %v769
        %v826 = vmul.f32 %v742, %v770
        %v827 = vmul.f32 %v743, %v771
        %v828 = vmul.f32 %v742, %v772
        %v829 = vmul.f32 %v743, %v773
        %v830 = vmul.f32 %v742, %v774
        %v831 = vmul.f32 %v743, %v775
        %v832 = vmul.f32 %v742, %v776
        %v833 = vmul.f32 %v743, %v777
        %v834 = vmul.f32 %v742, %v778
        %v835 = vmul.f32 %v743, %v779
        %v836 = vmul.f32 %v742, %v780
        %v837 = vmul.f32 %v743, %v781
        %v838 = vmul.f32 %v742, %v782
        %v839 = vmul.f32 %v743, %v783
        %v840 = vmul.f32 %v742, %v784
        %v841 = vmul.f32 %v743, %v785
        %v842 = vmul.f32 %v742, %v786
        %v843 = vmul.f32 %v743, %v787
        %v844 = vmul.f32 %v742, %v788
        %v845 = vmul.f32 %v743, %v789
        %v846 = vmul.f32 %v742, %v790
        %v847 = vmul.f32 %v743, %v791
        %v848 = vmul.f32 %v742, %v792
        %v849 = vmul.f32 %v743, %v793
        %v850 = vmul.f32 %v742, %v794
        %v851 = vmul.f32 %v743, %v795
        %v852 = vmul.f32 %v742, %v796
        %v853 = vmul.f32 %v743, %v797
        %v854 = vmul.f32 %v742, %v798
        %v855 = vmul.f32 %v743, %v799
        %v856 = vadd.f32 %v685, %v800
        %v857 = vadd.f32 %v686, %v801
        %v858 = vadd.f32 %v687, %v802
        %v859 = vadd.f32 %v688, %v803
        %v860 = vadd.f32 %v689, %v804
        %v861 = vadd.f32 %v690, %v805
        %v862 = vadd.f32 %v691, %v806
        %v863 = vadd.f32 %v692, %v807
        %v864 = vadd.f32 %v693, %v808
        %v865 = vadd.f32 %v694, %v809
        %v866 = vadd.f32 %v695, %v810
        %v867 = vadd.f32 %v696, %v811
        %v868 = vadd.f32 %v697, %v812
        %v869 = vadd.f32 %v698, %v813
        %v870 = vadd.f32 %v699, %v814
        %v871 = vadd.f32 %v700, %v815
        %v872 = vadd.f32 %v701, %v816
        %v873 = vadd.f32 %v702, %v817
        %v874 = vadd.f32 %v703, %v818
        %v875 = vadd.f32 %v704, %v819
        %v876 = vadd.f32 %v705, %v820
        %v877 = vadd.f32 %v706, %v821
        %v878 = vadd.f32 %v707, %v822
        %v879 = vadd.f32 %v708, %v823
        %v880 = vadd.f32 %v709, %v824
        %v881 = vadd.f32 %v710, %v825
        %v882 = vadd.f32 %v711, %v826
        %v883 = vadd.f32 %v712, %v827
        %v884 = vadd.f32 %v713, %v828
        %v885 = vadd.f32 %v714, %v829
        %v886 = vadd.f32 %v715, %v830
        %v887 = vadd.f32 %v716, %v831
        %v888 = vadd.f32 %v717, %v832
        %v889 = vadd.f32 %v718, %v833
        %v890 = vadd.f32 %v719, %v834
        %v891 = vadd.f32 %v720, %v835
        %v892 = vadd.f32 %v721, %v836
        %v893 = vadd.f32 %v722, %v837
        %v894 = vadd.f32 %v723, %v838
        %v895 = vadd.f32 %v724, %v839
        %v896 = vadd.f32 %v725, %v840
        %v897 = vadd.f32 %v726, %v841
        %v898 = vadd.f32 %v727, %v842
        %v899 = vadd.f32 %v728, %v843
        %v900 = vadd.f32 %v729, %v844
        %v901 = vadd.f32 %v730, %v845
        %v902 = vadd.f32 %v731, %v846
        %v903 = vadd.f32 %v732, %v847
        %v904 = vadd.f32 %v733, %v848
        %v905 = vadd.f32 %v734, %v849
        %v906 = vadd.f32 %v735, %v850
        %v907 = vadd.f32 %v736, %v851
        %v908 = vadd.f32 %v737, %v852
        %v909 = vadd.f32 %v738, %v853
        %v910 = vadd.f32 %v739, %v854
        %v911 = vadd.f32 %v740, %v855
        %s912 = scalar_lea.vmem %s1, 32
        %v913 = vld [vmem:[%s912] sm:$0xff]
        %v914 = vld [vmem:[%s912 + $0x8] sm:$0xff]
        %v915 = vld [vmem:[#allocation3] sm:$0xff]
        %v916 = vld [vmem:[#allocation3 + $0x8] sm:$0xff]
        %v917 = vld [vmem:[#allocation3 + $0x10] sm:$0xff]
        %v918 = vld [vmem:[#allocation3 + $0x18] sm:$0xff]
        %v919 = vld [vmem:[#allocation3 + $0x20] sm:$0xff]
        %v920 = vld [vmem:[#allocation3 + $0x28] sm:$0xff]
        %v921 = vld [vmem:[#allocation3 + $0x30] sm:$0xff]
        %v922 = vld [vmem:[#allocation3 + $0x38] sm:$0xff]
        %v923 = vld [vmem:[#allocation3 + $0x40] sm:$0xff]
        %v924 = vld [vmem:[#allocation3 + $0x48] sm:$0xff]
        %v925 = vld [vmem:[#allocation3 + $0x50] sm:$0xff]
        %v926 = vld [vmem:[#allocation3 + $0x58] sm:$0xff]
        %v927 = vld [vmem:[#allocation3 + $0x60] sm:$0xff]
        %v928 = vld [vmem:[#allocation3 + $0x68] sm:$0xff]
        %v929 = vld [vmem:[#allocation3 + $0x70] sm:$0xff]
        %v930 = vld [vmem:[#allocation3 + $0x78] sm:$0xff]
        %v931 = vld [vmem:[#allocation3 + $0x80] sm:$0xff]
        %v932 = vld [vmem:[#allocation3 + $0x88] sm:$0xff]
        %v933 = vld [vmem:[#allocation3 + $0x90] sm:$0xff]
        %v934 = vld [vmem:[#allocation3 + $0x98] sm:$0xff]
        %v935 = vld [vmem:[#allocation3 + $0xa0] sm:$0xff]
        %v936 = vld [vmem:[#allocation3 + $0xa8] sm:$0xff]
        %v937 = vld [vmem:[#allocation3 + $0xb0] sm:$0xff]
        %v938 = vld [vmem:[#allocation3 + $0xb8] sm:$0xff]
        %v939 = vld [vmem:[#allocation3 + $0xc0] sm:$0xff]
        %v940 = vld [vmem:[#allocation3 + $0xc8] sm:$0xff]
        %v941 = vld [vmem:[#allocation3 + $0xd0] sm:$0xff]
        %v942 = vld [vmem:[#allocation3 + $0xd8] sm:$0xff]
        %v943 = vld [vmem:[#allocation3 + $0x100] sm:$0xff]
        %v944 = vld [vmem:[#allocation3 + $0x108] sm:$0xff]
        %v945 = vld [vmem:[#allocation3 + $0x110] sm:$0xff]
        %v946 = vld [vmem:[#allocation3 + $0x118] sm:$0xff]
        %v947 = vld [vmem:[#allocation3 + $0x120] sm:$0xff]
        %v948 = vld [vmem:[#allocation3 + $0x128] sm:$0xff]
        %v949 = vld [vmem:[#allocation3 + $0x130] sm:$0xff]
        %v950 = vld [vmem:[#allocation3 + $0x138] sm:$0xff]
        %v951 = vld [vmem:[#allocation3 + $0x140] sm:$0xff]
        %v952 = vld [vmem:[#allocation3 + $0x148] sm:$0xff]
        %v953 = vld [vmem:[#allocation3 + $0x150] sm:$0xff]
        %v954 = vld [vmem:[#allocation3 + $0x158] sm:$0xff]
        %v955 = vld [vmem:[#allocation3 + $0x160] sm:$0xff]
        %v956 = vld [vmem:[#allocation3 + $0x168] sm:$0xff]
        %v957 = vld [vmem:[#allocation3 + $0x170] sm:$0xff]
        %v958 = vld [vmem:[#allocation3 + $0x178] sm:$0xff]
        %v959 = vld [vmem:[#allocation3 + $0x180] sm:$0xff]
        %v960 = vld [vmem:[#allocation3 + $0x188] sm:$0xff]
        %v961 = vld [vmem:[#allocation3 + $0x190] sm:$0xff]
        %v962 = vld [vmem:[#allocation3 + $0x198] sm:$0xff]
        %v963 = vld [vmem:[#allocation3 + $0x1a0] sm:$0xff]
        %v964 = vld [vmem:[#allocation3 + $0x1a8] sm:$0xff]
        %v965 = vld [vmem:[#allocation3 + $0x1b0] sm:$0xff]
        %v966 = vld [vmem:[#allocation3 + $0x1b8] sm:$0xff]
        %v967 = vld [vmem:[#allocation3 + $0x1c0] sm:$0xff]
        %v968 = vld [vmem:[#allocation3 + $0x1c8] sm:$0xff]
        %v969 = vld [vmem:[#allocation3 + $0x1d0] sm:$0xff]
        %v970 = vld [vmem:[#allocation3 + $0x1d8] sm:$0xff]
        %v971 = vmul.f32 %v913, %v915
        %v972 = vmul.f32 %v914, %v916
        %v973 = vmul.f32 %v913, %v917
        %v974 = vmul.f32 %v914, %v918
        %v975 = vmul.f32 %v913, %v919
        %v976 = vmul.f32 %v914, %v920
        %v977 = vmul.f32 %v913, %v921
        %v978 = vmul.f32 %v914, %v922
        %v979 = vmul.f32 %v913, %v923
        %v980 = vmul.f32 %v914, %v924
        %v981 = vmul.f32 %v913, %v925
        %v982 = vmul.f32 %v914, %v926
        %v983 = vmul.f32 %v913, %v927
        %v984 = vmul.f32 %v914, %v928
        %v985 = vmul.f32 %v913, %v929
        %v986 = vmul.f32 %v914, %v930
        %v987 = vmul.f32 %v913, %v931
        %v988 = vmul.f32 %v914, %v932
        %v989 = vmul.f32 %v913, %v933
        %v990 = vmul.f32 %v914, %v934
        %v991 = vmul.f32 %v913, %v935
        %v992 = vmul.f32 %v914, %v936
        %v993 = vmul.f32 %v913, %v937
        %v994 = vmul.f32 %v914, %v938
        %v995 = vmul.f32 %v913, %v939
        %v996 = vmul.f32 %v914, %v940
        %v997 = vmul.f32 %v913, %v941
        %v998 = vmul.f32 %v914, %v942
        %v999 = vmul.f32 %v913, %v943
        %v1000 = vmul.f32 %v914, %v944
        %v1001 = vmul.f32 %v913, %v945
        %v1002 = vmul.f32 %v914, %v946
        %v1003 = vmul.f32 %v913, %v947
        %v1004 = vmul.f32 %v914, %v948
        %v1005 = vmul.f32 %v913, %v949
        %v1006 = vmul.f32 %v914, %v950
        %v1007 = vmul.f32 %v913, %v951
        %v1008 = vmul.f32 %v914, %v952
        %v1009 = vmul.f32 %v913, %v953
        %v1010 = vmul.f32 %v914, %v954
        %v1011 = vmul.f32 %v913, %v955
        %v1012 = vmul.f32 %v914, %v956
        %v1013 = vmul.f32 %v913, %v957
        %v1014 = vmul.f32 %v914, %v958
        %v1015 = vmul.f32 %v913, %v959
        %v1016 = vmul.f32 %v914, %v960
        %v1017 = vmul.f32 %v913, %v961
        %v1018 = vmul.f32 %v914, %v962
        %v1019 = vmul.f32 %v913, %v963
        %v1020 = vmul.f32 %v914, %v964
        %v1021 = vmul.f32 %v913, %v965
        %v1022 = vmul.f32 %v914, %v966
        %v1023 = vmul.f32 %v913, %v967
        %v1024 = vmul.f32 %v914, %v968
        %v1025 = vmul.f32 %v913, %v969
        %v1026 = vmul.f32 %v914, %v970
        %v1027 = vadd.f32 %v856, %v971
        %v1028 = vadd.f32 %v857, %v972
        %v1029 = vadd.f32 %v858, %v973
        %v1030 = vadd.f32 %v859, %v974
        %v1031 = vadd.f32 %v860, %v975
        %v1032 = vadd.f32 %v861, %v976
        %v1033 = vadd.f32 %v862, %v977
        %v1034 = vadd.f32 %v863, %v978
        %v1035 = vadd.f32 %v864, %v979
        %v1036 = vadd.f32 %v865, %v980
        %v1037 = vadd.f32 %v866, %v981
        %v1038 = vadd.f32 %v867, %v982
        %v1039 = vadd.f32 %v868, %v983
        %v1040 = vadd.f32 %v869, %v984
        %v1041 = vadd.f32 %v870, %v985
        %v1042 = vadd.f32 %v871, %v986
        %v1043 = vadd.f32 %v872, %v987
        %v1044 = vadd.f32 %v873, %v988
        %v1045 = vadd.f32 %v874, %v989
        %v1046 = vadd.f32 %v875, %v990
        %v1047 = vadd.f32 %v876, %v991
        %v1048 = vadd.f32 %v877, %v992
        %v1049 = vadd.f32 %v878, %v993
        %v1050 = vadd.f32 %v879, %v994
        %v1051 = vadd.f32 %v880, %v995
        %v1052 = vadd.f32 %v881, %v996
        %v1053 = vadd.f32 %v882, %v997
        %v1054 = vadd.f32 %v883, %v998
        %v1055 = vadd.f32 %v884, %v999
        %v1056 = vadd.f32 %v885, %v1000
        %v1057 = vadd.f32 %v886, %v1001
        %v1058 = vadd.f32 %v887, %v1002
        %v1059 = vadd.f32 %v888, %v1003
        %v1060 = vadd.f32 %v889, %v1004
        %v1061 = vadd.f32 %v890, %v1005
        %v1062 = vadd.f32 %v891, %v1006
        %v1063 = vadd.f32 %v892, %v1007
        %v1064 = vadd.f32 %v893, %v1008
        %v1065 = vadd.f32 %v894, %v1009
        %v1066 = vadd.f32 %v895, %v1010
        %v1067 = vadd.f32 %v896, %v1011
        %v1068 = vadd.f32 %v897, %v1012
        %v1069 = vadd.f32 %v898, %v1013
        %v1070 = vadd.f32 %v899, %v1014
        %v1071 = vadd.f32 %v900, %v1015
        %v1072 = vadd.f32 %v901, %v1016
        %v1073 = vadd.f32 %v902, %v1017
        %v1074 = vadd.f32 %v903, %v1018
        %v1075 = vadd.f32 %v904, %v1019
        %v1076 = vadd.f32 %v905, %v1020
        %v1077 = vadd.f32 %v906, %v1021
        %v1078 = vadd.f32 %v907, %v1022
        %v1079 = vadd.f32 %v908, %v1023
        %v1080 = vadd.f32 %v909, %v1024
        %v1081 = vadd.f32 %v910, %v1025
        %v1082 = vadd.f32 %v911, %v1026
        %v1083 = vadd.f32 %v571, %v1027
        %v1084 = vadd.f32 %v572, %v1028
        %v1085 = vadd.f32 %v573, %v1029
        %v1086 = vadd.f32 %v574, %v1030
        %v1087 = vadd.f32 %v575, %v1031
        %v1088 = vadd.f32 %v576, %v1032
        %v1089 = vadd.f32 %v577, %v1033
        %v1090 = vadd.f32 %v578, %v1034
        %v1091 = vadd.f32 %v579, %v1035
        %v1092 = vadd.f32 %v580, %v1036
        %v1093 = vadd.f32 %v581, %v1037
        %v1094 = vadd.f32 %v582, %v1038
        %v1095 = vadd.f32 %v583, %v1039
        %v1096 = vadd.f32 %v584, %v1040
        %v1097 = vadd.f32 %v585, %v1041
        %v1098 = vadd.f32 %v586, %v1042
        %v1099 = vadd.f32 %v587, %v1043
        %v1100 = vadd.f32 %v588, %v1044
        %v1101 = vadd.f32 %v589, %v1045
        %v1102 = vadd.f32 %v590, %v1046
        %v1103 = vadd.f32 %v591, %v1047
        %v1104 = vadd.f32 %v592, %v1048
        %v1105 = vadd.f32 %v593, %v1049
        %v1106 = vadd.f32 %v594, %v1050
        %v1107 = vadd.f32 %v595, %v1051
        %v1108 = vadd.f32 %v596, %v1052
        %v1109 = vadd.f32 %v597, %v1053
        %v1110 = vadd.f32 %v598, %v1054
        %v1111 = vadd.f32 %v599, %v1055
        %v1112 = vadd.f32 %v600, %v1056
        %v1113 = vadd.f32 %v601, %v1057
        %v1114 = vadd.f32 %v602, %v1058
        %v1115 = vadd.f32 %v603, %v1059
        %v1116 = vadd.f32 %v604, %v1060
        %v1117 = vadd.f32 %v605, %v1061
        %v1118 = vadd.f32 %v606, %v1062
        %v1119 = vadd.f32 %v607, %v1063
        %v1120 = vadd.f32 %v608, %v1064
        %v1121 = vadd.f32 %v609, %v1065
        %v1122 = vadd.f32 %v610, %v1066
        %v1123 = vadd.f32 %v611, %v1067
        %v1124 = vadd.f32 %v612, %v1068
        %v1125 = vadd.f32 %v613, %v1069
        %v1126 = vadd.f32 %v614, %v1070
        %v1127 = vadd.f32 %v615, %v1071
        %v1128 = vadd.f32 %v616, %v1072
        %v1129 = vadd.f32 %v617, %v1073
        %v1130 = vadd.f32 %v618, %v1074
        %v1131 = vadd.f32 %v619, %v1075
        %v1132 = vadd.f32 %v620, %v1076
        %v1133 = vadd.f32 %v621, %v1077
        %v1134 = vadd.f32 %v622, %v1078
        %v1135 = vadd.f32 %v623, %v1079
        %v1136 = vadd.f32 %v624, %v1080
        %v1137 = vadd.f32 %v625, %v1081
        %v1138 = vadd.f32 %v626, %v1082
        %s1139 = scalar_lea.vmem %s1, 48
        %v1140 = vld [vmem:[%s1139] sm:$0xff]
        %v1141 = vld [vmem:[%s1139 + $0x8] sm:$0xff]
        %s1142 = scalar_lea.vmem [#allocation2], 16
        %v1143 = vld [vmem:[%s1142] sm:$0xff]
        %v1144 = vld [vmem:[%s1142 + $0x8] sm:$0xff]
        %v1145 = vld [vmem:[%s1142 + $0x10] sm:$0xff]
        %v1146 = vld [vmem:[%s1142 + $0x18] sm:$0xff]
        %v1147 = vld [vmem:[%s1142 + $0x20] sm:$0xff]
        %v1148 = vld [vmem:[%s1142 + $0x28] sm:$0xff]
        %v1149 = vld [vmem:[%s1142 + $0x30] sm:$0xff]
        %v1150 = vld [vmem:[%s1142 + $0x38] sm:$0xff]
        %v1151 = vld [vmem:[%s1142 + $0x40] sm:$0xff]
        %v1152 = vld [vmem:[%s1142 + $0x48] sm:$0xff]
        %v1153 = vld [vmem:[%s1142 + $0x50] sm:$0xff]
        %v1154 = vld [vmem:[%s1142 + $0x58] sm:$0xff]
        %v1155 = vld [vmem:[%s1142 + $0x60] sm:$0xff]
        %v1156 = vld [vmem:[%s1142 + $0x68] sm:$0xff]
        %v1157 = vld [vmem:[%s1142 + $0x70] sm:$0xff]
        %v1158 = vld [vmem:[%s1142 + $0x78] sm:$0xff]
        %v1159 = vld [vmem:[%s1142 + $0x80] sm:$0xff]
        %v1160 = vld [vmem:[%s1142 + $0x88] sm:$0xff]
        %v1161 = vld [vmem:[%s1142 + $0x90] sm:$0xff]
        %v1162 = vld [vmem:[%s1142 + $0x98] sm:$0xff]
        %v1163 = vld [vmem:[%s1142 + $0xa0] sm:$0xff]
        %v1164 = vld [vmem:[%s1142 + $0xa8] sm:$0xff]
        %v1165 = vld [vmem:[%s1142 + $0xb0] sm:$0xff]
        %v1166 = vld [vmem:[%s1142 + $0xb8] sm:$0xff]
        %v1167 = vld [vmem:[%s1142 + $0xc0] sm:$0xff]
        %v1168 = vld [vmem:[%s1142 + $0xc8] sm:$0xff]
        %v1169 = vld [vmem:[%s1142 + $0xd0] sm:$0xff]
        %v1170 = vld [vmem:[%s1142 + $0xd8] sm:$0xff]
        %v1171 = vld [vmem:[%s1142 + $0x100] sm:$0xff]
        %v1172 = vld [vmem:[%s1142 + $0x108] sm:$0xff]
        %v1173 = vld [vmem:[%s1142 + $0x110] sm:$0xff]
        %v1174 = vld [vmem:[%s1142 + $0x118] sm:$0xff]
        %v1175 = vld [vmem:[%s1142 + $0x120] sm:$0xff]
        %v1176 = vld [vmem:[%s1142 + $0x128] sm:$0xff]
        %v1177 = vld [vmem:[%s1142 + $0x130] sm:$0xff]
        %v1178 = vld [vmem:[%s1142 + $0x138] sm:$0xff]
        %v1179 = vld [vmem:[%s1142 + $0x140] sm:$0xff]
        %v1180 = vld [vmem:[%s1142 + $0x148] sm:$0xff]
        %v1181 = vld [vmem:[%s1142 + $0x150] sm:$0xff]
        %v1182 = vld [vmem:[%s1142 + $0x158] sm:$0xff]
        %v1183 = vld [vmem:[%s1142 + $0x160] sm:$0xff]
        %v1184 = vld [vmem:[%s1142 + $0x168] sm:$0xff]
        %v1185 = vld [vmem:[%s1142 + $0x170] sm:$0xff]
        %v1186 = vld [vmem:[%s1142 + $0x178] sm:$0xff]
        %v1187 = vld [vmem:[%s1142 + $0x180] sm:$0xff]
        %v1188 = vld [vmem:[%s1142 + $0x188] sm:$0xff]
        %v1189 = vld [vmem:[%s1142 + $0x190] sm:$0xff]
        %v1190 = vld [vmem:[%s1142 + $0x198] sm:$0xff]
        %v1191 = vld [vmem:[%s1142 + $0x1a0] sm:$0xff]
        %v1192 = vld [vmem:[%s1142 + $0x1a8] sm:$0xff]
        %v1193 = vld [vmem:[%s1142 + $0x1b0] sm:$0xff]
        %v1194 = vld [vmem:[%s1142 + $0x1b8] sm:$0xff]
        %v1195 = vld [vmem:[%s1142 + $0x1c0] sm:$0xff]
        %v1196 = vld [vmem:[%s1142 + $0x1c8] sm:$0xff]
        %v1197 = vld [vmem:[%s1142 + $0x1d0] sm:$0xff]
        %v1198 = vld [vmem:[%s1142 + $0x1d8] sm:$0xff]
        %v1199 = vmul.f32 %v1140, %v1143
        %v1200 = vmul.f32 %v1141, %v1144
        %v1201 = vmul.f32 %v1140, %v1145
        %v1202 = vmul.f32 %v1141, %v1146
        %v1203 = vmul.f32 %v1140, %v1147
        %v1204 = vmul.f32 %v1141, %v1148
        %v1205 = vmul.f32 %v1140, %v1149
        %v1206 = vmul.f32 %v1141, %v1150
        %v1207 = vmul.f32 %v1140, %v1151
        %v1208 = vmul.f32 %v1141, %v1152
        %v1209 = vmul.f32 %v1140, %v1153
        %v1210 = vmul.f32 %v1141, %v1154
        %v1211 = vmul.f32 %v1140, %v1155
        %v1212 = vmul.f32 %v1141, %v1156
        %v1213 = vmul.f32 %v1140, %v1157
        %v1214 = vmul.f32 %v1141, %v1158
        %v1215 = vmul.f32 %v1140, %v1159
        %v1216 = vmul.f32 %v1141, %v1160
        %v1217 = vmul.f32 %v1140, %v1161
        %v1218 = vmul.f32 %v1141, %v1162
        %v1219 = vmul.f32 %v1140, %v1163
        %v1220 = vmul.f32 %v1141, %v1164
        %v1221 = vmul.f32 %v1140, %v1165
        %v1222 = vmul.f32 %v1141, %v1166
        %v1223 = vmul.f32 %v1140, %v1167
        %v1224 = vmul.f32 %v1141, %v1168
        %v1225 = vmul.f32 %v1140, %v1169
        %v1226 = vmul.f32 %v1141, %v1170
        %v1227 = vmul.f32 %v1140, %v1171
        %v1228 = vmul.f32 %v1141, %v1172
        %v1229 = vmul.f32 %v1140, %v1173
        %v1230 = vmul.f32 %v1141, %v1174
        %v1231 = vmul.f32 %v1140, %v1175
        %v1232 = vmul.f32 %v1141, %v1176
        %v1233 = vmul.f32 %v1140, %v1177
        %v1234 = vmul.f32 %v1141, %v1178
        %v1235 = vmul.f32 %v1140, %v1179
        %v1236 = vmul.f32 %v1141, %v1180
        %v1237 = vmul.f32 %v1140, %v1181
        %v1238 = vmul.f32 %v1141, %v1182
        %v1239 = vmul.f32 %v1140, %v1183
        %v1240 = vmul.f32 %v1141, %v1184
        %v1241 = vmul.f32 %v1140, %v1185
        %v1242 = vmul.f32 %v1141, %v1186
        %v1243 = vmul.f32 %v1140, %v1187
        %v1244 = vmul.f32 %v1141, %v1188
        %v1245 = vmul.f32 %v1140, %v1189
        %v1246 = vmul.f32 %v1141, %v1190
        %v1247 = vmul.f32 %v1140, %v1191
        %v1248 = vmul.f32 %v1141, %v1192
        %v1249 = vmul.f32 %v1140, %v1193
        %v1250 = vmul.f32 %v1141, %v1194
        %v1251 = vmul.f32 %v1140, %v1195
        %v1252 = vmul.f32 %v1141, %v1196
        %v1253 = vmul.f32 %v1140, %v1197
        %v1254 = vmul.f32 %v1141, %v1198
        %s1255 = scalar_lea.vmem %s1, 64
        %v1256 = vld [vmem:[%s1255] sm:$0xff]
        %v1257 = vld [vmem:[%s1255 + $0x8] sm:$0xff]
        %v1258 = vmul.f32 %v1256, %v515
        %v1259 = vmul.f32 %v1257, %v516
        %v1260 = vmul.f32 %v1256, %v517
        %v1261 = vmul.f32 %v1257, %v518
        %v1262 = vmul.f32 %v1256, %v519
        %v1263 = vmul.f32 %v1257, %v520
        %v1264 = vmul.f32 %v1256, %v521
        %v1265 = vmul.f32 %v1257, %v522
        %v1266 = vmul.f32 %v1256, %v523
        %v1267 = vmul.f32 %v1257, %v524
        %v1268 = vmul.f32 %v1256, %v525
        %v1269 = vmul.f32 %v1257, %v526
        %v1270 = vmul.f32 %v1256, %v527
        %v1271 = vmul.f32 %v1257, %v528
        %v1272 = vmul.f32 %v1256, %v529
        %v1273 = vmul.f32 %v1257, %v530
        %v1274 = vmul.f32 %v1256, %v531
        %v1275 = vmul.f32 %v1257, %v532
        %v1276 = vmul.f32 %v1256, %v533
        %v1277 = vmul.f32 %v1257, %v534
        %v1278 = vmul.f32 %v1256, %v535
        %v1279 = vmul.f32 %v1257, %v536
        %v1280 = vmul.f32 %v1256, %v537
        %v1281 = vmul.f32 %v1257, %v538
        %v1282 = vmul.f32 %v1256, %v539
        %v1283 = vmul.f32 %v1257, %v540
        %v1284 = vmul.f32 %v1256, %v541
        %v1285 = vmul.f32 %v1257, %v542
        %v1286 = vmul.f32 %v1256, %v543
        %v1287 = vmul.f32 %v1257, %v544
        %v1288 = vmul.f32 %v1256, %v545
        %v1289 = vmul.f32 %v1257, %v546
        %v1290 = vmul.f32 %v1256, %v547
        %v1291 = vmul.f32 %v1257, %v548
        %v1292 = vmul.f32 %v1256, %v549
        %v1293 = vmul.f32 %v1257, %v550
        %v1294 = vmul.f32 %v1256, %v551
        %v1295 = vmul.f32 %v1257, %v552
        %v1296 = vmul.f32 %v1256, %v553
        %v1297 = vmul.f32 %v1257, %v554
        %v1298 = vmul.f32 %v1256, %v555
        %v1299 = vmul.f32 %v1257, %v556
        %v1300 = vmul.f32 %v1256, %v557
        %v1301 = vmul.f32 %v1257, %v558
        %v1302 = vmul.f32 %v1256, %v559
        %v1303 = vmul.f32 %v1257, %v560
        %v1304 = vmul.f32 %v1256, %v561
        %v1305 = vmul.f32 %v1257, %v562
        %v1306 = vmul.f32 %v1256, %v563
        %v1307 = vmul.f32 %v1257, %v564
        %v1308 = vmul.f32 %v1256, %v565
        %v1309 = vmul.f32 %v1257, %v566
        %v1310 = vmul.f32 %v1256, %v567
        %v1311 = vmul.f32 %v1257, %v568
        %v1312 = vmul.f32 %v1256, %v569
        %v1313 = vmul.f32 %v1257, %v570
        %v1314 = vadd.f32 %v1199, %v1258
        %v1315 = vadd.f32 %v1200, %v1259
        %v1316 = vadd.f32 %v1201, %v1260
        %v1317 = vadd.f32 %v1202, %v1261
        %v1318 = vadd.f32 %v1203, %v1262
        %v1319 = vadd.f32 %v1204, %v1263
        %v1320 = vadd.f32 %v1205, %v1264
        %v1321 = vadd.f32 %v1206, %v1265
        %v1322 = vadd.f32 %v1207, %v1266
        %v1323 = vadd.f32 %v1208, %v1267
        %v1324 = vadd.f32 %v1209, %v1268
        %v1325 = vadd.f32 %v1210, %v1269
        %v1326 = vadd.f32 %v1211, %v1270
        %v1327 = vadd.f32 %v1212, %v1271
        %v1328 = vadd.f32 %v1213, %v1272
        %v1329 = vadd.f32 %v1214, %v1273
        %v1330 = vadd.f32 %v1215, %v1274
        %v1331 = vadd.f32 %v1216, %v1275
        %v1332 = vadd.f32 %v1217, %v1276
        %v1333 = vadd.f32 %v1218, %v1277
        %v1334 = vadd.f32 %v1219, %v1278
        %v1335 = vadd.f32 %v1220, %v1279
        %v1336 = vadd.f32 %v1221, %v1280
        %v1337 = vadd.f32 %v1222, %v1281
        %v1338 = vadd.f32 %v1223, %v1282
        %v1339 = vadd.f32 %v1224, %v1283
        %v1340 = vadd.f32 %v1225, %v1284
        %v1341 = vadd.f32 %v1226, %v1285
        %v1342 = vadd.f32 %v1227, %v1286
        %v1343 = vadd.f32 %v1228, %v1287
        %v1344 = vadd.f32 %v1229, %v1288
        %v1345 = vadd.f32 %v1230, %v1289
        %v1346 = vadd.f32 %v1231, %v1290
        %v1347 = vadd.f32 %v1232, %v1291
        %v1348 = vadd.f32 %v1233, %v1292
        %v1349 = vadd.f32 %v1234, %v1293
        %v1350 = vadd.f32 %v1235, %v1294
        %v1351 = vadd.f32 %v1236, %v1295
        %v1352 = vadd.f32 %v1237, %v1296
        %v1353 = vadd.f32 %v1238, %v1297
        %v1354 = vadd.f32 %v1239, %v1298
        %v1355 = vadd.f32 %v1240, %v1299
        %v1356 = vadd.f32 %v1241, %v1300
        %v1357 = vadd.f32 %v1242, %v1301
        %v1358 = vadd.f32 %v1243, %v1302
        %v1359 = vadd.f32 %v1244, %v1303
        %v1360 = vadd.f32 %v1245, %v1304
        %v1361 = vadd.f32 %v1246, %v1305
        %v1362 = vadd.f32 %v1247, %v1306
        %v1363 = vadd.f32 %v1248, %v1307
        %v1364 = vadd.f32 %v1249, %v1308
        %v1365 = vadd.f32 %v1250, %v1309
        %v1366 = vadd.f32 %v1251, %v1310
        %v1367 = vadd.f32 %v1252, %v1311
        %v1368 = vadd.f32 %v1253, %v1312
        %v1369 = vadd.f32 %v1254, %v1313
        %s1370 = scalar_lea.vmem %s1, 80
        %v1371 = vld [vmem:[%s1370] sm:$0xff]
        %v1372 = vld [vmem:[%s1370 + $0x8] sm:$0xff]
        %s1373 = scalar_lea.vmem [#allocation3], 16
        %v1374 = vld [vmem:[%s1373] sm:$0xff]
        %v1375 = vld [vmem:[%s1373 + $0x8] sm:$0xff]
        %v1376 = vld [vmem:[%s1373 + $0x10] sm:$0xff]
        %v1377 = vld [vmem:[%s1373 + $0x18] sm:$0xff]
        %v1378 = vld [vmem:[%s1373 + $0x20] sm:$0xff]
        %v1379 = vld [vmem:[%s1373 + $0x28] sm:$0xff]
        %v1380 = vld [vmem:[%s1373 + $0x30] sm:$0xff]
        %v1381 = vld [vmem:[%s1373 + $0x38] sm:$0xff]
        %v1382 = vld [vmem:[%s1373 + $0x40] sm:$0xff]
        %v1383 = vld [vmem:[%s1373 + $0x48] sm:$0xff]
        %v1384 = vld [vmem:[%s1373 + $0x50] sm:$0xff]
        %v1385 = vld [vmem:[%s1373 + $0x58] sm:$0xff]
        %v1386 = vld [vmem:[%s1373 + $0x60] sm:$0xff]
        %v1387 = vld [vmem:[%s1373 + $0x68] sm:$0xff]
        %v1388 = vld [vmem:[%s1373 + $0x70] sm:$0xff]
        %v1389 = vld [vmem:[%s1373 + $0x78] sm:$0xff]
        %v1390 = vld [vmem:[%s1373 + $0x80] sm:$0xff]
        %v1391 = vld [vmem:[%s1373 + $0x88] sm:$0xff]
        %v1392 = vld [vmem:[%s1373 + $0x90] sm:$0xff]
        %v1393 = vld [vmem:[%s1373 + $0x98] sm:$0xff]
        %v1394 = vld [vmem:[%s1373 + $0xa0] sm:$0xff]
        %v1395 = vld [vmem:[%s1373 + $0xa8] sm:$0xff]
        %v1396 = vld [vmem:[%s1373 + $0xb0] sm:$0xff]
        %v1397 = vld [vmem:[%s1373 + $0xb8] sm:$0xff]
        %v1398 = vld [vmem:[%s1373 + $0xc0] sm:$0xff]
        %v1399 = vld [vmem:[%s1373 + $0xc8] sm:$0xff]
        %v1400 = vld [vmem:[%s1373 + $0xd0] sm:$0xff]
        %v1401 = vld [vmem:[%s1373 + $0xd8] sm:$0xff]
        %v1402 = vld [vmem:[%s1373 + $0x100] sm:$0xff]
        %v1403 = vld [vmem:[%s1373 + $0x108] sm:$0xff]
        %v1404 = vld [vmem:[%s1373 + $0x110] sm:$0xff]
        %v1405 = vld [vmem:[%s1373 + $0x118] sm:$0xff]
        %v1406 = vld [vmem:[%s1373 + $0x120] sm:$0xff]
        %v1407 = vld [vmem:[%s1373 + $0x128] sm:$0xff]
        %v1408 = vld [vmem:[%s1373 + $0x130] sm:$0xff]
        %v1409 = vld [vmem:[%s1373 + $0x138] sm:$0xff]
        %v1410 = vld [vmem:[%s1373 + $0x140] sm:$0xff]
        %v1411 = vld [vmem:[%s1373 + $0x148] sm:$0xff]
        %v1412 = vld [vmem:[%s1373 + $0x150] sm:$0xff]
        %v1413 = vld [vmem:[%s1373 + $0x158] sm:$0xff]
        %v1414 = vld [vmem:[%s1373 + $0x160] sm:$0xff]
        %v1415 = vld [vmem:[%s1373 + $0x168] sm:$0xff]
        %v1416 = vld [vmem:[%s1373 + $0x170] sm:$0xff]
        %v1417 = vld [vmem:[%s1373 + $0x178] sm:$0xff]
        %v1418 = vld [vmem:[%s1373 + $0x180] sm:$0xff]
        %v1419 = vld [vmem:[%s1373 + $0x188] sm:$0xff]
        %v1420 = vld [vmem:[%s1373 + $0x190] sm:$0xff]
        %v1421 = vld [vmem:[%s1373 + $0x198] sm:$0xff]
        %v1422 = vld [vmem:[%s1373 + $0x1a0] sm:$0xff]
        %v1423 = vld [vmem:[%s1373 + $0x1a8] sm:$0xff]
        %v1424 = vld [vmem:[%s1373 + $0x1b0] sm:$0xff]
        %v1425 = vld [vmem:[%s1373 + $0x1b8] sm:$0xff]
        %v1426 = vld [vmem:[%s1373 + $0x1c0] sm:$0xff]
        %v1427 = vld [vmem:[%s1373 + $0x1c8] sm:$0xff]
        %v1428 = vld [vmem:[%s1373 + $0x1d0] sm:$0xff]
        %v1429 = vld [vmem:[%s1373 + $0x1d8] sm:$0xff]
        %v1430 = vmul.f32 %v1371, %v1374
        %v1431 = vmul.f32 %v1372, %v1375
        %v1432 = vmul.f32 %v1371, %v1376
        %v1433 = vmul.f32 %v1372, %v1377
        %v1434 = vmul.f32 %v1371, %v1378
        %v1435 = vmul.f32 %v1372, %v1379
        %v1436 = vmul.f32 %v1371, %v1380
        %v1437 = vmul.f32 %v1372, %v1381
        %v1438 = vmul.f32 %v1371, %v1382
        %v1439 = vmul.f32 %v1372, %v1383
        %v1440 = vmul.f32 %v1371, %v1384
        %v1441 = vmul.f32 %v1372, %v1385
        %v1442 = vmul.f32 %v1371, %v1386
        %v1443 = vmul.f32 %v1372, %v1387
        %v1444 = vmul.f32 %v1371, %v1388
        %v1445 = vmul.f32 %v1372, %v1389
        %v1446 = vmul.f32 %v1371, %v1390
        %v1447 = vmul.f32 %v1372, %v1391
        %v1448 = vmul.f32 %v1371, %v1392
        %v1449 = vmul.f32 %v1372, %v1393
        %v1450 = vmul.f32 %v1371, %v1394
        %v1451 = vmul.f32 %v1372, %v1395
        %v1452 = vmul.f32 %v1371, %v1396
        %v1453 = vmul.f32 %v1372, %v1397
        %v1454 = vmul.f32 %v1371, %v1398
        %v1455 = vmul.f32 %v1372, %v1399
        %v1456 = vmul.f32 %v1371, %v1400
        %v1457 = vmul.f32 %v1372, %v1401
        %v1458 = vmul.f32 %v1371, %v1402
        %v1459 = vmul.f32 %v1372, %v1403
        %v1460 = vmul.f32 %v1371, %v1404
        %v1461 = vmul.f32 %v1372, %v1405
        %v1462 = vmul.f32 %v1371, %v1406
        %v1463 = vmul.f32 %v1372, %v1407
        %v1464 = vmul.f32 %v1371, %v1408
        %v1465 = vmul.f32 %v1372, %v1409
        %v1466 = vmul.f32 %v1371, %v1410
        %v1467 = vmul.f32 %v1372, %v1411
        %v1468 = vmul.f32 %v1371, %v1412
        %v1469 = vmul.f32 %v1372, %v1413
        %v1470 = vmul.f32 %v1371, %v1414
        %v1471 = vmul.f32 %v1372, %v1415
        %v1472 = vmul.f32 %v1371, %v1416
        %v1473 = vmul.f32 %v1372, %v1417
        %v1474 = vmul.f32 %v1371, %v1418
        %v1475 = vmul.f32 %v1372, %v1419
        %v1476 = vmul.f32 %v1371, %v1420
        %v1477 = vmul.f32 %v1372, %v1421
        %v1478 = vmul.f32 %v1371, %v1422
        %v1479 = vmul.f32 %v1372, %v1423
        %v1480 = vmul.f32 %v1371, %v1424
        %v1481 = vmul.f32 %v1372, %v1425
        %v1482 = vmul.f32 %v1371, %v1426
        %v1483 = vmul.f32 %v1372, %v1427
        %v1484 = vmul.f32 %v1371, %v1428
        %v1485 = vmul.f32 %v1372, %v1429
        %v1486 = vadd.f32 %v1314, %v1430
        %v1487 = vadd.f32 %v1315, %v1431
        %v1488 = vadd.f32 %v1316, %v1432
        %v1489 = vadd.f32 %v1317, %v1433
        %v1490 = vadd.f32 %v1318, %v1434
        %v1491 = vadd.f32 %v1319, %v1435
        %v1492 = vadd.f32 %v1320, %v1436
        %v1493 = vadd.f32 %v1321, %v1437
        %v1494 = vadd.f32 %v1322, %v1438
        %v1495 = vadd.f32 %v1323, %v1439
        %v1496 = vadd.f32 %v1324, %v1440
        %v1497 = vadd.f32 %v1325, %v1441
        %v1498 = vadd.f32 %v1326, %v1442
        %v1499 = vadd.f32 %v1327, %v1443
        %v1500 = vadd.f32 %v1328, %v1444
        %v1501 = vadd.f32 %v1329, %v1445
        %v1502 = vadd.f32 %v1330, %v1446
        %v1503 = vadd.f32 %v1331, %v1447
        %v1504 = vadd.f32 %v1332, %v1448
        %v1505 = vadd.f32 %v1333, %v1449
        %v1506 = vadd.f32 %v1334, %v1450
        %v1507 = vadd.f32 %v1335, %v1451
        %v1508 = vadd.f32 %v1336, %v1452
        %v1509 = vadd.f32 %v1337, %v1453
        %v1510 = vadd.f32 %v1338, %v1454
        %v1511 = vadd.f32 %v1339, %v1455
        %v1512 = vadd.f32 %v1340, %v1456
        %v1513 = vadd.f32 %v1341, %v1457
        %v1514 = vadd.f32 %v1342, %v1458
        %v1515 = vadd.f32 %v1343, %v1459
        %v1516 = vadd.f32 %v1344, %v1460
        %v1517 = vadd.f32 %v1345, %v1461
        %v1518 = vadd.f32 %v1346, %v1462
        %v1519 = vadd.f32 %v1347, %v1463
        %v1520 = vadd.f32 %v1348, %v1464
        %v1521 = vadd.f32 %v1349, %v1465
        %v1522 = vadd.f32 %v1350, %v1466
        %v1523 = vadd.f32 %v1351, %v1467
        %v1524 = vadd.f32 %v1352, %v1468
        %v1525 = vadd.f32 %v1353, %v1469
        %v1526 = vadd.f32 %v1354, %v1470
        %v1527 = vadd.f32 %v1355, %v1471
        %v1528 = vadd.f32 %v1356, %v1472
        %v1529 = vadd.f32 %v1357, %v1473
        %v1530 = vadd.f32 %v1358, %v1474
        %v1531 = vadd.f32 %v1359, %v1475
        %v1532 = vadd.f32 %v1360, %v1476
        %v1533 = vadd.f32 %v1361, %v1477
        %v1534 = vadd.f32 %v1362, %v1478
        %v1535 = vadd.f32 %v1363, %v1479
        %v1536 = vadd.f32 %v1364, %v1480
        %v1537 = vadd.f32 %v1365, %v1481
        %v1538 = vadd.f32 %v1366, %v1482
        %v1539 = vadd.f32 %v1367, %v1483
        %v1540 = vadd.f32 %v1368, %v1484
        %v1541 = vadd.f32 %v1369, %v1485
        %v1542 = vadd.f32 %v1083, %v1486
        %v1543 = vadd.f32 %v1084, %v1487
        %v1544 = vadd.f32 %v1085, %v1488
        %v1545 = vadd.f32 %v1086, %v1489
        %v1546 = vadd.f32 %v1087, %v1490
        %v1547 = vadd.f32 %v1088, %v1491
        %v1548 = vadd.f32 %v1089, %v1492
        %v1549 = vadd.f32 %v1090, %v1493
        %v1550 = vadd.f32 %v1091, %v1494
        %v1551 = vadd.f32 %v1092, %v1495
        %v1552 = vadd.f32 %v1093, %v1496
        %v1553 = vadd.f32 %v1094, %v1497
        %v1554 = vadd.f32 %v1095, %v1498
        %v1555 = vadd.f32 %v1096, %v1499
        %v1556 = vadd.f32 %v1097, %v1500
        %v1557 = vadd.f32 %v1098, %v1501
        %v1558 = vadd.f32 %v1099, %v1502
        %v1559 = vadd.f32 %v1100, %v1503
        %v1560 = vadd.f32 %v1101, %v1504
        %v1561 = vadd.f32 %v1102, %v1505
        %v1562 = vadd.f32 %v1103, %v1506
        %v1563 = vadd.f32 %v1104, %v1507
        %v1564 = vadd.f32 %v1105, %v1508
        %v1565 = vadd.f32 %v1106, %v1509
        %v1566 = vadd.f32 %v1107, %v1510
        %v1567 = vadd.f32 %v1108, %v1511
        %v1568 = vadd.f32 %v1109, %v1512
        %v1569 = vadd.f32 %v1110, %v1513
        %v1570 = vadd.f32 %v1111, %v1514
        %v1571 = vadd.f32 %v1112, %v1515
        %v1572 = vadd.f32 %v1113, %v1516
        %v1573 = vadd.f32 %v1114, %v1517
        %v1574 = vadd.f32 %v1115, %v1518
        %v1575 = vadd.f32 %v1116, %v1519
        %v1576 = vadd.f32 %v1117, %v1520
        %v1577 = vadd.f32 %v1118, %v1521
        %v1578 = vadd.f32 %v1119, %v1522
        %v1579 = vadd.f32 %v1120, %v1523
        %v1580 = vadd.f32 %v1121, %v1524
        %v1581 = vadd.f32 %v1122, %v1525
        %v1582 = vadd.f32 %v1123, %v1526
        %v1583 = vadd.f32 %v1124, %v1527
        %v1584 = vadd.f32 %v1125, %v1528
        %v1585 = vadd.f32 %v1126, %v1529
        %v1586 = vadd.f32 %v1127, %v1530
        %v1587 = vadd.f32 %v1128, %v1531
        %v1588 = vadd.f32 %v1129, %v1532
        %v1589 = vadd.f32 %v1130, %v1533
        %v1590 = vadd.f32 %v1131, %v1534
        %v1591 = vadd.f32 %v1132, %v1535
        %v1592 = vadd.f32 %v1133, %v1536
        %v1593 = vadd.f32 %v1134, %v1537
        %v1594 = vadd.f32 %v1135, %v1538
        %v1595 = vadd.f32 %v1136, %v1539
        %v1596 = vadd.f32 %v1137, %v1540
        %v1597 = vadd.f32 %v1138, %v1541
        %s1598 = scalar_lea.vmem %s1, 96
        %v1599 = vld [vmem:[%s1598] sm:$0xff]
        %v1600 = vld [vmem:[%s1598 + $0x8] sm:$0xff]
        %s1601 = scalar_lea.vmem [#allocation2], 32
        %v1602 = vld [vmem:[%s1601] sm:$0xff]
        %v1603 = vld [vmem:[%s1601 + $0x8] sm:$0xff]
        %v1604 = vld [vmem:[%s1601 + $0x10] sm:$0xff]
        %v1605 = vld [vmem:[%s1601 + $0x18] sm:$0xff]
        %v1606 = vld [vmem:[%s1601 + $0x20] sm:$0xff]
        %v1607 = vld [vmem:[%s1601 + $0x28] sm:$0xff]
        %v1608 = vld [vmem:[%s1601 + $0x30] sm:$0xff]
        %v1609 = vld [vmem:[%s1601 + $0x38] sm:$0xff]
        %v1610 = vld [vmem:[%s1601 + $0x40] sm:$0xff]
        %v1611 = vld [vmem:[%s1601 + $0x48] sm:$0xff]
        %v1612 = vld [vmem:[%s1601 + $0x50] sm:$0xff]
        %v1613 = vld [vmem:[%s1601 + $0x58] sm:$0xff]
        %v1614 = vld [vmem:[%s1601 + $0x60] sm:$0xff]
        %v1615 = vld [vmem:[%s1601 + $0x68] sm:$0xff]
        %v1616 = vld [vmem:[%s1601 + $0x70] sm:$0xff]
        %v1617 = vld [vmem:[%s1601 + $0x78] sm:$0xff]
        %v1618 = vld [vmem:[%s1601 + $0x80] sm:$0xff]
        %v1619 = vld [vmem:[%s1601 + $0x88] sm:$0xff]
        %v1620 = vld [vmem:[%s1601 + $0x90] sm:$0xff]
        %v1621 = vld [vmem:[%s1601 + $0x98] sm:$0xff]
        %v1622 = vld [vmem:[%s1601 + $0xa0] sm:$0xff]
        %v1623 = vld [vmem:[%s1601 + $0xa8] sm:$0xff]
        %v1624 = vld [vmem:[%s1601 + $0xb0] sm:$0xff]
        %v1625 = vld [vmem:[%s1601 + $0xb8] sm:$0xff]
        %v1626 = vld [vmem:[%s1601 + $0xc0] sm:$0xff]
        %v1627 = vld [vmem:[%s1601 + $0xc8] sm:$0xff]
        %v1628 = vld [vmem:[%s1601 + $0xd0] sm:$0xff]
        %v1629 = vld [vmem:[%s1601 + $0xd8] sm:$0xff]
        %v1630 = vld [vmem:[%s1601 + $0x100] sm:$0xff]
        %v1631 = vld [vmem:[%s1601 + $0x108] sm:$0xff]
        %v1632 = vld [vmem:[%s1601 + $0x110] sm:$0xff]
        %v1633 = vld [vmem:[%s1601 + $0x118] sm:$0xff]
        %v1634 = vld [vmem:[%s1601 + $0x120] sm:$0xff]
        %v1635 = vld [vmem:[%s1601 + $0x128] sm:$0xff]
        %v1636 = vld [vmem:[%s1601 + $0x130] sm:$0xff]
        %v1637 = vld [vmem:[%s1601 + $0x138] sm:$0xff]
        %v1638 = vld [vmem:[%s1601 + $0x140] sm:$0xff]
        %v1639 = vld [vmem:[%s1601 + $0x148] sm:$0xff]
        %v1640 = vld [vmem:[%s1601 + $0x150] sm:$0xff]
        %v1641 = vld [vmem:[%s1601 + $0x158] sm:$0xff]
        %v1642 = vld [vmem:[%s1601 + $0x160] sm:$0xff]
        %v1643 = vld [vmem:[%s1601 + $0x168] sm:$0xff]
        %v1644 = vld [vmem:[%s1601 + $0x170] sm:$0xff]
        %v1645 = vld [vmem:[%s1601 + $0x178] sm:$0xff]
        %v1646 = vld [vmem:[%s1601 + $0x180] sm:$0xff]
        %v1647 = vld [vmem:[%s1601 + $0x188] sm:$0xff]
        %v1648 = vld [vmem:[%s1601 + $0x190] sm:$0xff]
        %v1649 = vld [vmem:[%s1601 + $0x198] sm:$0xff]
        %v1650 = vld [vmem:[%s1601 + $0x1a0] sm:$0xff]
        %v1651 = vld [vmem:[%s1601 + $0x1a8] sm:$0xff]
        %v1652 = vld [vmem:[%s1601 + $0x1b0] sm:$0xff]
        %v1653 = vld [vmem:[%s1601 + $0x1b8] sm:$0xff]
        %v1654 = vld [vmem:[%s1601 + $0x1c0] sm:$0xff]
        %v1655 = vld [vmem:[%s1601 + $0x1c8] sm:$0xff]
        %v1656 = vld [vmem:[%s1601 + $0x1d0] sm:$0xff]
        %v1657 = vld [vmem:[%s1601 + $0x1d8] sm:$0xff]
        %v1658 = vmul.f32 %v1599, %v1602
        %v1659 = vmul.f32 %v1600, %v1603
        %v1660 = vmul.f32 %v1599, %v1604
        %v1661 = vmul.f32 %v1600, %v1605
        %v1662 = vmul.f32 %v1599, %v1606
        %v1663 = vmul.f32 %v1600, %v1607
        %v1664 = vmul.f32 %v1599, %v1608
        %v1665 = vmul.f32 %v1600, %v1609
        %v1666 = vmul.f32 %v1599, %v1610
        %v1667 = vmul.f32 %v1600, %v1611
        %v1668 = vmul.f32 %v1599, %v1612
        %v1669 = vmul.f32 %v1600, %v1613
        %v1670 = vmul.f32 %v1599, %v1614
        %v1671 = vmul.f32 %v1600, %v1615
        %v1672 = vmul.f32 %v1599, %v1616
        %v1673 = vmul.f32 %v1600, %v1617
        %v1674 = vmul.f32 %v1599, %v1618
        %v1675 = vmul.f32 %v1600, %v1619
        %v1676 = vmul.f32 %v1599, %v1620
        %v1677 = vmul.f32 %v1600, %v1621
        %v1678 = vmul.f32 %v1599, %v1622
        %v1679 = vmul.f32 %v1600, %v1623
        %v1680 = vmul.f32 %v1599, %v1624
        %v1681 = vmul.f32 %v1600, %v1625
        %v1682 = vmul.f32 %v1599, %v1626
        %v1683 = vmul.f32 %v1600, %v1627
        %v1684 = vmul.f32 %v1599, %v1628
        %v1685 = vmul.f32 %v1600, %v1629
        %v1686 = vmul.f32 %v1599, %v1630
        %v1687 = vmul.f32 %v1600, %v1631
        %v1688 = vmul.f32 %v1599, %v1632
        %v1689 = vmul.f32 %v1600, %v1633
        %v1690 = vmul.f32 %v1599, %v1634
        %v1691 = vmul.f32 %v1600, %v1635
        %v1692 = vmul.f32 %v1599, %v1636
        %v1693 = vmul.f32 %v1600, %v1637
        %v1694 = vmul.f32 %v1599, %v1638
        %v1695 = vmul.f32 %v1600, %v1639
        %v1696 = vmul.f32 %v1599, %v1640
        %v1697 = vmul.f32 %v1600, %v1641
        %v1698 = vmul.f32 %v1599, %v1642
        %v1699 = vmul.f32 %v1600, %v1643
        %v1700 = vmul.f32 %v1599, %v1644
        %v1701 = vmul.f32 %v1600, %v1645
        %v1702 = vmul.f32 %v1599, %v1646
        %v1703 = vmul.f32 %v1600, %v1647
        %v1704 = vmul.f32 %v1599, %v1648
        %v1705 = vmul.f32 %v1600, %v1649
        %v1706 = vmul.f32 %v1599, %v1650
        %v1707 = vmul.f32 %v1600, %v1651
        %v1708 = vmul.f32 %v1599, %v1652
        %v1709 = vmul.f32 %v1600, %v1653
        %v1710 = vmul.f32 %v1599, %v1654
        %v1711 = vmul.f32 %v1600, %v1655
        %v1712 = vmul.f32 %v1599, %v1656
        %v1713 = vmul.f32 %v1600, %v1657
        %s1714 = scalar_lea.vmem %s1, 112
        %v1715 = vld [vmem:[%s1714] sm:$0xff]
        %v1716 = vld [vmem:[%s1714 + $0x8] sm:$0xff]
        %s1717 = scalar_lea.vmem %s167, 32 [#allocation4]
        %v1718 = vld [vmem:[%s1717] sm:$0xff]
        %v1719 = vld [vmem:[%s1717 + $0x8] sm:$0xff]
        %v1720 = vld [vmem:[%s1717 + $0x10] sm:$0xff]
        %v1721 = vld [vmem:[%s1717 + $0x18] sm:$0xff]
        %v1722 = vld [vmem:[%s1717 + $0x20] sm:$0xff]
        %v1723 = vld [vmem:[%s1717 + $0x28] sm:$0xff]
        %v1724 = vld [vmem:[%s1717 + $0x30] sm:$0xff]
        %v1725 = vld [vmem:[%s1717 + $0x38] sm:$0xff]
        %v1726 = vld [vmem:[%s1717 + $0x40] sm:$0xff]
        %v1727 = vld [vmem:[%s1717 + $0x48] sm:$0xff]
        %v1728 = vld [vmem:[%s1717 + $0x50] sm:$0xff]
        %v1729 = vld [vmem:[%s1717 + $0x58] sm:$0xff]
        %v1730 = vld [vmem:[%s1717 + $0x60] sm:$0xff]
        %v1731 = vld [vmem:[%s1717 + $0x68] sm:$0xff]
        %v1732 = vld [vmem:[%s1717 + $0x70] sm:$0xff]
        %v1733 = vld [vmem:[%s1717 + $0x78] sm:$0xff]
        %v1734 = vld [vmem:[%s1717 + $0x80] sm:$0xff]
        %v1735 = vld [vmem:[%s1717 + $0x88] sm:$0xff]
        %v1736 = vld [vmem:[%s1717 + $0x90] sm:$0xff]
        %v1737 = vld [vmem:[%s1717 + $0x98] sm:$0xff]
        %v1738 = vld [vmem:[%s1717 + $0xa0] sm:$0xff]
        %v1739 = vld [vmem:[%s1717 + $0xa8] sm:$0xff]
        %v1740 = vld [vmem:[%s1717 + $0xb0] sm:$0xff]
        %v1741 = vld [vmem:[%s1717 + $0xb8] sm:$0xff]
        %v1742 = vld [vmem:[%s1717 + $0xc0] sm:$0xff]
        %v1743 = vld [vmem:[%s1717 + $0xc8] sm:$0xff]
        %v1744 = vld [vmem:[%s1717 + $0xd0] sm:$0xff]
        %v1745 = vld [vmem:[%s1717 + $0xd8] sm:$0xff]
        %v1746 = vld [vmem:[%s1717 + $0x100] sm:$0xff]
        %v1747 = vld [vmem:[%s1717 + $0x108] sm:$0xff]
        %v1748 = vld [vmem:[%s1717 + $0x110] sm:$0xff]
        %v1749 = vld [vmem:[%s1717 + $0x118] sm:$0xff]
        %v1750 = vld [vmem:[%s1717 + $0x120] sm:$0xff]
        %v1751 = vld [vmem:[%s1717 + $0x128] sm:$0xff]
        %v1752 = vld [vmem:[%s1717 + $0x130] sm:$0xff]
        %v1753 = vld [vmem:[%s1717 + $0x138] sm:$0xff]
        %v1754 = vld [vmem:[%s1717 + $0x140] sm:$0xff]
        %v1755 = vld [vmem:[%s1717 + $0x148] sm:$0xff]
        %v1756 = vld [vmem:[%s1717 + $0x150] sm:$0xff]
        %v1757 = vld [vmem:[%s1717 + $0x158] sm:$0xff]
        %v1758 = vld [vmem:[%s1717 + $0x160] sm:$0xff]
        %v1759 = vld [vmem:[%s1717 + $0x168] sm:$0xff]
        %v1760 = vld [vmem:[%s1717 + $0x170] sm:$0xff]
        %v1761 = vld [vmem:[%s1717 + $0x178] sm:$0xff]
        %v1762 = vld [vmem:[%s1717 + $0x180] sm:$0xff]
        %v1763 = vld [vmem:[%s1717 + $0x188] sm:$0xff]
        %v1764 = vld [vmem:[%s1717 + $0x190] sm:$0xff]
        %v1765 = vld [vmem:[%s1717 + $0x198] sm:$0xff]
        %v1766 = vld [vmem:[%s1717 + $0x1a0] sm:$0xff]
        %v1767 = vld [vmem:[%s1717 + $0x1a8] sm:$0xff]
        %v1768 = vld [vmem:[%s1717 + $0x1b0] sm:$0xff]
        %v1769 = vld [vmem:[%s1717 + $0x1b8] sm:$0xff]
        %v1770 = vld [vmem:[%s1717 + $0x1c0] sm:$0xff]
        %v1771 = vld [vmem:[%s1717 + $0x1c8] sm:$0xff]
        %v1772 = vld [vmem:[%s1717 + $0x1d0] sm:$0xff]
        %v1773 = vld [vmem:[%s1717 + $0x1d8] sm:$0xff]
        %v1774 = vmul.f32 %v1715, %v1718
        %v1775 = vmul.f32 %v1716, %v1719
        %v1776 = vmul.f32 %v1715, %v1720
        %v1777 = vmul.f32 %v1716, %v1721
        %v1778 = vmul.f32 %v1715, %v1722
        %v1779 = vmul.f32 %v1716, %v1723
        %v1780 = vmul.f32 %v1715, %v1724
        %v1781 = vmul.f32 %v1716, %v1725
        %v1782 = vmul.f32 %v1715, %v1726
        %v1783 = vmul.f32 %v1716, %v1727
        %v1784 = vmul.f32 %v1715, %v1728
        %v1785 = vmul.f32 %v1716, %v1729
        %v1786 = vmul.f32 %v1715, %v1730
        %v1787 = vmul.f32 %v1716, %v1731
        %v1788 = vmul.f32 %v1715, %v1732
        %v1789 = vmul.f32 %v1716, %v1733
        %v1790 = vmul.f32 %v1715, %v1734
        %v1791 = vmul.f32 %v1716, %v1735
        %v1792 = vmul.f32 %v1715, %v1736
        %v1793 = vmul.f32 %v1716, %v1737
        %v1794 = vmul.f32 %v1715, %v1738
        %v1795 = vmul.f32 %v1716, %v1739
        %v1796 = vmul.f32 %v1715, %v1740
        %v1797 = vmul.f32 %v1716, %v1741
        %v1798 = vmul.f32 %v1715, %v1742
        %v1799 = vmul.f32 %v1716, %v1743
        %v1800 = vmul.f32 %v1715, %v1744
        %v1801 = vmul.f32 %v1716, %v1745
        %v1802 = vmul.f32 %v1715, %v1746
        %v1803 = vmul.f32 %v1716, %v1747
        %v1804 = vmul.f32 %v1715, %v1748
        %v1805 = vmul.f32 %v1716, %v1749
        %v1806 = vmul.f32 %v1715, %v1750
        %v1807 = vmul.f32 %v1716, %v1751
        %v1808 = vmul.f32 %v1715, %v1752
        %v1809 = vmul.f32 %v1716, %v1753
        %v1810 = vmul.f32 %v1715, %v1754
        %v1811 = vmul.f32 %v1716, %v1755
        %v1812 = vmul.f32 %v1715, %v1756
        %v1813 = vmul.f32 %v1716, %v1757
        %v1814 = vmul.f32 %v1715, %v1758
        %v1815 = vmul.f32 %v1716, %v1759
        %v1816 = vmul.f32 %v1715, %v1760
        %v1817 = vmul.f32 %v1716, %v1761
        %v1818 = vmul.f32 %v1715, %v1762
        %v1819 = vmul.f32 %v1716, %v1763
        %v1820 = vmul.f32 %v1715, %v1764
        %v1821 = vmul.f32 %v1716, %v1765
        %v1822 = vmul.f32 %v1715, %v1766
        %v1823 = vmul.f32 %v1716, %v1767
        %v1824 = vmul.f32 %v1715, %v1768
        %v1825 = vmul.f32 %v1716, %v1769
        %v1826 = vmul.f32 %v1715, %v1770
        %v1827 = vmul.f32 %v1716, %v1771
        %v1828 = vmul.f32 %v1715, %v1772
        %v1829 = vmul.f32 %v1716, %v1773
        %v1830 = vadd.f32 %v1658, %v1774
        %v1831 = vadd.f32 %v1659, %v1775
        %v1832 = vadd.f32 %v1660, %v1776
        %v1833 = vadd.f32 %v1661, %v1777
        %v1834 = vadd.f32 %v1662, %v1778
        %v1835 = vadd.f32 %v1663, %v1779
        %v1836 = vadd.f32 %v1664, %v1780
        %v1837 = vadd.f32 %v1665, %v1781
        %v1838 = vadd.f32 %v1666, %v1782
        %v1839 = vadd.f32 %v1667, %v1783
        %v1840 = vadd.f32 %v1668, %v1784
        %v1841 = vadd.f32 %v1669, %v1785
        %v1842 = vadd.f32 %v1670, %v1786
        %v1843 = vadd.f32 %v1671, %v1787
        %v1844 = vadd.f32 %v1672, %v1788
        %v1845 = vadd.f32 %v1673, %v1789
        %v1846 = vadd.f32 %v1674, %v1790
        %v1847 = vadd.f32 %v1675, %v1791
        %v1848 = vadd.f32 %v1676, %v1792
        %v1849 = vadd.f32 %v1677, %v1793
        %v1850 = vadd.f32 %v1678, %v1794
        %v1851 = vadd.f32 %v1679, %v1795
        %v1852 = vadd.f32 %v1680, %v1796
        %v1853 = vadd.f32 %v1681, %v1797
        %v1854 = vadd.f32 %v1682, %v1798
        %v1855 = vadd.f32 %v1683, %v1799
        %v1856 = vadd.f32 %v1684, %v1800
        %v1857 = vadd.f32 %v1685, %v1801
        %v1858 = vadd.f32 %v1686, %v1802
        %v1859 = vadd.f32 %v1687, %v1803
        %v1860 = vadd.f32 %v1688, %v1804
        %v1861 = vadd.f32 %v1689, %v1805
        %v1862 = vadd.f32 %v1690, %v1806
        %v1863 = vadd.f32 %v1691, %v1807
        %v1864 = vadd.f32 %v1692, %v1808
        %v1865 = vadd.f32 %v1693, %v1809
        %v1866 = vadd.f32 %v1694, %v1810
        %v1867 = vadd.f32 %v1695, %v1811
        %v1868 = vadd.f32 %v1696, %v1812
        %v1869 = vadd.f32 %v1697, %v1813
        %v1870 = vadd.f32 %v1698, %v1814
        %v1871 = vadd.f32 %v1699, %v1815
        %v1872 = vadd.f32 %v1700, %v1816
        %v1873 = vadd.f32 %v1701, %v1817
        %v1874 = vadd.f32 %v1702, %v1818
        %v1875 = vadd.f32 %v1703, %v1819
        %v1876 = vadd.f32 %v1704, %v1820
        %v1877 = vadd.f32 %v1705, %v1821
        %v1878 = vadd.f32 %v1706, %v1822
        %v1879 = vadd.f32 %v1707, %v1823
        %v1880 = vadd.f32 %v1708, %v1824
        %v1881 = vadd.f32 %v1709, %v1825
        %v1882 = vadd.f32 %v1710, %v1826
        %v1883 = vadd.f32 %v1711, %v1827
        %v1884 = vadd.f32 %v1712, %v1828
        %v1885 = vadd.f32 %v1713, %v1829
        %s1886 = scalar_lea.vmem %s1, 128
        %v1887 = vld [vmem:[%s1886] sm:$0xff]
        %v1888 = vld [vmem:[%s1886 + $0x8] sm:$0xff]
        %s1889 = scalar_lea.vmem [#allocation3], 32
        %v1890 = vld [vmem:[%s1889] sm:$0xff]
        %v1891 = vld [vmem:[%s1889 + $0x8] sm:$0xff]
        %v1892 = vld [vmem:[%s1889 + $0x10] sm:$0xff]
        %v1893 = vld [vmem:[%s1889 + $0x18] sm:$0xff]
        %v1894 = vld [vmem:[%s1889 + $0x20] sm:$0xff]
        %v1895 = vld [vmem:[%s1889 + $0x28] sm:$0xff]
        %v1896 = vld [vmem:[%s1889 + $0x30] sm:$0xff]
        %v1897 = vld [vmem:[%s1889 + $0x38] sm:$0xff]
        %v1898 = vld [vmem:[%s1889 + $0x40] sm:$0xff]
        %v1899 = vld [vmem:[%s1889 + $0x48] sm:$0xff]
        %v1900 = vld [vmem:[%s1889 + $0x50] sm:$0xff]
        %v1901 = vld [vmem:[%s1889 + $0x58] sm:$0xff]
        %v1902 = vld [vmem:[%s1889 + $0x60] sm:$0xff]
        %v1903 = vld [vmem:[%s1889 + $0x68] sm:$0xff]
        %v1904 = vld [vmem:[%s1889 + $0x70] sm:$0xff]
        %v1905 = vld [vmem:[%s1889 + $0x78] sm:$0xff]
        %v1906 = vld [vmem:[%s1889 + $0x80] sm:$0xff]
        %v1907 = vld [vmem:[%s1889 + $0x88] sm:$0xff]
        %v1908 = vld [vmem:[%s1889 + $0x90] sm:$0xff]
        %v1909 = vld [vmem:[%s1889 + $0x98] sm:$0xff]
        %v1910 = vld [vmem:[%s1889 + $0xa0] sm:$0xff]
        %v1911 = vld [vmem:[%s1889 + $0xa8] sm:$0xff]
        %v1912 = vld [vmem:[%s1889 + $0xb0] sm:$0xff]
        %v1913 = vld [vmem:[%s1889 + $0xb8] sm:$0xff]
        %v1914 = vld [vmem:[%s1889 + $0xc0] sm:$0xff]
        %v1915 = vld [vmem:[%s1889 + $0xc8] sm:$0xff]
        %v1916 = vld [vmem:[%s1889 + $0xd0] sm:$0xff]
        %v1917 = vld [vmem:[%s1889 + $0xd8] sm:$0xff]
        %v1918 = vld [vmem:[%s1889 + $0x100] sm:$0xff]
        %v1919 = vld [vmem:[%s1889 + $0x108] sm:$0xff]
        %v1920 = vld [vmem:[%s1889 + $0x110] sm:$0xff]
        %v1921 = vld [vmem:[%s1889 + $0x118] sm:$0xff]
        %v1922 = vld [vmem:[%s1889 + $0x120] sm:$0xff]
        %v1923 = vld [vmem:[%s1889 + $0x128] sm:$0xff]
        %v1924 = vld [vmem:[%s1889 + $0x130] sm:$0xff]
        %v1925 = vld [vmem:[%s1889 + $0x138] sm:$0xff]
        %v1926 = vld [vmem:[%s1889 + $0x140] sm:$0xff]
        %v1927 = vld [vmem:[%s1889 + $0x148] sm:$0xff]
        %v1928 = vld [vmem:[%s1889 + $0x150] sm:$0xff]
        %v1929 = vld [vmem:[%s1889 + $0x158] sm:$0xff]
        %v1930 = vld [vmem:[%s1889 + $0x160] sm:$0xff]
        %v1931 = vld [vmem:[%s1889 + $0x168] sm:$0xff]
        %v1932 = vld [vmem:[%s1889 + $0x170] sm:$0xff]
        %v1933 = vld [vmem:[%s1889 + $0x178] sm:$0xff]
        %v1934 = vld [vmem:[%s1889 + $0x180] sm:$0xff]
        %v1935 = vld [vmem:[%s1889 + $0x188] sm:$0xff]
        %v1936 = vld [vmem:[%s1889 + $0x190] sm:$0xff]
        %v1937 = vld [vmem:[%s1889 + $0x198] sm:$0xff]
        %v1938 = vld [vmem:[%s1889 + $0x1a0] sm:$0xff]
        %v1939 = vld [vmem:[%s1889 + $0x1a8] sm:$0xff]
        %v1940 = vld [vmem:[%s1889 + $0x1b0] sm:$0xff]
        %v1941 = vld [vmem:[%s1889 + $0x1b8] sm:$0xff]
        %v1942 = vld [vmem:[%s1889 + $0x1c0] sm:$0xff]
        %v1943 = vld [vmem:[%s1889 + $0x1c8] sm:$0xff]
        %v1944 = vld [vmem:[%s1889 + $0x1d0] sm:$0xff]
        %v1945 = vld [vmem:[%s1889 + $0x1d8] sm:$0xff]
        %v1946 = vmul.f32 %v1887, %v1890
        %v1947 = vmul.f32 %v1888, %v1891
        %v1948 = vmul.f32 %v1887, %v1892
        %v1949 = vmul.f32 %v1888, %v1893
        %v1950 = vmul.f32 %v1887, %v1894
        %v1951 = vmul.f32 %v1888, %v1895
        %v1952 = vmul.f32 %v1887, %v1896
        %v1953 = vmul.f32 %v1888, %v1897
        %v1954 = vmul.f32 %v1887, %v1898
        %v1955 = vmul.f32 %v1888, %v1899
        %v1956 = vmul.f32 %v1887, %v1900
        %v1957 = vmul.f32 %v1888, %v1901
        %v1958 = vmul.f32 %v1887, %v1902
        %v1959 = vmul.f32 %v1888, %v1903
        %v1960 = vmul.f32 %v1887, %v1904
        %v1961 = vmul.f32 %v1888, %v1905
        %v1962 = vmul.f32 %v1887, %v1906
        %v1963 = vmul.f32 %v1888, %v1907
        %v1964 = vmul.f32 %v1887, %v1908
        %v1965 = vmul.f32 %v1888, %v1909
        %v1966 = vmul.f32 %v1887, %v1910
        %v1967 = vmul.f32 %v1888, %v1911
        %v1968 = vmul.f32 %v1887, %v1912
        %v1969 = vmul.f32 %v1888, %v1913
        %v1970 = vmul.f32 %v1887, %v1914
        %v1971 = vmul.f32 %v1888, %v1915
        %v1972 = vmul.f32 %v1887, %v1916
        %v1973 = vmul.f32 %v1888, %v1917
        %v1974 = vmul.f32 %v1887, %v1918
        %v1975 = vmul.f32 %v1888, %v1919
        %v1976 = vmul.f32 %v1887, %v1920
        %v1977 = vmul.f32 %v1888, %v1921
        %v1978 = vmul.f32 %v1887, %v1922
        %v1979 = vmul.f32 %v1888, %v1923
        %v1980 = vmul.f32 %v1887, %v1924
        %v1981 = vmul.f32 %v1888, %v1925
        %v1982 = vmul.f32 %v1887, %v1926
        %v1983 = vmul.f32 %v1888, %v1927
        %v1984 = vmul.f32 %v1887, %v1928
        %v1985 = vmul.f32 %v1888, %v1929
        %v1986 = vmul.f32 %v1887, %v1930
        %v1987 = vmul.f32 %v1888, %v1931
        %v1988 = vmul.f32 %v1887, %v1932
        %v1989 = vmul.f32 %v1888, %v1933
        %v1990 = vmul.f32 %v1887, %v1934
        %v1991 = vmul.f32 %v1888, %v1935
        %v1992 = vmul.f32 %v1887, %v1936
        %v1993 = vmul.f32 %v1888, %v1937
        %v1994 = vmul.f32 %v1887, %v1938
        %v1995 = vmul.f32 %v1888, %v1939
        %v1996 = vmul.f32 %v1887, %v1940
        %v1997 = vmul.f32 %v1888, %v1941
        %v1998 = vmul.f32 %v1887, %v1942
        %v1999 = vmul.f32 %v1888, %v1943
        %v2000 = vmul.f32 %v1887, %v1944
        %v2001 = vmul.f32 %v1888, %v1945
        %v2002 = vadd.f32 %v1830, %v1946
        %v2003 = vadd.f32 %v1831, %v1947
        %v2004 = vadd.f32 %v1832, %v1948
        %v2005 = vadd.f32 %v1833, %v1949
        %v2006 = vadd.f32 %v1834, %v1950
        %v2007 = vadd.f32 %v1835, %v1951
        %v2008 = vadd.f32 %v1836, %v1952
        %v2009 = vadd.f32 %v1837, %v1953
        %v2010 = vadd.f32 %v1838, %v1954
        %v2011 = vadd.f32 %v1839, %v1955
        %v2012 = vadd.f32 %v1840, %v1956
        %v2013 = vadd.f32 %v1841, %v1957
        %v2014 = vadd.f32 %v1842, %v1958
        %v2015 = vadd.f32 %v1843, %v1959
        %v2016 = vadd.f32 %v1844, %v1960
        %v2017 = vadd.f32 %v1845, %v1961
        %v2018 = vadd.f32 %v1846, %v1962
        %v2019 = vadd.f32 %v1847, %v1963
        %v2020 = vadd.f32 %v1848, %v1964
        %v2021 = vadd.f32 %v1849, %v1965
        %v2022 = vadd.f32 %v1850, %v1966
        %v2023 = vadd.f32 %v1851, %v1967
        %v2024 = vadd.f32 %v1852, %v1968
        %v2025 = vadd.f32 %v1853, %v1969
        %v2026 = vadd.f32 %v1854, %v1970
        %v2027 = vadd.f32 %v1855, %v1971
        %v2028 = vadd.f32 %v1856, %v1972
        %v2029 = vadd.f32 %v1857, %v1973
        %v2030 = vadd.f32 %v1858, %v1974
        %v2031 = vadd.f32 %v1859, %v1975
        %v2032 = vadd.f32 %v1860, %v1976
        %v2033 = vadd.f32 %v1861, %v1977
        %v2034 = vadd.f32 %v1862, %v1978
        %v2035 = vadd.f32 %v1863, %v1979
        %v2036 = vadd.f32 %v1864, %v1980
        %v2037 = vadd.f32 %v1865, %v1981
        %v2038 = vadd.f32 %v1866, %v1982
        %v2039 = vadd.f32 %v1867, %v1983
        %v2040 = vadd.f32 %v1868, %v1984
        %v2041 = vadd.f32 %v1869, %v1985
        %v2042 = vadd.f32 %v1870, %v1986
        %v2043 = vadd.f32 %v1871, %v1987
        %v2044 = vadd.f32 %v1872, %v1988
        %v2045 = vadd.f32 %v1873, %v1989
        %v2046 = vadd.f32 %v1874, %v1990
        %v2047 = vadd.f32 %v1875, %v1991
        %v2048 = vadd.f32 %v1876, %v1992
        %v2049 = vadd.f32 %v1877, %v1993
        %v2050 = vadd.f32 %v1878, %v1994
        %v2051 = vadd.f32 %v1879, %v1995
        %v2052 = vadd.f32 %v1880, %v1996
        %v2053 = vadd.f32 %v1881, %v1997
        %v2054 = vadd.f32 %v1882, %v1998
        %v2055 = vadd.f32 %v1883, %v1999
        %v2056 = vadd.f32 %v1884, %v2000
        %v2057 = vadd.f32 %v1885, %v2001
        %v2058 = vadd.f32 %v1542, %v2002
        %v2059 = vadd.f32 %v1543, %v2003
        %v2060 = vadd.f32 %v1544, %v2004
        %v2061 = vadd.f32 %v1545, %v2005
        %v2062 = vadd.f32 %v1546, %v2006
        %v2063 = vadd.f32 %v1547, %v2007
        %v2064 = vadd.f32 %v1548, %v2008
        %v2065 = vadd.f32 %v1549, %v2009
        %v2066 = vadd.f32 %v1550, %v2010
        %v2067 = vadd.f32 %v1551, %v2011
        %v2068 = vadd.f32 %v1552, %v2012
        %v2069 = vadd.f32 %v1553, %v2013
        %v2070 = vadd.f32 %v1554, %v2014
        %v2071 = vadd.f32 %v1555, %v2015
        %v2072 = vadd.f32 %v1556, %v2016
        %v2073 = vadd.f32 %v1557, %v2017
        %v2074 = vadd.f32 %v1558, %v2018
        %v2075 = vadd.f32 %v1559, %v2019
        %v2076 = vadd.f32 %v1560, %v2020
        %v2077 = vadd.f32 %v1561, %v2021
        %v2078 = vadd.f32 %v1562, %v2022
        %v2079 = vadd.f32 %v1563, %v2023
        %v2080 = vadd.f32 %v1564, %v2024
        %v2081 = vadd.f32 %v1565, %v2025
        %v2082 = vadd.f32 %v1566, %v2026
        %v2083 = vadd.f32 %v1567, %v2027
        %v2084 = vadd.f32 %v1568, %v2028
        %v2085 = vadd.f32 %v1569, %v2029
        %v2086 = vadd.f32 %v1570, %v2030
        %v2087 = vadd.f32 %v1571, %v2031
        %v2088 = vadd.f32 %v1572, %v2032
        %v2089 = vadd.f32 %v1573, %v2033
        %v2090 = vadd.f32 %v1574, %v2034
        %v2091 = vadd.f32 %v1575, %v2035
        %v2092 = vadd.f32 %v1576, %v2036
        %v2093 = vadd.f32 %v1577, %v2037
        %v2094 = vadd.f32 %v1578, %v2038
        %v2095 = vadd.f32 %v1579, %v2039
        %v2096 = vadd.f32 %v1580, %v2040
        %v2097 = vadd.f32 %v1581, %v2041
        %v2098 = vadd.f32 %v1582, %v2042
        %v2099 = vadd.f32 %v1583, %v2043
        %v2100 = vadd.f32 %v1584, %v2044
        %v2101 = vadd.f32 %v1585, %v2045
        %v2102 = vadd.f32 %v1586, %v2046
        %v2103 = vadd.f32 %v1587, %v2047
        %v2104 = vadd.f32 %v1588, %v2048
        %v2105 = vadd.f32 %v1589, %v2049
        %v2106 = vadd.f32 %v1590, %v2050
        %v2107 = vadd.f32 %v1591, %v2051
        %v2108 = vadd.f32 %v1592, %v2052
        %v2109 = vadd.f32 %v1593, %v2053
        %v2110 = vadd.f32 %v1594, %v2054
        %v2111 = vadd.f32 %v1595, %v2055
        %v2112 = vadd.f32 %v1596, %v2056
        %v2113 = vadd.f32 %v1597, %v2057
        %s2114 = scalar_lea.vmem %s189, 16 [#allocation7]
        %2115 = vst [vmem:[%s2114] sm:$0xff] %v2058
        %2116 = vst [vmem:[%s2114 + $0x8] sm:$0xff] %v2059
        %2117 = vst [vmem:[%s2114 + $0x10] sm:$0xff] %v2060
        %2118 = vst [vmem:[%s2114 + $0x18] sm:$0xff] %v2061
        %2119 = vst [vmem:[%s2114 + $0x20] sm:$0xff] %v2062
        %2120 = vst [vmem:[%s2114 + $0x28] sm:$0xff] %v2063
        %2121 = vst [vmem:[%s2114 + $0x30] sm:$0xff] %v2064
        %2122 = vst [vmem:[%s2114 + $0x38] sm:$0xff] %v2065
        %2123 = vst [vmem:[%s2114 + $0x40] sm:$0xff] %v2066
        %2124 = vst [vmem:[%s2114 + $0x48] sm:$0xff] %v2067
        %2125 = vst [vmem:[%s2114 + $0x50] sm:$0xff] %v2068
        %2126 = vst [vmem:[%s2114 + $0x58] sm:$0xff] %v2069
        %2127 = vst [vmem:[%s2114 + $0x60] sm:$0xff] %v2070
        %2128 = vst [vmem:[%s2114 + $0x68] sm:$0xff] %v2071
        %2129 = vst [vmem:[%s2114 + $0x70] sm:$0xff] %v2072
        %2130 = vst [vmem:[%s2114 + $0x78] sm:$0xff] %v2073
        %2131 = vst [vmem:[%s2114 + $0x80] sm:$0xff] %v2074
        %2132 = vst [vmem:[%s2114 + $0x88] sm:$0xff] %v2075
        %2133 = vst [vmem:[%s2114 + $0x90] sm:$0xff] %v2076
        %2134 = vst [vmem:[%s2114 + $0x98] sm:$0xff] %v2077
        %2135 = vst [vmem:[%s2114 + $0xa0] sm:$0xff] %v2078
        %2136 = vst [vmem:[%s2114 + $0xa8] sm:$0xff] %v2079
        %2137 = vst [vmem:[%s2114 + $0xb0] sm:$0xff] %v2080
        %2138 = vst [vmem:[%s2114 + $0xb8] sm:$0xff] %v2081
        %2139 = vst [vmem:[%s2114 + $0xc0] sm:$0xff] %v2082
        %2140 = vst [vmem:[%s2114 + $0xc8] sm:$0xff] %v2083
        %2141 = vst [vmem:[%s2114 + $0xd0] sm:$0xff] %v2084
        %2142 = vst [vmem:[%s2114 + $0xd8] sm:$0xff] %v2085
        %2143 = vst [vmem:[%s2114 + $0x100] sm:$0xff] %v2086
        %2144 = vst [vmem:[%s2114 + $0x108] sm:$0xff] %v2087
        %2145 = vst [vmem:[%s2114 + $0x110] sm:$0xff] %v2088
        %2146 = vst [vmem:[%s2114 + $0x118] sm:$0xff] %v2089
        %2147 = vst [vmem:[%s2114 + $0x120] sm:$0xff] %v2090
        %2148 = vst [vmem:[%s2114 + $0x128] sm:$0xff] %v2091
        %2149 = vst [vmem:[%s2114 + $0x130] sm:$0xff] %v2092
        %2150 = vst [vmem:[%s2114 + $0x138] sm:$0xff] %v2093
        %2151 = vst [vmem:[%s2114 + $0x140] sm:$0xff] %v2094
        %2152 = vst [vmem:[%s2114 + $0x148] sm:$0xff] %v2095
        %2153 = vst [vmem:[%s2114 + $0x150] sm:$0xff] %v2096
        %2154 = vst [vmem:[%s2114 + $0x158] sm:$0xff] %v2097
        %2155 = vst [vmem:[%s2114 + $0x160] sm:$0xff] %v2098
        %2156 = vst [vmem:[%s2114 + $0x168] sm:$0xff] %v2099
        %2157 = vst [vmem:[%s2114 + $0x170] sm:$0xff] %v2100
        %2158 = vst [vmem:[%s2114 + $0x178] sm:$0xff] %v2101
        %2159 = vst [vmem:[%s2114 + $0x180] sm:$0xff] %v2102
        %2160 = vst [vmem:[%s2114 + $0x188] sm:$0xff] %v2103
        %2161 = vst [vmem:[%s2114 + $0x190] sm:$0xff] %v2104
        %2162 = vst [vmem:[%s2114 + $0x198] sm:$0xff] %v2105
        %2163 = vst [vmem:[%s2114 + $0x1a0] sm:$0xff] %v2106
        %2164 = vst [vmem:[%s2114 + $0x1a8] sm:$0xff] %v2107
        %2165 = vst [vmem:[%s2114 + $0x1b0] sm:$0xff] %v2108
        %2166 = vst [vmem:[%s2114 + $0x1b8] sm:$0xff] %v2109
        %2167 = vst [vmem:[%s2114 + $0x1c0] sm:$0xff] %v2110
        %2168 = vst [vmem:[%s2114 + $0x1c8] sm:$0xff] %v2111
        %2169 = vst [vmem:[%s2114 + $0x1d0] sm:$0xff] %v2112
        %2170 = vst [vmem:[%s2114 + $0x1d8] sm:$0xff] %v2113
        %v2171 = vld [vmem:[%s167] sm:$0xff]
        %v2172 = vld [vmem:[%s167 + $0x8] sm:$0xff]
        %v2173 = vld [vmem:[%s167 + $0x100] sm:$0xff]
        %v2174 = vld [vmem:[%s167 + $0x108] sm:$0xff]
        %v2175 = vadd.f32 %v2171, %v512
        %v2176 = vadd.f32 %v2172, %v513
        %v2177 = vadd.f32 %v2173, %v512
        %v2178 = vadd.f32 %v2174, %v513
        %v2179 = vld [vmem:[%s1139] sm:$0xff]
        %v2180 = vld [vmem:[%s1139 + $0x8] sm:$0xff]
        %v2181 = vld [vmem:[#allocation2] sm:$0xff]
        %v2182 = vld [vmem:[#allocation2 + $0x8] sm:$0xff]
        %v2183 = vld [vmem:[#allocation2 + $0x100] sm:$0xff]
        %v2184 = vld [vmem:[#allocation2 + $0x108] sm:$0xff]
        %v2185 = vmul.f32 %v2179, %v2181
        %v2186 = vmul.f32 %v2180, %v2182
        %v2187 = vmul.f32 %v2179, %v2183
        %v2188 = vmul.f32 %v2180, %v2184
        %v2189 = vld [vmem:[%s1255] sm:$0xff]
        %v2190 = vld [vmem:[%s1255 + $0x8] sm:$0xff]
        %v2191 = vmul.f32 %v2189, %v2171
        %v2192 = vmul.f32 %v2190, %v2172
        %v2193 = vmul.f32 %v2189, %v2173
        %v2194 = vmul.f32 %v2190, %v2174
        %v2195 = vadd.f32 %v2185, %v2191
        %v2196 = vadd.f32 %v2186, %v2192
        %v2197 = vadd.f32 %v2187, %v2193
        %v2198 = vadd.f32 %v2188, %v2194
        %v2199 = vld [vmem:[%s1370] sm:$0xff]
        %v2200 = vld [vmem:[%s1370 + $0x8] sm:$0xff]
        %v2201 = vld [vmem:[#allocation3] sm:$0xff]
        %v2202 = vld [vmem:[#allocation3 + $0x8] sm:$0xff]
        %v2203 = vld [vmem:[#allocation3 + $0x100] sm:$0xff]
        %v2204 = vld [vmem:[#allocation3 + $0x108] sm:$0xff]
        %v2205 = vmul.f32 %v2199, %v2201
        %v2206 = vmul.f32 %v2200, %v2202
        %v2207 = vmul.f32 %v2199, %v2203
        %v2208 = vmul.f32 %v2200, %v2204
        %v2209 = vadd.f32 %v2195, %v2205
        %v2210 = vadd.f32 %v2196, %v2206
        %v2211 = vadd.f32 %v2197, %v2207
        %v2212 = vadd.f32 %v2198, %v2208
        %v2213 = vadd.f32 %v2175, %v2209
        %v2214 = vadd.f32 %v2176, %v2210
        %v2215 = vadd.f32 %v2177, %v2211
        %v2216 = vadd.f32 %v2178, %v2212
        %v2217 = vld [vmem:[%s1598] sm:$0xff]
        %v2218 = vld [vmem:[%s1598 + $0x8] sm:$0xff]
        %v2219 = vld [vmem:[%s1142] sm:$0xff]
        %v2220 = vld [vmem:[%s1142 + $0x8] sm:$0xff]
        %v2221 = vld [vmem:[%s1142 + $0x100] sm:$0xff]
        %v2222 = vld [vmem:[%s1142 + $0x108] sm:$0xff]
        %v2223 = vmul.f32 %v2217, %v2219
        %v2224 = vmul.f32 %v2218, %v2220
        %v2225 = vmul.f32 %v2217, %v2221
        %v2226 = vmul.f32 %v2218, %v2222
        %v2227 = vld [vmem:[%s1714] sm:$0xff]
        %v2228 = vld [vmem:[%s1714 + $0x8] sm:$0xff]
        %v2229 = vld [vmem:[%s514] sm:$0xff]
        %v2230 = vld [vmem:[%s514 + $0x8] sm:$0xff]
        %v2231 = vld [vmem:[%s514 + $0x100] sm:$0xff]
        %v2232 = vld [vmem:[%s514 + $0x108] sm:$0xff]
        %v2233 = vmul.f32 %v2227, %v2229
        %v2234 = vmul.f32 %v2228, %v2230
        %v2235 = vmul.f32 %v2227, %v2231
        %v2236 = vmul.f32 %v2228, %v2232
        %v2237 = vadd.f32 %v2223, %v2233
        %v2238 = vadd.f32 %v2224, %v2234
        %v2239 = vadd.f32 %v2225, %v2235
        %v2240 = vadd.f32 %v2226, %v2236
        %v2241 = vld [vmem:[%s1886] sm:$0xff]
        %v2242 = vld [vmem:[%s1886 + $0x8] sm:$0xff]
        %v2243 = vld [vmem:[%s1373] sm:$0xff]
        %v2244 = vld [vmem:[%s1373 + $0x8] sm:$0xff]
        %v2245 = vld [vmem:[%s1373 + $0x100] sm:$0xff]
        %v2246 = vld [vmem:[%s1373 + $0x108] sm:$0xff]
        %v2247 = vmul.f32 %v2241, %v2243
        %v2248 = vmul.f32 %v2242, %v2244
        %v2249 = vmul.f32 %v2241, %v2245
        %v2250 = vmul.f32 %v2242, %v2246
        %v2251 = vadd.f32 %v2237, %v2247
        %v2252 = vadd.f32 %v2238, %v2248
        %v2253 = vadd.f32 %v2239, %v2249
        %v2254 = vadd.f32 %v2240, %v2250
        %v2255 = vadd.f32 %v2213, %v2251
        %v2256 = vadd.f32 %v2214, %v2252
        %v2257 = vadd.f32 %v2215, %v2253
        %v2258 = vadd.f32 %v2216, %v2254
        %2259 = vst [vmem:[%s189] sm:$0xff] %v2255
        %2260 = vst [vmem:[%s189 + $0x8] sm:$0xff] %v2256
        %2261 = vst [vmem:[%s189 + $0x100] sm:$0xff] %v2257
        %2262 = vst [vmem:[%s189 + $0x108] sm:$0xff] %v2258
        %s2263 = scalar_lea.vmem %s167, 240 [#allocation4]
        %v2264 = vld [vmem:[%s2263] sm:$0xff]
        %v2265 = vld [vmem:[%s2263 + $0x8] sm:$0xff]
        %v2266 = vld [vmem:[%s2263 + $0x100] sm:$0xff]
        %v2267 = vld [vmem:[%s2263 + $0x108] sm:$0xff]
        %v2268 = vadd.f32 %v2264, %v512
        %v2269 = vadd.f32 %v2265, %v513
        %v2270 = vadd.f32 %v2266, %v512
        %v2271 = vadd.f32 %v2267, %v513
        %v2272 = vld [vmem:[%s1] sm:$0xff]
        %v2273 = vld [vmem:[%s1 + $0x8] sm:$0xff]
        %s2274 = scalar_lea.vmem [#allocation2], 224
        %v2275 = vld [vmem:[%s2274] sm:$0xff]
        %v2276 = vld [vmem:[%s2274 + $0x8] sm:$0xff]
        %v2277 = vld [vmem:[%s2274 + $0x100] sm:$0xff]
        %v2278 = vld [vmem:[%s2274 + $0x108] sm:$0xff]
        %v2279 = vmul.f32 %v2272, %v2275
        %v2280 = vmul.f32 %v2273, %v2276
        %v2281 = vmul.f32 %v2272, %v2277
        %v2282 = vmul.f32 %v2273, %v2278
        %v2283 = vld [vmem:[%s741] sm:$0xff]
        %v2284 = vld [vmem:[%s741 + $0x8] sm:$0xff]
        %s2285 = scalar_lea.vmem %s167, 224 [#allocation4]
        %v2286 = vld [vmem:[%s2285] sm:$0xff]
        %v2287 = vld [vmem:[%s2285 + $0x8] sm:$0xff]
        %v2288 = vld [vmem:[%s2285 + $0x100] sm:$0xff]
        %v2289 = vld [vmem:[%s2285 + $0x108] sm:$0xff]
        %v2290 = vmul.f32 %v2283, %v2286
        %v2291 = vmul.f32 %v2284, %v2287
        %v2292 = vmul.f32 %v2283, %v2288
        %v2293 = vmul.f32 %v2284, %v2289
        %v2294 = vadd.f32 %v2279, %v2290
        %v2295 = vadd.f32 %v2280, %v2291
        %v2296 = vadd.f32 %v2281, %v2292
        %v2297 = vadd.f32 %v2282, %v2293
        %v2298 = vld [vmem:[%s912] sm:$0xff]
        %v2299 = vld [vmem:[%s912 + $0x8] sm:$0xff]
        %s2300 = scalar_lea.vmem [#allocation3], 224
        %v2301 = vld [vmem:[%s2300] sm:$0xff]
        %v2302 = vld [vmem:[%s2300 + $0x8] sm:$0xff]
        %v2303 = vld [vmem:[%s2300 + $0x100] sm:$0xff]
        %v2304 = vld [vmem:[%s2300 + $0x108] sm:$0xff]
        %v2305 = vmul.f32 %v2298, %v2301
        %v2306 = vmul.f32 %v2299, %v2302
        %v2307 = vmul.f32 %v2298, %v2303
        %v2308 = vmul.f32 %v2299, %v2304
        %v2309 = vadd.f32 %v2294, %v2305
        %v2310 = vadd.f32 %v2295, %v2306
        %v2311 = vadd.f32 %v2296, %v2307
        %v2312 = vadd.f32 %v2297, %v2308
        %v2313 = vadd.f32 %v2268, %v2309
        %v2314 = vadd.f32 %v2269, %v2310
        %v2315 = vadd.f32 %v2270, %v2311
        %v2316 = vadd.f32 %v2271, %v2312
        %v2317 = vld [vmem:[%s1139] sm:$0xff]
        %v2318 = vld [vmem:[%s1139 + $0x8] sm:$0xff]
        %s2319 = scalar_lea.vmem [#allocation2], 240
        %v2320 = vld [vmem:[%s2319] sm:$0xff]
        %v2321 = vld [vmem:[%s2319 + $0x8] sm:$0xff]
        %v2322 = vld [vmem:[%s2319 + $0x100] sm:$0xff]
        %v2323 = vld [vmem:[%s2319 + $0x108] sm:$0xff]
        %v2324 = vmul.f32 %v2317, %v2320
        %v2325 = vmul.f32 %v2318, %v2321
        %v2326 = vmul.f32 %v2317, %v2322
        %v2327 = vmul.f32 %v2318, %v2323
        %v2328 = vld [vmem:[%s1255] sm:$0xff]
        %v2329 = vld [vmem:[%s1255 + $0x8] sm:$0xff]
        %v2330 = vmul.f32 %v2328, %v2264
        %v2331 = vmul.f32 %v2329, %v2265
        %v2332 = vmul.f32 %v2328, %v2266
        %v2333 = vmul.f32 %v2329, %v2267
        %v2334 = vadd.f32 %v2324, %v2330
        %v2335 = vadd.f32 %v2325, %v2331
        %v2336 = vadd.f32 %v2326, %v2332
        %v2337 = vadd.f32 %v2327, %v2333
        %v2338 = vld [vmem:[%s1370] sm:$0xff]
        %v2339 = vld [vmem:[%s1370 + $0x8] sm:$0xff]
        %s2340 = scalar_lea.vmem [#allocation3], 240
        %v2341 = vld [vmem:[%s2340] sm:$0xff]
        %v2342 = vld [vmem:[%s2340 + $0x8] sm:$0xff]
        %v2343 = vld [vmem:[%s2340 + $0x100] sm:$0xff]
        %v2344 = vld [vmem:[%s2340 + $0x108] sm:$0xff]
        %v2345 = vmul.f32 %v2338, %v2341
        %v2346 = vmul.f32 %v2339, %v2342
        %v2347 = vmul.f32 %v2338, %v2343
        %v2348 = vmul.f32 %v2339, %v2344
        %v2349 = vadd.f32 %v2334, %v2345
        %v2350 = vadd.f32 %v2335, %v2346
        %v2351 = vadd.f32 %v2336, %v2347
        %v2352 = vadd.f32 %v2337, %v2348
        %v2353 = vadd.f32 %v2313, %v2349
        %v2354 = vadd.f32 %v2314, %v2350
        %v2355 = vadd.f32 %v2315, %v2351
        %v2356 = vadd.f32 %v2316, %v2352
        %s2357 = scalar_lea.vmem %s189, 240 [#allocation7]
        %2358 = vst [vmem:[%s2357] sm:$0xff] %v2353
        %2359 = vst [vmem:[%s2357 + $0x8] sm:$0xff] %v2354
        %2360 = vst [vmem:[%s2357 + $0x100] sm:$0xff] %v2355
        %2361 = vst [vmem:[%s2357 + $0x108] sm:$0xff] %v2356
        %s2362 = sand.u32 %s96, 1
        %s2363 = scalar_lea.sflag [#allocation6], %s2362
        %s2364 = sand.u32 %s96, 1
        %s2365 = smul.addr %s2364, 512
        %s2366 = scalar_lea.vmem [#allocation7], %s2365
        // Predicated region
        $region37: #{_lambda_.1} parent=31 // pred_check
          %p2367 = pneg %p106
        $region38: #{_lambda_.1} parent=31 // pred_check_branch
          %2369 = sbr.rel (%p2367) target = $region40
        $region39: #{_lambda_.1} parent=31 // pred_region
          %s2370 = smul.u32 2, %s20
          %s2372 = ssub.s32 8192, 8192
          %2373 = vsyncadd %s2363, %s2372
          %s2374 = smul.addr %s2370, 32
          %s2375 = smul.addr %s2374, 128
          %s2376 = scalar_lea.hbm %s3, %s2375
          %s2377 = sshll.u32 %s2366, 4
          %s2378 = int_to_ptr.vmem [resolvable:$true] %s2377
          %2383 = dma.vmem_to_hbm [thread:$0]  %s2378, 8192, %s2376, %s2363, 128, 128, 8
        $region40: #{_lambda_.1} parent=31 // pred_fallthru
          _
      $region32: #{_lambda_.1} parent=5 // pred_fallthru
        _
      %p2384 = scmp.le.s32.totalorder 2, %s15
      // Predicated region
      $region41: #{_lambda_.1} parent=5 // pred_check
        %p2385 = pneg %p2384
      $region42: #{_lambda_.1} parent=5 // pred_check_branch
        %2387 = sbr.rel (%p2385) target = $region44
      $region43: #{_lambda_.1} parent=5 // pred_region
        %s2388 = ssub.s32 %s15, 2
        // Predicated region
        $region45: #{_lambda_.1} parent=43 // pred_check
          %p2389 = pneg %p112
        $region46: #{_lambda_.1} parent=43 // pred_check_branch
          %2391 = sbr.rel (%p2389) target = $region48
        $region47: #{_lambda_.1} parent=43 // pred_region
          %s2392 = sand.u32 %s97, 1
          %s2393 = scalar_lea.sflag [#allocation6], %s2392
          %s2394 = sand.u32 %s97, 1
          %s2395 = smul.addr %s2394, 512
          %s2396 = scalar_lea.vmem [#allocation7], %s2395
          %2397 = dma.done %s2393, 8192
        $region48: #{_lambda_.1} parent=43 // pred_fallthru
          _
      $region44: #{_lambda_.1} parent=5 // pred_fallthru
        _
    $region6: #{_lambda_.1} parent=1 // loop_footer
      %s19 = sadd.s32 1, %s15
    $region7: #{_lambda_.1} parent=1 // loop_footer_branch
      %14 = sbr.rel target = $region3
    $region8: #{_lambda_.1} parent=1 // loop_exit
      _
    %2398 = vsyncpa [#allocation5], 1
    %s2399 = scalar_lea.sflag [#allocation5], 1
    %2400 = vsyncpa %s2399, 1
    %2401 = vsyncpa [#allocation6], 1
    %s2402 = scalar_lea.sflag [#allocation6], 1
    %2403 = vsyncpa %s2402, 1

</llo_original>
